<compile_context>
chip_gen: v5e
topology: v5e:2x2
jax: 0.10.0
libtpu: 0.0.40
codegen_flags: <defaults>
</compile_context>

<pallas_src>
import functools

import jax
import jax.numpy as jnp
from jax.experimental import pallas as pl
from jax.experimental.pallas import tpu as pltpu


def _round_up(v, m):
    return ((v + m - 1) // m) * m


# ----------------------------------------------------------------------------
# Pallas kernel: fused (patches @ weight) + bias, optional ReLU.
# Inputs are bf16 (native MXU path), accumulation and epilogue are f32, the
# store casts to the requested output dtype (bf16 activations / f32 logits).
# ----------------------------------------------------------------------------
def _mm_bias_act_kernel(x_ref, w_ref, b_ref, o_ref, *, relu):
    acc = jnp.dot(x_ref[...], w_ref[...], preferred_element_type=jnp.float32)
    y = acc + b_ref[...]
    if relu:
        y = jnp.maximum(y, 0.0)
    o_ref[...] = y.astype(o_ref.dtype)


_MIN_M_PALLAS = 256  # below this the pad-to-128 waste + launch cost dominate


def matmul_bias_act(x, w, bias, *, relu=True, out_dtype=jnp.bfloat16):
    """x: (M, K), w: (K, N) with BN scale already folded in, bias: (N,)."""
    M, K = x.shape
    _, N = w.shape

    if M < _MIN_M_PALLAS:
        # Tiny-M layers (global-pool branch, deep pyramid levels at small
        # inputs): a Pallas launch would be pure overhead; leave them to XLA.
        y = jnp.dot(x.astype(jnp.float32), w.astype(jnp.float32),
                    preferred_element_type=jnp.float32) + bias
        if relu:
            y = jnp.maximum(y, 0.0)
        return y.astype(out_dtype)

    # Tile the M axis; keep >= 2 grid steps so v7x's two TensorCores both work.
    if M >= 1024:
        BM = 512
    else:
        BM = _round_up((M + 1) // 2, 128)
    Mp = _round_up(M, BM)
    Kp = _round_up(K, 128)
    Np = _round_up(N, 128)

    xp = x.astype(jnp.bfloat16)
    if (Mp, Kp) != (M, K):
        xp = jnp.pad(xp, ((0, Mp - M), (0, Kp - K)))
    wp = w.astype(jnp.bfloat16)
    if (Kp, Np) != (K, N):
        wp = jnp.pad(wp, ((0, Kp - K), (0, Np - N)))
    bp = jnp.pad(bias.astype(jnp.float32), (0, Np - N)).reshape(1, Np)

    out = pl.pallas_call(
        functools.partial(_mm_bias_act_kernel, relu=relu),
        out_shape=jax.ShapeDtypeStruct((Mp, Np), out_dtype),
        grid=(Mp // BM,),
        in_specs=[
            pl.BlockSpec((BM, Kp), lambda i: (i, 0)),
            pl.BlockSpec((Kp, Np), lambda i: (0, 0)),
            pl.BlockSpec((1, Np), lambda i: (0, 0)),
        ],
        out_specs=pl.BlockSpec((BM, Np), lambda i: (i, 0)),
        compiler_params=pltpu.CompilerParams(
            dimension_semantics=("parallel",),
            vmem_limit_bytes=48 * 1024 * 1024,  # safe for v7x's 64 MiB VMEM
        ),
    )(xp, wp, bp)
    if (Mp, Np) != (M, N):
        out = out[:M, :N]
    return out


# ----------------------------------------------------------------------------
# Conv2d + BN + ReLU via im2col (glue, bf16) + Pallas matmul (hot path)
# ----------------------------------------------------------------------------
def conv2d_bn_act(x, w, scale, bias, *, stride=1, dilation=1, relu=True,
                  out_dtype=jnp.bfloat16):
    """x: (N,H,W,Cin), w: (kh,kw,Cin,Cout).  'same'-style padding like the
    PyTorch module (pad = dilation * (k // 2)).  BN scale is folded into w."""
    n, h, wd, cin = x.shape
    kh, kw, cin_w, cout = w.shape
    assert cin == cin_w
    w_f = w * scale.reshape(1, 1, 1, cout)   # fold BN scale into the weights
    if kh == 1 and kw == 1:
        patches = x
        ho, wo = h, wd
    else:
        # TODO(synk): im2col still materializes kh*kw shifted copies (now in
        # bf16); a tap-accumulating kernel reading shifted windows of the
        # padded input directly would cut this HBM traffic further.
        pad = dilation * (kh // 2)
        xp = jnp.pad(x, ((0, 0), (pad, pad), (pad, pad), (0, 0)))
        ho = (h + 2 * pad - dilation * (kh - 1) - 1) // stride + 1
        wo = (wd + 2 * pad - dilation * (kw - 1) - 1) // stride + 1
        cols = []
        for dy in range(kh):
            for dx in range(kw):
                y0 = dy * dilation
                x0 = dx * dilation
                cols.append(
                    xp[:, y0:y0 + (ho - 1) * stride + 1:stride,
                       x0:x0 + (wo - 1) * stride + 1:stride, :])
        patches = jnp.concatenate(cols, axis=-1)
    pm = patches.reshape(n * ho * wo, kh * kw * cin)
    wm = w_f.reshape(kh * kw * cin, cout)
    out = matmul_bias_act(pm, wm, bias, relu=relu, out_dtype=out_dtype)
    return out.reshape(n, ho, wo, cout)


# ----------------------------------------------------------------------------
# Plain-JAX glue: pooling, bilinear upsampling, cross-entropy
# ----------------------------------------------------------------------------
def avg_pool2(x):
    n, h, w, c = x.shape
    y = x.astype(jnp.float32).reshape(n, h // 2, 2, w // 2, 2, c).mean(axis=(2, 4))
    return y.astype(x.dtype)


def upsample_bilinear_align_corners(x, out_h, out_w):
    n, h, w, c = x.shape
    xf = x.astype(jnp.float32)

    def axis_idx(in_s, out_s):
        if in_s == 1:
            z = jnp.zeros((out_s,), jnp.int32)
            return z, z, jnp.zeros((out_s,), jnp.float32)
        src = jnp.arange(out_s, dtype=jnp.float32) * (in_s - 1) / (out_s - 1)
        i0 = jnp.floor(src).astype(jnp.int32)
        i1 = jnp.minimum(i0 + 1, in_s - 1)
        return i0, i1, src - i0.astype(jnp.float32)

    y0, y1, fy = axis_idx(h, out_h)
    x0, x1, fx = axis_idx(w, out_w)
    top = (xf[:, y0, :, :] * (1.0 - fy)[None, :, None, None]
           + xf[:, y1, :, :] * fy[None, :, None, None])
    out = (top[:, :, x0, :] * (1.0 - fx)[None, None, :, None]
           + top[:, :, x1, :] * fx[None, None, :, None])
    return out  # f32


def ce_loss(logits_nhwc, target, ignore_index=255):
    # TODO(synk): Loss() definition is not in the provided source; using
    # standard per-pixel cross-entropy with ignore_index=255.
    logp = jax.nn.log_softmax(logits_nhwc, axis=-1)
    valid = target != ignore_index
    t = jnp.where(valid, target, 0)
    nll = -jnp.take_along_axis(logp, t[..., None], axis=-1)[..., 0]
    nll = jnp.where(valid, nll, 0.0)
    return nll.sum() / jnp.maximum(valid.sum(), 1).astype(jnp.float32)


# ----------------------------------------------------------------------------
# Parameters (deterministic, kaiming-like init; BN folded to scale/bias)
# ----------------------------------------------------------------------------
CH = [448, 448, 336, 240, 160, 96]


def init_params(key):
    keys = iter(jax.random.split(key, 64))

    def conv(kh, kw, cin, cout):
        std = (2.0 / (kh * kw * cout)) ** 0.5  # kaiming_normal_, fan_out, relu
        return jax.random.normal(next(keys), (kh, kw, cin, cout), jnp.float32) * std

    def bn(c):
        eps = 1e-5
        gamma, beta = jnp.ones((c,)), jnp.zeros((c,))
        mean, var = jnp.zeros((c,)), jnp.ones((c,))
        scale = gamma / jnp.sqrt(var + eps)
        return scale, beta - mean * scale

    p = {}

    def conv_bn(name, kh, kw, cin, cout):
        w = conv(kh, kw, cin, cout)
        s, b = bn(cout)
        p[name] = dict(w=w, s=s, b=b)

    # backbone
    conv_bn('bb1', 3, 3, 3, 16)
    conv_bn('bb2', 3, 3, 16, 24)
    conv_bn('bb3', 3, 3, 24, 32)
    conv_bn('bb4', 3, 3, 32, 48)
    # TODO(synk): ContextBlock2/4 definitions not provided; reconstructed as a
    # dilated 3x3 conv+BN+ReLU branch of `red` channels concatenated with the
    # input (matches the original channel arithmetic: out = in + red).
    conv_bn('bb_cb', 3, 3, 48, 48)      # ContextBlock2(48, red=48)
    conv_bn('b8_cb', 3, 3, 96, 64)      # ContextBlock2(96, red=64)
    conv_bn('b16_cb', 3, 3, 160, 80)    # ContextBlock4(160, red=80)
    conv_bn('b32_cb', 3, 3, 240, 96)    # ContextBlock4(240, red=96)
    conv_bn('b64_cb', 3, 3, 336, 112)   # ContextBlock4(336, red=112)
    conv_bn('gap', 1, 1, 448, 448)
    for i, c in enumerate(CH):
        conv_bn(f'ctxTf{i}', 1, 1, c, 48)
    # TODO(synk): catCtxV3 definition not provided; reconstructed as
    # concat(ff4, upsampled ctx vectors) -> 1x1 conv + BN + ReLU -> 48 ch.
    conv_bn('sam', 1, 1, 48 * 6, 48)
    conv_bn('cls_cb', 3, 3, 48, 48)     # ContextBlock2(48, red=48) in cls head
    p['cls_conv'] = dict(w=conv(1, 1, 96, 19), b=jnp.zeros((19,)))
    return p


# ----------------------------------------------------------------------------
# Forward
# ----------------------------------------------------------------------------
def forward(params, x, target):
    n, h, w, _ = x.shape

    def cbr(name, t, stride=1, dilation=1, relu=True, out_dtype=jnp.bfloat16):
        pp = params[name]
        return conv2d_bn_act(t, pp['w'], pp['s'], pp['b'],
                             stride=stride, dilation=dilation, relu=relu,
                             out_dtype=out_dtype)

    def context_block(t, name, dilation):
        y = cbr(name, t, stride=1, dilation=dilation)
        return jnp.concatenate([t, y], axis=-1)

    # backbone -> f4 (1/4 resolution, 96 ch)
    f = cbr('bb1', x, stride=2)
    f = cbr('bb2', f)
    f = cbr('bb3', f, stride=2)
    f = cbr('bb4', f)
    f4 = context_block(f, 'bb_cb', 2)

    ff4 = cbr('ctxTf5', f4)

    ctx = []
    f8 = context_block(avg_pool2(f4), 'b8_cb', 2)        # 160 ch
    ctx.append(cbr('ctxTf4', f8))
    f16 = context_block(avg_pool2(f8), 'b16_cb', 4)      # 240 ch
    ctx.append(cbr('ctxTf3', f16))
    f32v = context_block(avg_pool2(f16), 'b32_cb', 4)    # 336 ch
    ctx.append(cbr('ctxTf2', f32v))
    f64v = context_block(avg_pool2(f32v), 'b64_cb', 4)   # 448 ch
    ctx.append(cbr('ctxTf1', f64v))
    glob = cbr('gap', jnp.mean(f64v.astype(jnp.float32), axis=(1, 2),
                               keepdims=True))
    ctx.append(cbr('ctxTf0', glob))

    # sam (catCtxV3): 1x1 conv over concat([ff4] + upsampled ctx).  A 1x1 conv
    # commutes with bilinear upsampling (both linear), so each 48x48 weight
    # block is applied at its source's native resolution; the 48-channel
    # partial sums are upsampled, added, then bias + ReLU applied once.
    th, tw = ff4.shape[1], ff4.shape[2]
    sam = params['sam']
    w_sam = sam['w'][0, 0] * sam['s'][None, :]          # (288, 48), BN folded
    zero48 = jnp.zeros((48,), jnp.float32)
    acc = None
    for idx, src in enumerate([ff4] + ctx):
        ns, hs, ws, cs = src.shape
        wblk = w_sam[idx * 48:(idx + 1) * 48, :]
        part = matmul_bias_act(src.reshape(ns * hs * ws, cs), wblk, zero48,
                               relu=False, out_dtype=jnp.float32)
        part = part.reshape(ns, hs, ws, 48)
        if (hs, ws) != (th, tw):
            part = upsample_bilinear_align_corners(part, th, tw)
        acc = part if acc is None else acc + part
    out = jnp.maximum(acc + sam['b'], 0.0).astype(jnp.bfloat16)

    # classification head
    out = context_block(out, 'cls_cb', 2)
    wc = params['cls_conv']['w']
    bc = params['cls_conv']['b']
    logits = conv2d_bn_act(out, wc, jnp.ones((19,), jnp.float32), bc,
                           relu=False, out_dtype=jnp.float32)

    logits = upsample_bilinear_align_corners(logits, h, w)
    main_loss = ce_loss(logits, target)
    pred = jnp.argmax(logits, axis=-1)
    return main_loss, pred


if __name__ == "__main__":
    key = jax.random.PRNGKey(0)
    pkey, xkey, tkey = jax.random.split(key, 3)

    params = init_params(pkey)
    N, H, W = 2, 64, 64  # H, W multiples of 64 so the five /2 stages divide cleanly
    x = jax.random.normal(xkey, (N, H, W, 3), jnp.float32)          # NHWC
    target = jax.random.randint(tkey, (N, H, W), 0, 19, jnp.int32)  # 19 classes

    loss, pred = jax.jit(forward)(params, x, target)
    jax.block_until_ready((loss, pred))
    assert loss.shape == () and pred.shape == (N, H, W)
    print("KERNEL_OK")
</pallas_src>

<mosaic_0001>
module attributes {stable_mosaic.version = 11 : i64} {
  func.func @_mm_bias_act_kernel(%arg0: i32, %arg1: memref<512x128xbf16, #tpu.memory_space<vmem>>, %arg2: memref<128x128xbf16, #tpu.memory_space<vmem>>, %arg3: memref<1x128xf32, #tpu.memory_space<vmem>>, %arg4: memref<512x128xbf16, #tpu.memory_space<vmem>>) attributes {dimension_semantics = [#tpu.dimension_semantics<parallel>], iteration_bounds = array<i64: 4>, scalar_prefetch = 0 : i64, scratch_operands = 0 : i64, tpu.core_type = #tpu.core_type<tc>, window_params = [{transform_indices = @transform_0, window_bounds = array<i64: 512, 128>}, {pipeline_mode = #tpu.pipeline_mode<synchronous>, transform_indices = @transform_1, window_bounds = array<i64: 128, 128>}, {pipeline_mode = #tpu.pipeline_mode<synchronous>, transform_indices = @transform_2, window_bounds = array<i64: 1, 128>}, {transform_indices = @transform_3, window_bounds = array<i64: 512, 128>}]} {
    %c0 = arith.constant 0 : index
    %c0_0 = arith.constant 0 : index
    %0 = vector.load %arg1[%c0, %c0_0] : memref<512x128xbf16, #tpu.memory_space<vmem>>, vector<512x128xbf16>
    %c0_1 = arith.constant 0 : index
    %c0_2 = arith.constant 0 : index
    %1 = vector.load %arg2[%c0_1, %c0_2] : memref<128x128xbf16, #tpu.memory_space<vmem>>, vector<128x128xbf16>
    %cst = arith.constant dense<0.000000e+00> : vector<512x128xf32>
    %2 = tpu.matmul %0, %1, %cst {dimension_numbers = #tpu.dot_dimension_numbers<[1], [0], [0], [1], [0, 0, 1, 1], [], []>} : vector<512x128xbf16>, vector<128x128xbf16>, vector<512x128xf32> -> vector<512x128xf32>
    %c0_3 = arith.constant 0 : index
    %c0_4 = arith.constant 0 : index
    %3 = vector.load %arg3[%c0_3, %c0_4] : memref<1x128xf32, #tpu.memory_space<vmem>>, vector<1x128xf32>
    %4 = vector.broadcast %3 : vector<1x128xf32> to vector<512x128xf32>
    %5 = arith.addf %2, %4 : vector<512x128xf32>
    %cst_5 = arith.constant 0.000000e+00 : f32
    %6 = vector.broadcast %cst_5 : f32 to vector<512x128xf32>
    %7 = arith.maximumf %5, %6 : vector<512x128xf32>
    %8 = arith.truncf %7 : vector<512x128xf32> to vector<512x128xbf16>
    %c0_6 = arith.constant 0 : index
    %c0_7 = arith.constant 0 : index
    %9 = vector.load %arg4[%c0_6, %c0_7] : memref<512x128xbf16, #tpu.memory_space<vmem>>, vector<512x128xbf16>
    tpu.vector_store %arg4[%c0_6, %c0_7], %8 {strides = array<i32>} : memref<512x128xbf16, #tpu.memory_space<vmem>>, vector<512x128xbf16>,
    return
  }
  func.func @transform_0(%arg0: i32) -> (i32, i32) {
    %c0_i32 = arith.constant 0 : i32
    %c0_i32_0 = arith.constant 0 : i32
    return %arg0, %c0_i32 : i32, i32
  }
  func.func @transform_1(%arg0: i32) -> (i32, i32) {
    %c0_i32 = arith.constant 0 : i32
    %c0_i32_0 = arith.constant 0 : i32
    %c0_i32_1 = arith.constant 0 : i32
    return %c0_i32, %c0_i32_0 : i32, i32
  }
  func.func @transform_2(%arg0: i32) -> (i32, i32) {
    %c0_i32 = arith.constant 0 : i32
    %c0_i32_0 = arith.constant 0 : i32
    %c0_i32_1 = arith.constant 0 : i32
    return %c0_i32, %c0_i32_0 : i32, i32
  }
  func.func @transform_3(%arg0: i32) -> (i32, i32) {
    %c0_i32 = arith.constant 0 : i32
    %c0_i32_0 = arith.constant 0 : i32
    return %arg0, %c0_i32 : i32, i32
  }
}

module attributes {stable_mosaic.version = 11 : i64} {
  func.func @_mm_bias_act_kernel(%arg0: i32, %arg1: memref<512x256xbf16, #tpu.memory_space<vmem>>, %arg2: memref<256x128xbf16, #tpu.memory_space<vmem>>, %arg3: memref<1x128xf32, #tpu.memory_space<vmem>>, %arg4: memref<512x128xbf16, #tpu.memory_space<vmem>>) attributes {dimension_semantics = [#tpu.dimension_semantics<parallel>], iteration_bounds = array<i64: 4>, scalar_prefetch = 0 : i64, scratch_operands = 0 : i64, tpu.core_type = #tpu.core_type<tc>, window_params = [{transform_indices = @transform_0, window_bounds = array<i64: 512, 256>}, {pipeline_mode = #tpu.pipeline_mode<synchronous>, transform_indices = @transform_1, window_bounds = array<i64: 256, 128>}, {pipeline_mode = #tpu.pipeline_mode<synchronous>, transform_indices = @transform_2, window_bounds = array<i64: 1, 128>}, {transform_indices = @transform_3, window_bounds = array<i64: 512, 128>}]} {
    %c0 = arith.constant 0 : index
    %c0_0 = arith.constant 0 : index
    %0 = vector.load %arg1[%c0, %c0_0] : memref<512x256xbf16, #tpu.memory_space<vmem>>, vector<512x256xbf16>
    %c0_1 = arith.constant 0 : index
    %c0_2 = arith.constant 0 : index
    %1 = vector.load %arg2[%c0_1, %c0_2] : memref<256x128xbf16, #tpu.memory_space<vmem>>, vector<256x128xbf16>
    %cst = arith.constant dense<0.000000e+00> : vector<512x128xf32>
    %2 = tpu.matmul %0, %1, %cst {dimension_numbers = #tpu.dot_dimension_numbers<[1], [0], [0], [1], [0, 0, 1, 1], [], []>} : vector<512x256xbf16>, vector<256x128xbf16>, vector<512x128xf32> -> vector<512x128xf32>
    %c0_3 = arith.constant 0 : index
    %c0_4 = arith.constant 0 : index
    %3 = vector.load %arg3[%c0_3, %c0_4] : memref<1x128xf32, #tpu.memory_space<vmem>>, vector<1x128xf32>
    %4 = vector.broadcast %3 : vector<1x128xf32> to vector<512x128xf32>
    %5 = arith.addf %2, %4 : vector<512x128xf32>
    %cst_5 = arith.constant 0.000000e+00 : f32
    %6 = vector.broadcast %cst_5 : f32 to vector<512x128xf32>
    %7 = arith.maximumf %5, %6 : vector<512x128xf32>
    %8 = arith.truncf %7 : vector<512x128xf32> to vector<512x128xbf16>
    %c0_6 = arith.constant 0 : index
    %c0_7 = arith.constant 0 : index
    %9 = vector.load %arg4[%c0_6, %c0_7] : memref<512x128xbf16, #tpu.memory_space<vmem>>, vector<512x128xbf16>
    tpu.vector_store %arg4[%c0_6, %c0_7], %8 {strides = array<i32>} : memref<512x128xbf16, #tpu.memory_space<vmem>>, vector<512x128xbf16>,
    return
  }
  func.func @transform_0(%arg0: i32) -> (i32, i32) {
    %c0_i32 = arith.constant 0 : i32
    %c0_i32_0 = arith.constant 0 : i32
    return %arg0, %c0_i32 : i32, i32
  }
  func.func @transform_1(%arg0: i32) -> (i32, i32) {
    %c0_i32 = arith.constant 0 : i32
    %c0_i32_0 = arith.constant 0 : i32
    %c0_i32_1 = arith.constant 0 : i32
    return %c0_i32, %c0_i32_0 : i32, i32
  }
  func.func @transform_2(%arg0: i32) -> (i32, i32) {
    %c0_i32 = arith.constant 0 : i32
    %c0_i32_0 = arith.constant 0 : i32
    %c0_i32_1 = arith.constant 0 : i32
    return %c0_i32, %c0_i32_0 : i32, i32
  }
  func.func @transform_3(%arg0: i32) -> (i32, i32) {
    %c0_i32 = arith.constant 0 : i32
    %c0_i32_0 = arith.constant 0 : i32
    return %arg0, %c0_i32 : i32, i32
  }
}

module attributes {stable_mosaic.version = 11 : i64} {
  func.func @_mm_bias_act_kernel(%arg0: i32, %arg1: memref<256x256xbf16, #tpu.memory_space<vmem>>, %arg2: memref<256x128xbf16, #tpu.memory_space<vmem>>, %arg3: memref<1x128xf32, #tpu.memory_space<vmem>>, %arg4: memref<256x128xbf16, #tpu.memory_space<vmem>>) attributes {dimension_semantics = [#tpu.dimension_semantics<parallel>], iteration_bounds = array<i64: 2>, scalar_prefetch = 0 : i64, scratch_operands = 0 : i64, tpu.core_type = #tpu.core_type<tc>, window_params = [{transform_indices = @transform_0, window_bounds = array<i64: 256, 256>}, {pipeline_mode = #tpu.pipeline_mode<synchronous>, transform_indices = @transform_1, window_bounds = array<i64: 256, 128>}, {pipeline_mode = #tpu.pipeline_mode<synchronous>, transform_indices = @transform_2, window_bounds = array<i64: 1, 128>}, {transform_indices = @transform_3, window_bounds = array<i64: 256, 128>}]} {
    %c0 = arith.constant 0 : index
    %c0_0 = arith.constant 0 : index
    %0 = vector.load %arg1[%c0, %c0_0] : memref<256x256xbf16, #tpu.memory_space<vmem>>, vector<256x256xbf16>
    %c0_1 = arith.constant 0 : index
    %c0_2 = arith.constant 0 : index
    %1 = vector.load %arg2[%c0_1, %c0_2] : memref<256x128xbf16, #tpu.memory_space<vmem>>, vector<256x128xbf16>
    %cst = arith.constant dense<0.000000e+00> : vector<256x128xf32>
    %2 = tpu.matmul %0, %1, %cst {dimension_numbers = #tpu.dot_dimension_numbers<[1], [0], [0], [1], [0, 0, 1, 1], [], []>} : vector<256x256xbf16>, vector<256x128xbf16>, vector<256x128xf32> -> vector<256x128xf32>
    %c0_3 = arith.constant 0 : index
    %c0_4 = arith.constant 0 : index
    %3 = vector.load %arg3[%c0_3, %c0_4] : memref<1x128xf32, #tpu.memory_space<vmem>>, vector<1x128xf32>
    %4 = vector.broadcast %3 : vector<1x128xf32> to vector<256x128xf32>
    %5 = arith.addf %2, %4 : vector<256x128xf32>
    %cst_5 = arith.constant 0.000000e+00 : f32
    %6 = vector.broadcast %cst_5 : f32 to vector<256x128xf32>
    %7 = arith.maximumf %5, %6 : vector<256x128xf32>
    %8 = arith.truncf %7 : vector<256x128xf32> to vector<256x128xbf16>
    %c0_6 = arith.constant 0 : index
    %c0_7 = arith.constant 0 : index
    %9 = vector.load %arg4[%c0_6, %c0_7] : memref<256x128xbf16, #tpu.memory_space<vmem>>, vector<256x128xbf16>
    tpu.vector_store %arg4[%c0_6, %c0_7], %8 {strides = array<i32>} : memref<256x128xbf16, #tpu.memory_space<vmem>>, vector<256x128xbf16>,
    return
  }
  func.func @transform_0(%arg0: i32) -> (i32, i32) {
    %c0_i32 = arith.constant 0 : i32
    %c0_i32_0 = arith.constant 0 : i32
    return %arg0, %c0_i32 : i32, i32
  }
  func.func @transform_1(%arg0: i32) -> (i32, i32) {
    %c0_i32 = arith.constant 0 : i32
    %c0_i32_0 = arith.constant 0 : i32
    %c0_i32_1 = arith.constant 0 : i32
    return %c0_i32, %c0_i32_0 : i32, i32
  }
  func.func @transform_2(%arg0: i32) -> (i32, i32) {
    %c0_i32 = arith.constant 0 : i32
    %c0_i32_0 = arith.constant 0 : i32
    %c0_i32_1 = arith.constant 0 : i32
    return %c0_i32, %c0_i32_0 : i32, i32
  }
  func.func @transform_3(%arg0: i32) -> (i32, i32) {
    %c0_i32 = arith.constant 0 : i32
    %c0_i32_0 = arith.constant 0 : i32
    return %arg0, %c0_i32 : i32, i32
  }
}

module attributes {stable_mosaic.version = 11 : i64} {
  func.func @_mm_bias_act_kernel(%arg0: i32, %arg1: memref<256x384xbf16, #tpu.memory_space<vmem>>, %arg2: memref<384x128xbf16, #tpu.memory_space<vmem>>, %arg3: memref<1x128xf32, #tpu.memory_space<vmem>>, %arg4: memref<256x128xbf16, #tpu.memory_space<vmem>>) attributes {dimension_semantics = [#tpu.dimension_semantics<parallel>], iteration_bounds = array<i64: 2>, scalar_prefetch = 0 : i64, scratch_operands = 0 : i64, tpu.core_type = #tpu.core_type<tc>, window_params = [{transform_indices = @transform_0, window_bounds = array<i64: 256, 384>}, {pipeline_mode = #tpu.pipeline_mode<synchronous>, transform_indices = @transform_1, window_bounds = array<i64: 384, 128>}, {pipeline_mode = #tpu.pipeline_mode<synchronous>, transform_indices = @transform_2, window_bounds = array<i64: 1, 128>}, {transform_indices = @transform_3, window_bounds = array<i64: 256, 128>}]} {
    %c0 = arith.constant 0 : index
    %c0_0 = arith.constant 0 : index
    %0 = vector.load %arg1[%c0, %c0_0] : memref<256x384xbf16, #tpu.memory_space<vmem>>, vector<256x384xbf16>
    %c0_1 = arith.constant 0 : index
    %c0_2 = arith.constant 0 : index
    %1 = vector.load %arg2[%c0_1, %c0_2] : memref<384x128xbf16, #tpu.memory_space<vmem>>, vector<384x128xbf16>
    %cst = arith.constant dense<0.000000e+00> : vector<256x128xf32>
    %2 = tpu.matmul %0, %1, %cst {dimension_numbers = #tpu.dot_dimension_numbers<[1], [0], [0], [1], [0, 0, 1, 1], [], []>} : vector<256x384xbf16>, vector<384x128xbf16>, vector<256x128xf32> -> vector<256x128xf32>
    %c0_3 = arith.constant 0 : index
    %c0_4 = arith.constant 0 : index
    %3 = vector.load %arg3[%c0_3, %c0_4] : memref<1x128xf32, #tpu.memory_space<vmem>>, vector<1x128xf32>
    %4 = vector.broadcast %3 : vector<1x128xf32> to vector<256x128xf32>
    %5 = arith.addf %2, %4 : vector<256x128xf32>
    %cst_5 = arith.constant 0.000000e+00 : f32
    %6 = vector.broadcast %cst_5 : f32 to vector<256x128xf32>
    %7 = arith.maximumf %5, %6 : vector<256x128xf32>
    %8 = arith.truncf %7 : vector<256x128xf32> to vector<256x128xbf16>
    %c0_6 = arith.constant 0 : index
    %c0_7 = arith.constant 0 : index
    %9 = vector.load %arg4[%c0_6, %c0_7] : memref<256x128xbf16, #tpu.memory_space<vmem>>, vector<256x128xbf16>
    tpu.vector_store %arg4[%c0_6, %c0_7], %8 {strides = array<i32>} : memref<256x128xbf16, #tpu.memory_space<vmem>>, vector<256x128xbf16>,
    return
  }
  func.func @transform_0(%arg0: i32) -> (i32, i32) {
    %c0_i32 = arith.constant 0 : i32
    %c0_i32_0 = arith.constant 0 : i32
    return %arg0, %c0_i32 : i32, i32
  }
  func.func @transform_1(%arg0: i32) -> (i32, i32) {
    %c0_i32 = arith.constant 0 : i32
    %c0_i32_0 = arith.constant 0 : i32
    %c0_i32_1 = arith.constant 0 : i32
    return %c0_i32, %c0_i32_0 : i32, i32
  }
  func.func @transform_2(%arg0: i32) -> (i32, i32) {
    %c0_i32 = arith.constant 0 : i32
    %c0_i32_0 = arith.constant 0 : i32
    %c0_i32_1 = arith.constant 0 : i32
    return %c0_i32, %c0_i32_0 : i32, i32
  }
  func.func @transform_3(%arg0: i32) -> (i32, i32) {
    %c0_i32 = arith.constant 0 : i32
    %c0_i32_0 = arith.constant 0 : i32
    return %arg0, %c0_i32 : i32, i32
  }
}

module attributes {stable_mosaic.version = 11 : i64} {
  func.func @_mm_bias_act_kernel(%arg0: i32, %arg1: memref<256x512xbf16, #tpu.memory_space<vmem>>, %arg2: memref<512x128xbf16, #tpu.memory_space<vmem>>, %arg3: memref<1x128xf32, #tpu.memory_space<vmem>>, %arg4: memref<256x128xbf16, #tpu.memory_space<vmem>>) attributes {dimension_semantics = [#tpu.dimension_semantics<parallel>], iteration_bounds = array<i64: 2>, scalar_prefetch = 0 : i64, scratch_operands = 0 : i64, tpu.core_type = #tpu.core_type<tc>, window_params = [{transform_indices = @transform_0, window_bounds = array<i64: 256, 512>}, {pipeline_mode = #tpu.pipeline_mode<synchronous>, transform_indices = @transform_1, window_bounds = array<i64: 512, 128>}, {pipeline_mode = #tpu.pipeline_mode<synchronous>, transform_indices = @transform_2, window_bounds = array<i64: 1, 128>}, {transform_indices = @transform_3, window_bounds = array<i64: 256, 128>}]} {
    %c0 = arith.constant 0 : index
    %c0_0 = arith.constant 0 : index
    %0 = vector.load %arg1[%c0, %c0_0] : memref<256x512xbf16, #tpu.memory_space<vmem>>, vector<256x512xbf16>
    %c0_1 = arith.constant 0 : index
    %c0_2 = arith.constant 0 : index
    %1 = vector.load %arg2[%c0_1, %c0_2] : memref<512x128xbf16, #tpu.memory_space<vmem>>, vector<512x128xbf16>
    %cst = arith.constant dense<0.000000e+00> : vector<256x128xf32>
    %2 = tpu.matmul %0, %1, %cst {dimension_numbers = #tpu.dot_dimension_numbers<[1], [0], [0], [1], [0, 0, 1, 1], [], []>} : vector<256x512xbf16>, vector<512x128xbf16>, vector<256x128xf32> -> vector<256x128xf32>
    %c0_3 = arith.constant 0 : index
    %c0_4 = arith.constant 0 : index
    %3 = vector.load %arg3[%c0_3, %c0_4] : memref<1x128xf32, #tpu.memory_space<vmem>>, vector<1x128xf32>
    %4 = vector.broadcast %3 : vector<1x128xf32> to vector<256x128xf32>
    %5 = arith.addf %2, %4 : vector<256x128xf32>
    %cst_5 = arith.constant 0.000000e+00 : f32
    %6 = vector.broadcast %cst_5 : f32 to vector<256x128xf32>
    %7 = arith.maximumf %5, %6 : vector<256x128xf32>
    %8 = arith.truncf %7 : vector<256x128xf32> to vector<256x128xbf16>
    %c0_6 = arith.constant 0 : index
    %c0_7 = arith.constant 0 : index
    %9 = vector.load %arg4[%c0_6, %c0_7] : memref<256x128xbf16, #tpu.memory_space<vmem>>, vector<256x128xbf16>
    tpu.vector_store %arg4[%c0_6, %c0_7], %8 {strides = array<i32>} : memref<256x128xbf16, #tpu.memory_space<vmem>>, vector<256x128xbf16>,
    return
  }
  func.func @transform_0(%arg0: i32) -> (i32, i32) {
    %c0_i32 = arith.constant 0 : i32
    %c0_i32_0 = arith.constant 0 : i32
    return %arg0, %c0_i32 : i32, i32
  }
  func.func @transform_1(%arg0: i32) -> (i32, i32) {
    %c0_i32 = arith.constant 0 : i32
    %c0_i32_0 = arith.constant 0 : i32
    %c0_i32_1 = arith.constant 0 : i32
    return %c0_i32, %c0_i32_0 : i32, i32
  }
  func.func @transform_2(%arg0: i32) -> (i32, i32) {
    %c0_i32 = arith.constant 0 : i32
    %c0_i32_0 = arith.constant 0 : i32
    %c0_i32_1 = arith.constant 0 : i32
    return %c0_i32, %c0_i32_0 : i32, i32
  }
  func.func @transform_3(%arg0: i32) -> (i32, i32) {
    %c0_i32 = arith.constant 0 : i32
    %c0_i32_0 = arith.constant 0 : i32
    return %arg0, %c0_i32 : i32, i32
  }
}

module attributes {stable_mosaic.version = 11 : i64} {
  func.func @_mm_bias_act_kernel(%arg0: i32, %arg1: memref<256x128xbf16, #tpu.memory_space<vmem>>, %arg2: memref<128x128xbf16, #tpu.memory_space<vmem>>, %arg3: memref<1x128xf32, #tpu.memory_space<vmem>>, %arg4: memref<256x128xbf16, #tpu.memory_space<vmem>>) attributes {dimension_semantics = [#tpu.dimension_semantics<parallel>], iteration_bounds = array<i64: 2>, scalar_prefetch = 0 : i64, scratch_operands = 0 : i64, tpu.core_type = #tpu.core_type<tc>, window_params = [{transform_indices = @transform_0, window_bounds = array<i64: 256, 128>}, {pipeline_mode = #tpu.pipeline_mode<synchronous>, transform_indices = @transform_1, window_bounds = array<i64: 128, 128>}, {pipeline_mode = #tpu.pipeline_mode<synchronous>, transform_indices = @transform_2, window_bounds = array<i64: 1, 128>}, {transform_indices = @transform_3, window_bounds = array<i64: 256, 128>}]} {
    %c0 = arith.constant 0 : index
    %c0_0 = arith.constant 0 : index
    %0 = vector.load %arg1[%c0, %c0_0] : memref<256x128xbf16, #tpu.memory_space<vmem>>, vector<256x128xbf16>
    %c0_1 = arith.constant 0 : index
    %c0_2 = arith.constant 0 : index
    %1 = vector.load %arg2[%c0_1, %c0_2] : memref<128x128xbf16, #tpu.memory_space<vmem>>, vector<128x128xbf16>
    %cst = arith.constant dense<0.000000e+00> : vector<256x128xf32>
    %2 = tpu.matmul %0, %1, %cst {dimension_numbers = #tpu.dot_dimension_numbers<[1], [0], [0], [1], [0, 0, 1, 1], [], []>} : vector<256x128xbf16>, vector<128x128xbf16>, vector<256x128xf32> -> vector<256x128xf32>
    %c0_3 = arith.constant 0 : index
    %c0_4 = arith.constant 0 : index
    %3 = vector.load %arg3[%c0_3, %c0_4] : memref<1x128xf32, #tpu.memory_space<vmem>>, vector<1x128xf32>
    %4 = vector.broadcast %3 : vector<1x128xf32> to vector<256x128xf32>
    %5 = arith.addf %2, %4 : vector<256x128xf32>
    %cst_5 = arith.constant 0.000000e+00 : f32
    %6 = vector.broadcast %cst_5 : f32 to vector<256x128xf32>
    %7 = arith.maximumf %5, %6 : vector<256x128xf32>
    %8 = arith.truncf %7 : vector<256x128xf32> to vector<256x128xbf16>
    %c0_6 = arith.constant 0 : index
    %c0_7 = arith.constant 0 : index
    %9 = vector.load %arg4[%c0_6, %c0_7] : memref<256x128xbf16, #tpu.memory_space<vmem>>, vector<256x128xbf16>
    tpu.vector_store %arg4[%c0_6, %c0_7], %8 {strides = array<i32>} : memref<256x128xbf16, #tpu.memory_space<vmem>>, vector<256x128xbf16>,
    return
  }
  func.func @transform_0(%arg0: i32) -> (i32, i32) {
    %c0_i32 = arith.constant 0 : i32
    %c0_i32_0 = arith.constant 0 : i32
    return %arg0, %c0_i32 : i32, i32
  }
  func.func @transform_1(%arg0: i32) -> (i32, i32) {
    %c0_i32 = arith.constant 0 : i32
    %c0_i32_0 = arith.constant 0 : i32
    %c0_i32_1 = arith.constant 0 : i32
    return %c0_i32, %c0_i32_0 : i32, i32
  }
  func.func @transform_2(%arg0: i32) -> (i32, i32) {
    %c0_i32 = arith.constant 0 : i32
    %c0_i32_0 = arith.constant 0 : i32
    %c0_i32_1 = arith.constant 0 : i32
    return %c0_i32, %c0_i32_0 : i32, i32
  }
  func.func @transform_3(%arg0: i32) -> (i32, i32) {
    %c0_i32 = arith.constant 0 : i32
    %c0_i32_0 = arith.constant 0 : i32
    return %arg0, %c0_i32 : i32, i32
  }
}

module attributes {stable_mosaic.version = 11 : i64} {
  func.func @_mm_bias_act_kernel(%arg0: i32, %arg1: memref<256x128xbf16, #tpu.memory_space<vmem>>, %arg2: memref<128x128xbf16, #tpu.memory_space<vmem>>, %arg3: memref<1x128xf32, #tpu.memory_space<vmem>>, %arg4: memref<256x128xf32, #tpu.memory_space<vmem>>) attributes {dimension_semantics = [#tpu.dimension_semantics<parallel>], iteration_bounds = array<i64: 2>, scalar_prefetch = 0 : i64, scratch_operands = 0 : i64, tpu.core_type = #tpu.core_type<tc>, window_params = [{transform_indices = @transform_0, window_bounds = array<i64: 256, 128>}, {pipeline_mode = #tpu.pipeline_mode<synchronous>, transform_indices = @transform_1, window_bounds = array<i64: 128, 128>}, {pipeline_mode = #tpu.pipeline_mode<synchronous>, transform_indices = @transform_2, window_bounds = array<i64: 1, 128>}, {transform_indices = @transform_3, window_bounds = array<i64: 256, 128>}]} {
    %c0 = arith.constant 0 : index
    %c0_0 = arith.constant 0 : index
    %0 = vector.load %arg1[%c0, %c0_0] : memref<256x128xbf16, #tpu.memory_space<vmem>>, vector<256x128xbf16>
    %c0_1 = arith.constant 0 : index
    %c0_2 = arith.constant 0 : index
    %1 = vector.load %arg2[%c0_1, %c0_2] : memref<128x128xbf16, #tpu.memory_space<vmem>>, vector<128x128xbf16>
    %cst = arith.constant dense<0.000000e+00> : vector<256x128xf32>
    %2 = tpu.matmul %0, %1, %cst {dimension_numbers = #tpu.dot_dimension_numbers<[1], [0], [0], [1], [0, 0, 1, 1], [], []>} : vector<256x128xbf16>, vector<128x128xbf16>, vector<256x128xf32> -> vector<256x128xf32>
    %c0_3 = arith.constant 0 : index
    %c0_4 = arith.constant 0 : index
    %3 = vector.load %arg3[%c0_3, %c0_4] : memref<1x128xf32, #tpu.memory_space<vmem>>, vector<1x128xf32>
    %4 = vector.broadcast %3 : vector<1x128xf32> to vector<256x128xf32>
    %5 = arith.addf %2, %4 : vector<256x128xf32>
    %c0_5 = arith.constant 0 : index
    %c0_6 = arith.constant 0 : index
    %6 = vector.load %arg4[%c0_5, %c0_6] : memref<256x128xf32, #tpu.memory_space<vmem>>, vector<256x128xf32>
    tpu.vector_store %arg4[%c0_5, %c0_6], %5 {strides = array<i32>} : memref<256x128xf32, #tpu.memory_space<vmem>>, vector<256x128xf32>,
    return
  }
  func.func @transform_0(%arg0: i32) -> (i32, i32) {
    %c0_i32 = arith.constant 0 : i32
    %c0_i32_0 = arith.constant 0 : i32
    return %arg0, %c0_i32 : i32, i32
  }
  func.func @transform_1(%arg0: i32) -> (i32, i32) {
    %c0_i32 = arith.constant 0 : i32
    %c0_i32_0 = arith.constant 0 : i32
    %c0_i32_1 = arith.constant 0 : i32
    return %c0_i32, %c0_i32_0 : i32, i32
  }
  func.func @transform_2(%arg0: i32) -> (i32, i32) {
    %c0_i32 = arith.constant 0 : i32
    %c0_i32_0 = arith.constant 0 : i32
    %c0_i32_1 = arith.constant 0 : i32
    return %c0_i32, %c0_i32_0 : i32, i32
  }
  func.func @transform_3(%arg0: i32) -> (i32, i32) {
    %c0_i32 = arith.constant 0 : i32
    %c0_i32_0 = arith.constant 0 : i32
    return %arg0, %c0_i32 : i32, i32
  }
}

</mosaic_0001>

<llo_original>
// kernel: forward.9
$region0: #{forward.9}
  #allocation0 [shape = 'u32[]', space=smem, size = 0x4, offset = 0x4, fixed_abs, tag = 'smem constant byte address 0x4 - core index']
  #allocation1 [shape = 'u32[72,128]{1,0:T(1,128)}', space=vmem, size = 0x9000, scoped, tag = 'internal scratch']
  %s0 = inlined_call_operand.vmem [shape: bf16[2048,128], index: 0, kind: input, shape index: {}]
  %s1 = inlined_call_operand.vmem [shape: bf16[128,128], index: 1, kind: input, shape index: {}]
  %s2 = inlined_call_operand.vmem [shape: f32[1,128], index: 2, kind: input, shape index: {}]
  %s3 = inlined_call_operand.vmem [shape: bf16[2048,128], index: 3, kind: output, shape index: {}]
  %s4 = sld [smem:[#allocation0]]
  $region45: #{forward.9} parent=0
    _
  %s6 = ssub.s32 1, %s4
  %s7 = scalar_select 0, %s6, %s4
  loop: start=0, step=1, limit=6
  $region2: #{forward.9} parent=0 // loop_pre_header
    _
  $region3: #{forward.9} parent=0 // loop_header
    %s9 = sphi 0, %s13
    %p10 = scmp.ge.s32.totalorder %s9, 6
    %s19 = sphi 0, %s21
    %s22 = sphi 0, %s19
    %s23 = sphi 0, %s22
    %s39 = sphi 0, %s23
    %s43 = sphi 0, %s43
    %s45 = sphi 0, %s43
    %s46 = sphi 0, %s45
    %s60 = sphi 0, %s46
    %s64 = sphi 0, %s64
    %s66 = sphi 0, %s64
    %s67 = sphi 0, %s66
    %s81 = sphi 0, %s67
    %s87 = sphi 0, %s89
    %s90 = sphi 0, %s87
    %s91 = sphi 0, %s90
    %s107 = sphi 0, %s91
  $region4: #{forward.9} parent=0 // loop_header_branch
    %12 = sbr.rel (%p10) target = $region8
  $region5: #{forward.9} parent=0 // loop_body
    %s14 = ssub.s32 %s9, 1
    %s15 = ssub.s32 %s9, 2
    %s16 = sadd.s32 %s9, 1
    %s17 = ssub.s32 %s9, %s16
    %p18 = scmp.eq.s32.totalorder %s17, 0
    %s20 = sadd.s32 %s19, 1
    %s21 = scalar_select %p18, %s19, %s20
    %p24 = pneg %p18
    %p25 = scmp.eq.s32.totalorder %s9, 3
    %p26 = por %p24, %p25
    %p27 = scmp.ne.s32.totalorder %s19, %s22
    %p28 = scmp.eq.s32.totalorder %s9, 0
    %p29 = por %p27, %p28
    %p30 = scmp.ne.s32.totalorder %s19, %s22
    %p31 = scmp.eq.s32.totalorder %s14, 3
    %p32 = por %p30, %p31
    %p33 = scmp.ne.s32.totalorder %s22, %s23
    %p34 = scmp.eq.s32.totalorder %s14, 0
    %p35 = por %p33, %p34
    %p36 = scmp.ne.s32.totalorder %s22, %s23
    %p37 = scmp.eq.s32.totalorder %s15, 3
    %p38 = por %p36, %p37
    %p40 = scmp.ne.s32.totalorder %s23, %s39
    %p41 = scmp.eq.s32.totalorder %s15, 0
    %p42 = por %p40, %p41
    %s44 = sadd.s32 %s43, 1
    %p47 = scmp.eq.s32.totalorder %s9, 3
    %p48 = scmp.ne.s32.totalorder %s43, %s45
    %p49 = scmp.eq.s32.totalorder %s9, 0
    %p50 = por %p48, %p49
    %p51 = scmp.ne.s32.totalorder %s43, %s45
    %p52 = scmp.eq.s32.totalorder %s14, 3
    %p53 = por %p51, %p52
    %p54 = scmp.ne.s32.totalorder %s45, %s46
    %p55 = scmp.eq.s32.totalorder %s14, 0
    %p56 = por %p54, %p55
    %p57 = scmp.ne.s32.totalorder %s45, %s46
    %p58 = scmp.eq.s32.totalorder %s15, 3
    %p59 = por %p57, %p58
    %p61 = scmp.ne.s32.totalorder %s46, %s60
    %p62 = scmp.eq.s32.totalorder %s15, 0
    %p63 = por %p61, %p62
    %s65 = sadd.s32 %s64, 1
    %p68 = scmp.eq.s32.totalorder %s9, 3
    %p69 = scmp.ne.s32.totalorder %s64, %s66
    %p70 = scmp.eq.s32.totalorder %s9, 0
    %p71 = por %p69, %p70
    %p72 = scmp.ne.s32.totalorder %s64, %s66
    %p73 = scmp.eq.s32.totalorder %s14, 3
    %p74 = por %p72, %p73
    %p75 = scmp.ne.s32.totalorder %s66, %s67
    %p76 = scmp.eq.s32.totalorder %s14, 0
    %p77 = por %p75, %p76
    %p78 = scmp.ne.s32.totalorder %s66, %s67
    %p79 = scmp.eq.s32.totalorder %s15, 3
    %p80 = por %p78, %p79
    %p82 = scmp.ne.s32.totalorder %s67, %s81
    %p83 = scmp.eq.s32.totalorder %s15, 0
    %p84 = por %p82, %p83
    %s85 = ssub.s32 %s9, %s16
    %p86 = scmp.eq.s32.totalorder %s85, 0
    %s88 = sadd.s32 %s87, 1
    %s89 = scalar_select %p86, %s87, %s88
    %p92 = pneg %p86
    %p93 = scmp.eq.s32.totalorder %s9, 3
    %p94 = por %p92, %p93
    %p95 = scmp.ne.s32.totalorder %s87, %s90
    %p96 = scmp.eq.s32.totalorder %s9, 0
    %p97 = por %p95, %p96
    %p98 = scmp.ne.s32.totalorder %s87, %s90
    %p99 = scmp.eq.s32.totalorder %s14, 3
    %p100 = por %p98, %p99
    %p101 = scmp.ne.s32.totalorder %s90, %s91
    %p102 = scmp.eq.s32.totalorder %s14, 0
    %p103 = por %p101, %p102
    %p104 = scmp.ne.s32.totalorder %s90, %s91
    %p105 = scmp.eq.s32.totalorder %s15, 3
    %p106 = por %p104, %p105
    %p108 = scmp.ne.s32.totalorder %s91, %s107
    %p109 = scmp.eq.s32.totalorder %s15, 0
    %p110 = por %p108, %p109
    %p111 = scmp.le.s32.totalorder 1, %s9
    %p112 = scmp.lt.s32.totalorder %s9, 5
    %p113 = pnand %p111, %p112
    %p114 = pneg %p113
    // Predicated region
    $region9: #{forward.9} parent=5 // pred_check
      _
    $region10: #{forward.9} parent=5 // pred_check_branch
      %116 = sbr.rel (%p113) target = $region12
    $region11: #{forward.9} parent=5 // pred_region
      %s117 = ssub.s32 %s9, 1
      // Predicated region
      $region13: #{forward.9} parent=11 // pred_check
        %p118 = pneg %p56
      $region14: #{forward.9} parent=11 // pred_check_branch
        %120 = sbr.rel (%p118) target = $region16
      $region15: #{forward.9} parent=11 // pred_region
        _
      $region16: #{forward.9} parent=11 // pred_fallthru
        _
      // Predicated region
      $region17: #{forward.9} parent=11 // pred_check
        %p121 = pneg %p77
      $region18: #{forward.9} parent=11 // pred_check_branch
        %123 = sbr.rel (%p121) target = $region20
      $region19: #{forward.9} parent=11 // pred_region
        _
      $region20: #{forward.9} parent=11 // pred_fallthru
        _
    $region12: #{forward.9} parent=5 // pred_fallthru
      _
    %p124 = scmp.lt.s32.totalorder %s9, 4
    // Predicated region
    $region21: #{forward.9} parent=5 // pred_check
      %p125 = pneg %p124
    $region22: #{forward.9} parent=5 // pred_check_branch
      %127 = sbr.rel (%p125) target = $region24
    $region23: #{forward.9} parent=5 // pred_region
      // Predicated region
      $region25: #{forward.9} parent=23 // pred_check
        %p128 = pneg %p29
      $region26: #{forward.9} parent=23 // pred_check_branch
        %130 = sbr.rel (%p128) target = $region28
      $region27: #{forward.9} parent=23 // pred_region
        %s131 = smul.u32 64, %s9
        %p132 = scmp.lt.s32.totalorder %s131, 255
        %s133 = scalar_select %p132, %s131, 255
        %s134 = smul.addr %s133, 4
        %s135 = scalar_lea.vmem %s0, %s134
        %s136 = smul.u32 64, %s9
      $region28: #{forward.9} parent=23 // pred_fallthru
        _
    $region24: #{forward.9} parent=5 // pred_fallthru
      _
    %p137 = scmp.le.s32.totalorder 1, %s9
    %p138 = scmp.lt.s32.totalorder %s9, 5
    %p139 = pnand %p137, %p138
    %p140 = pneg %p139
    // Predicated region
    $region29: #{forward.9} parent=5 // pred_check
      _
    $region30: #{forward.9} parent=5 // pred_check_branch
      %142 = sbr.rel (%p139) target = $region32
    $region31: #{forward.9} parent=5 // pred_region
      %s143 = ssub.s32 %s9, 1
      %s144 = smul.u32 64, %s14
      %p145 = scmp.lt.s32.totalorder %s144, 255
      %s146 = scalar_select %p145, %s144, 255
      %s147 = smul.addr %s146, 4
      %s148 = scalar_lea.vmem %s0, %s147
      %p149 = pneg %p35
      %p150 = pneg %p32
      %p151 = pneg %p56
      %p152 = pneg %p53
      %p153 = pneg %p77
      %p154 = pneg %p74
      %p155 = pneg %p103
      %p156 = pneg %p100
      %s157 = smul.u32 64, %s14
      %p158 = scmp.lt.s32.totalorder %s157, 255
      %s159 = scalar_select %p158, %s157, 255
      %s160 = smul.addr %s159, 4
      %s161 = scalar_lea.vmem %s3, %s160
      %s162 = smul.u32 64, %s14
      %p163 = scmp.lt.s32.totalorder %s162, 255
      %s164 = scalar_select %p163, %s162, 255
      %s165 = smul.addr %s164, 4
      %s166 = scalar_lea.vmem %s0, %s165
      %s167 = smul.u32 64, %s14
      %s168 = smul.u32 64, %s14
      %p169 = scmp.lt.s32.totalorder %s168, 255
      %s170 = scalar_select %p169, %s168, 255
      %s171 = smul.addr %s170, 4
      %s172 = scalar_lea.vmem %s3, %s171
      %s173 = smul.u32 64, %s14
      %v174 = vld [vmem:[%s166] sm:$0xf]
      %v175 = vld [vmem:[%s166 + $0x4] sm:$0xf]
      %v176 = vld [vmem:[%s166 + $0x8] sm:$0xf]
      %v177 = vld [vmem:[%s166 + $0xc] sm:$0xf]
      %v178 = vld [vmem:[%s166 + $0x10] sm:$0xf]
      %v179 = vld [vmem:[%s166 + $0x14] sm:$0xf]
      %v180 = vld [vmem:[%s166 + $0x18] sm:$0xf]
      %v181 = vld [vmem:[%s166 + $0x1c] sm:$0xf]
      %v182 = vld [vmem:[%s166 + $0x20] sm:$0xf]
      %v183 = vld [vmem:[%s166 + $0x24] sm:$0xf]
      %v184 = vld [vmem:[%s166 + $0x28] sm:$0xf]
      %v185 = vld [vmem:[%s166 + $0x2c] sm:$0xf]
      %v186 = vld [vmem:[%s166 + $0x30] sm:$0xf]
      %v187 = vld [vmem:[%s166 + $0x34] sm:$0xf]
      %v188 = vld [vmem:[%s166 + $0x38] sm:$0xf]
      %v189 = vld [vmem:[%s166 + $0x3c] sm:$0xf]
      %v190 = vld [vmem:[%s166 + $0x40] sm:$0xf]
      %v191 = vld [vmem:[%s166 + $0x44] sm:$0xf]
      %v192 = vld [vmem:[%s166 + $0x48] sm:$0xf]
      %v193 = vld [vmem:[%s166 + $0x4c] sm:$0xf]
      %v194 = vld [vmem:[%s166 + $0x50] sm:$0xf]
      %v195 = vld [vmem:[%s166 + $0x54] sm:$0xf]
      %v196 = vld [vmem:[%s166 + $0x58] sm:$0xf]
      %v197 = vld [vmem:[%s166 + $0x5c] sm:$0xf]
      %v198 = vld [vmem:[%s166 + $0x60] sm:$0xf]
      %v199 = vld [vmem:[%s166 + $0x64] sm:$0xf]
      %v200 = vld [vmem:[%s166 + $0x68] sm:$0xf]
      %v201 = vld [vmem:[%s166 + $0x6c] sm:$0xf]
      %v202 = vld [vmem:[%s166 + $0x70] sm:$0xf]
      %v203 = vld [vmem:[%s166 + $0x74] sm:$0xf]
      %v204 = vld [vmem:[%s166 + $0x78] sm:$0xf]
      %v205 = vld [vmem:[%s166 + $0x7c] sm:$0xf]
      %v206 = vld [vmem:[%s166 + $0x80] sm:$0xf]
      %v207 = vld [vmem:[%s166 + $0x84] sm:$0xf]
      %v208 = vld [vmem:[%s166 + $0x88] sm:$0xf]
      %v209 = vld [vmem:[%s166 + $0x8c] sm:$0xf]
      %v210 = vld [vmem:[%s166 + $0x90] sm:$0xf]
      %v211 = vld [vmem:[%s166 + $0x94] sm:$0xf]
      %v212 = vld [vmem:[%s166 + $0x98] sm:$0xf]
      %v213 = vld [vmem:[%s166 + $0x9c] sm:$0xf]
      %v214 = vld [vmem:[%s166 + $0xa0] sm:$0xf]
      %v215 = vld [vmem:[%s166 + $0xa4] sm:$0xf]
      %v216 = vld [vmem:[%s166 + $0xa8] sm:$0xf]
      %v217 = vld [vmem:[%s166 + $0xac] sm:$0xf]
      %v218 = vld [vmem:[%s166 + $0xb0] sm:$0xf]
      %v219 = vld [vmem:[%s166 + $0xb4] sm:$0xf]
      %v220 = vld [vmem:[%s166 + $0xb8] sm:$0xf]
      %v221 = vld [vmem:[%s166 + $0xbc] sm:$0xf]
      %v222 = vld [vmem:[%s166 + $0xc0] sm:$0xf]
      %v223 = vld [vmem:[%s166 + $0xc4] sm:$0xf]
      %v224 = vld [vmem:[%s166 + $0xc8] sm:$0xf]
      %v225 = vld [vmem:[%s166 + $0xcc] sm:$0xf]
      %v226 = vld [vmem:[%s166 + $0xd0] sm:$0xf]
      %v227 = vld [vmem:[%s166 + $0xd4] sm:$0xf]
      %v228 = vld [vmem:[%s166 + $0xd8] sm:$0xf]
      %v229 = vld [vmem:[%s166 + $0xdc] sm:$0xf]
      %v230 = vld [vmem:[%s166 + $0xe0] sm:$0xf]
      %v231 = vld [vmem:[%s166 + $0xe4] sm:$0xf]
      %v232 = vld [vmem:[%s166 + $0xe8] sm:$0xf]
      %v233 = vld [vmem:[%s166 + $0xec] sm:$0xf]
      %v234 = vld [vmem:[%s166 + $0xf0] sm:$0xf]
      %v235 = vld [vmem:[%s166 + $0xf4] sm:$0xf]
      %v236 = vld [vmem:[%s166 + $0xf8] sm:$0xf]
      %v237 = vld [vmem:[%s166 + $0xfc] sm:$0xf]
      %v238 = vld [vmem:[%s1] sm:$0xf]
      %v239 = vld [vmem:[%s1 + $0x4] sm:$0xf]
      %v240 = vld [vmem:[%s1 + $0x8] sm:$0xf]
      %v241 = vld [vmem:[%s1 + $0xc] sm:$0xf]
      %v242 = vld [vmem:[%s1 + $0x10] sm:$0xf]
      %v243 = vld [vmem:[%s1 + $0x14] sm:$0xf]
      %v244 = vld [vmem:[%s1 + $0x18] sm:$0xf]
      %v245 = vld [vmem:[%s1 + $0x1c] sm:$0xf]
      %v246 = vld [vmem:[%s1 + $0x20] sm:$0xf]
      %v247 = vld [vmem:[%s1 + $0x24] sm:$0xf]
      %v248 = vld [vmem:[%s1 + $0x28] sm:$0xf]
      %v249 = vld [vmem:[%s1 + $0x2c] sm:$0xf]
      %v250 = vld [vmem:[%s1 + $0x30] sm:$0xf]
      %v251 = vld [vmem:[%s1 + $0x34] sm:$0xf]
      %v252 = vld [vmem:[%s1 + $0x38] sm:$0xf]
      %v253 = vld [vmem:[%s1 + $0x3c] sm:$0xf]
      %v254 = vld [vmem:[%s2] sm:$0x1]
      %v256 = vperm.slane %v254, 0
      %v322 = vunpack.c.l.b16 %v174
      %v323 = vunpack.c.l.b16 %v175
      %v324 = vunpack.c.l.b16 %v176
      %v325 = vunpack.c.l.b16 %v177
      %v326 = vunpack.c.l.b16 %v178
      %v327 = vunpack.c.l.b16 %v179
      %v328 = vunpack.c.l.b16 %v180
      %v329 = vunpack.c.l.b16 %v181
      %v330 = vunpack.c.l.b16 %v182
      %v331 = vunpack.c.l.b16 %v183
      %v332 = vunpack.c.l.b16 %v184
      %v333 = vunpack.c.l.b16 %v185
      %v334 = vunpack.c.l.b16 %v186
      %v335 = vunpack.c.l.b16 %v187
      %v336 = vunpack.c.l.b16 %v188
      %v337 = vunpack.c.l.b16 %v189
      %v338 = vunpack.c.l.b16 %v190
      %v339 = vunpack.c.l.b16 %v191
      %v340 = vunpack.c.l.b16 %v192
      %v341 = vunpack.c.l.b16 %v193
      %v342 = vunpack.c.l.b16 %v194
      %v343 = vunpack.c.l.b16 %v195
      %v344 = vunpack.c.l.b16 %v196
      %v345 = vunpack.c.l.b16 %v197
      %v346 = vunpack.c.l.b16 %v198
      %v347 = vunpack.c.l.b16 %v199
      %v348 = vunpack.c.l.b16 %v200
      %v349 = vunpack.c.l.b16 %v201
      %v350 = vunpack.c.l.b16 %v202
      %v351 = vunpack.c.l.b16 %v203
      %v352 = vunpack.c.l.b16 %v204
      %v353 = vunpack.c.l.b16 %v205
      %v354 = vunpack.c.l.b16 %v206
      %v355 = vunpack.c.l.b16 %v207
      %v356 = vunpack.c.l.b16 %v208
      %v357 = vunpack.c.l.b16 %v209
      %v358 = vunpack.c.l.b16 %v210
      %v359 = vunpack.c.l.b16 %v211
      %v360 = vunpack.c.l.b16 %v212
      %v361 = vunpack.c.l.b16 %v213
      %v362 = vunpack.c.l.b16 %v214
      %v363 = vunpack.c.l.b16 %v215
      %v364 = vunpack.c.l.b16 %v216
      %v365 = vunpack.c.l.b16 %v217
      %v366 = vunpack.c.l.b16 %v218
      %v367 = vunpack.c.l.b16 %v219
      %v368 = vunpack.c.l.b16 %v220
      %v369 = vunpack.c.l.b16 %v221
      %v370 = vunpack.c.l.b16 %v222
      %v371 = vunpack.c.l.b16 %v223
      %v372 = vunpack.c.l.b16 %v224
      %v373 = vunpack.c.l.b16 %v225
      %v374 = vunpack.c.l.b16 %v226
      %v375 = vunpack.c.l.b16 %v227
      %v376 = vunpack.c.l.b16 %v228
      %v377 = vunpack.c.l.b16 %v229
      %v378 = vunpack.c.l.b16 %v230
      %v379 = vunpack.c.l.b16 %v231
      %v380 = vunpack.c.l.b16 %v232
      %v381 = vunpack.c.l.b16 %v233
      %v382 = vunpack.c.l.b16 %v234
      %v383 = vunpack.c.l.b16 %v235
      %v384 = vunpack.c.l.b16 %v236
      %v385 = vunpack.c.l.b16 %v237
      %v386 = vpack.c.b16 %v323, %v322
      %v387 = vpack.c.b16 %v325, %v324
      %v388 = vpack.c.b16 %v327, %v326
      %v389 = vpack.c.b16 %v329, %v328
      %v390 = vpack.c.b16 %v331, %v330
      %v391 = vpack.c.b16 %v333, %v332
      %v392 = vpack.c.b16 %v335, %v334
      %v393 = vpack.c.b16 %v337, %v336
      %v394 = vpack.c.b16 %v339, %v338
      %v395 = vpack.c.b16 %v341, %v340
      %v396 = vpack.c.b16 %v343, %v342
      %v397 = vpack.c.b16 %v345, %v344
      %v398 = vpack.c.b16 %v347, %v346
      %v399 = vpack.c.b16 %v349, %v348
      %v400 = vpack.c.b16 %v351, %v350
      %v401 = vpack.c.b16 %v353, %v352
      %v402 = vpack.c.b16 %v355, %v354
      %v403 = vpack.c.b16 %v357, %v356
      %v404 = vpack.c.b16 %v359, %v358
      %v405 = vpack.c.b16 %v361, %v360
      %v406 = vpack.c.b16 %v363, %v362
      %v407 = vpack.c.b16 %v365, %v364
      %v408 = vpack.c.b16 %v367, %v366
      %v409 = vpack.c.b16 %v369, %v368
      %v410 = vpack.c.b16 %v371, %v370
      %v411 = vpack.c.b16 %v373, %v372
      %v412 = vpack.c.b16 %v375, %v374
      %v413 = vpack.c.b16 %v377, %v376
      %v414 = vpack.c.b16 %v379, %v378
      %v415 = vpack.c.b16 %v381, %v380
      %v416 = vpack.c.b16 %v383, %v382
      %v417 = vpack.c.b16 %v385, %v384
      %v466 = vunpack.c.l.b16 %v238
      %v467 = vunpack.c.l.b16 %v239
      %v468 = vunpack.c.l.b16 %v240
      %v469 = vunpack.c.l.b16 %v241
      %v470 = vunpack.c.l.b16 %v242
      %v471 = vunpack.c.l.b16 %v243
      %v472 = vunpack.c.l.b16 %v244
      %v473 = vunpack.c.l.b16 %v245
      %v474 = vunpack.c.l.b16 %v246
      %v475 = vunpack.c.l.b16 %v247
      %v476 = vunpack.c.l.b16 %v248
      %v477 = vunpack.c.l.b16 %v249
      %v478 = vunpack.c.l.b16 %v250
      %v479 = vunpack.c.l.b16 %v251
      %v480 = vunpack.c.l.b16 %v252
      %v481 = vunpack.c.l.b16 %v253
      %v482 = vpack.c.b16 %v467, %v466
      %v483 = vpack.c.b16 %v469, %v468
      %v484 = vpack.c.b16 %v471, %v470
      %v485 = vpack.c.b16 %v473, %v472
      %v486 = vpack.c.b16 %v475, %v474
      %v487 = vpack.c.b16 %v477, %v476
      %v488 = vpack.c.b16 %v479, %v478
      %v489 = vpack.c.b16 %v481, %v480
      %498 = vmatpush.bf16.msra.mxu0 %v489
      %499 = vmatpush.bf16.msra.mxu0 %v488
      %500 = vmatpush.bf16.msra.mxu0 %v487
      %501 = vmatpush.bf16.msra.mxu0 %v486
      %502 = vmatpush.bf16.msra.mxu0 %v485
      %503 = vmatpush.bf16.msra.mxu0 %v484
      %504 = vmatpush.bf16.msra.mxu0 %v483
      %505 = vmatpush.bf16.msra.mxu0 %v482
      %506 = vmatmul.bf16.gmra.mxu0 %v386
      %v507 = vpop.f32.mrf.mxu0
      %v508 = vadd.f32 %v256, %v507
      %v509 = vpop.f32.mrf.mxu0
      %v510 = vadd.f32 %v256, %v509
      %511 = vmatmul.bf16.gmra.mxu0 %v387
      %v512 = vpop.f32.mrf.mxu0
      %v513 = vadd.f32 %v256, %v512
      %v514 = vpop.f32.mrf.mxu0
      %v515 = vadd.f32 %v256, %v514
      %516 = vmatmul.bf16.gmra.mxu0 %v388
      %v517 = vpop.f32.mrf.mxu0
      %v518 = vadd.f32 %v256, %v517
      %v519 = vpop.f32.mrf.mxu0
      %v520 = vadd.f32 %v256, %v519
      %521 = vmatmul.bf16.gmra.mxu0 %v389
      %v522 = vpop.f32.mrf.mxu0
      %v523 = vadd.f32 %v256, %v522
      %v524 = vpop.f32.mrf.mxu0
      %v525 = vadd.f32 %v256, %v524
      %526 = vmatmul.bf16.gmra.mxu0 %v390
      %v527 = vpop.f32.mrf.mxu0
      %v528 = vadd.f32 %v256, %v527
      %v529 = vpop.f32.mrf.mxu0
      %v530 = vadd.f32 %v256, %v529
      %531 = vmatmul.bf16.gmra.mxu0 %v391
      %v532 = vpop.f32.mrf.mxu0
      %v533 = vadd.f32 %v256, %v532
      %v534 = vpop.f32.mrf.mxu0
      %v535 = vadd.f32 %v256, %v534
      %536 = vmatmul.bf16.gmra.mxu0 %v392
      %v537 = vpop.f32.mrf.mxu0
      %v538 = vadd.f32 %v256, %v537
      %v539 = vpop.f32.mrf.mxu0
      %v540 = vadd.f32 %v256, %v539
      %541 = vmatmul.bf16.gmra.mxu0 %v393
      %v542 = vpop.f32.mrf.mxu0
      %v543 = vadd.f32 %v256, %v542
      %v544 = vpop.f32.mrf.mxu0
      %v545 = vadd.f32 %v256, %v544
      %546 = vmatmul.bf16.gmra.mxu0 %v394
      %v547 = vpop.f32.mrf.mxu0
      %v548 = vadd.f32 %v256, %v547
      %v549 = vpop.f32.mrf.mxu0
      %v550 = vadd.f32 %v256, %v549
      %551 = vmatmul.bf16.gmra.mxu0 %v395
      %v552 = vpop.f32.mrf.mxu0
      %v553 = vadd.f32 %v256, %v552
      %v554 = vpop.f32.mrf.mxu0
      %v555 = vadd.f32 %v256, %v554
      %556 = vmatmul.bf16.gmra.mxu0 %v396
      %v557 = vpop.f32.mrf.mxu0
      %v558 = vadd.f32 %v256, %v557
      %v559 = vpop.f32.mrf.mxu0
      %v560 = vadd.f32 %v256, %v559
      %561 = vmatmul.bf16.gmra.mxu0 %v397
      %v562 = vpop.f32.mrf.mxu0
      %v563 = vadd.f32 %v256, %v562
      %v564 = vpop.f32.mrf.mxu0
      %v565 = vadd.f32 %v256, %v564
      %566 = vmatmul.bf16.gmra.mxu0 %v398
      %v567 = vpop.f32.mrf.mxu0
      %v568 = vadd.f32 %v256, %v567
      %v569 = vpop.f32.mrf.mxu0
      %v570 = vadd.f32 %v256, %v569
      %571 = vmatmul.bf16.gmra.mxu0 %v399
      %v572 = vpop.f32.mrf.mxu0
      %v573 = vadd.f32 %v256, %v572
      %v574 = vpop.f32.mrf.mxu0
      %v575 = vadd.f32 %v256, %v574
      %576 = vmatmul.bf16.gmra.mxu0 %v400
      %v577 = vpop.f32.mrf.mxu0
      %v578 = vadd.f32 %v256, %v577
      %v579 = vpop.f32.mrf.mxu0
      %v580 = vadd.f32 %v256, %v579
      %581 = vmatmul.bf16.gmra.mxu0 %v401
      %v582 = vpop.f32.mrf.mxu0
      %v583 = vadd.f32 %v256, %v582
      %v584 = vpop.f32.mrf.mxu0
      %v585 = vadd.f32 %v256, %v584
      %586 = vmatmul.bf16.gmra.mxu0 %v402
      %v587 = vpop.f32.mrf.mxu0
      %v588 = vadd.f32 %v256, %v587
      %v589 = vpop.f32.mrf.mxu0
      %v590 = vadd.f32 %v256, %v589
      %591 = vmatmul.bf16.gmra.mxu0 %v403
      %v592 = vpop.f32.mrf.mxu0
      %v593 = vadd.f32 %v256, %v592
      %v594 = vpop.f32.mrf.mxu0
      %v595 = vadd.f32 %v256, %v594
      %596 = vmatmul.bf16.gmra.mxu0 %v404
      %v597 = vpop.f32.mrf.mxu0
      %v598 = vadd.f32 %v256, %v597
      %v599 = vpop.f32.mrf.mxu0
      %v600 = vadd.f32 %v256, %v599
      %601 = vmatmul.bf16.gmra.mxu0 %v405
      %v602 = vpop.f32.mrf.mxu0
      %v603 = vadd.f32 %v256, %v602
      %v604 = vpop.f32.mrf.mxu0
      %v605 = vadd.f32 %v256, %v604
      %606 = vmatmul.bf16.gmra.mxu0 %v406
      %v607 = vpop.f32.mrf.mxu0
      %v608 = vadd.f32 %v256, %v607
      %v609 = vpop.f32.mrf.mxu0
      %v610 = vadd.f32 %v256, %v609
      %611 = vmatmul.bf16.gmra.mxu0 %v407
      %v612 = vpop.f32.mrf.mxu0
      %v613 = vadd.f32 %v256, %v612
      %v614 = vpop.f32.mrf.mxu0
      %v615 = vadd.f32 %v256, %v614
      %616 = vmatmul.bf16.gmra.mxu0 %v408
      %v617 = vpop.f32.mrf.mxu0
      %v618 = vadd.f32 %v256, %v617
      %v619 = vpop.f32.mrf.mxu0
      %v620 = vadd.f32 %v256, %v619
      %621 = vmatmul.bf16.gmra.mxu0 %v409
      %v622 = vpop.f32.mrf.mxu0
      %v623 = vadd.f32 %v256, %v622
      %v624 = vpop.f32.mrf.mxu0
      %v625 = vadd.f32 %v256, %v624
      %626 = vmatmul.bf16.gmra.mxu0 %v410
      %v627 = vpop.f32.mrf.mxu0
      %v628 = vadd.f32 %v256, %v627
      %v629 = vpop.f32.mrf.mxu0
      %v630 = vadd.f32 %v256, %v629
      %631 = vmatmul.bf16.gmra.mxu0 %v411
      %v632 = vpop.f32.mrf.mxu0
      %v633 = vadd.f32 %v256, %v632
      %v634 = vpop.f32.mrf.mxu0
      %v635 = vadd.f32 %v256, %v634
      %636 = vmatmul.bf16.gmra.mxu0 %v412
      %v637 = vpop.f32.mrf.mxu0
      %v638 = vadd.f32 %v256, %v637
      %v639 = vpop.f32.mrf.mxu0
      %v640 = vadd.f32 %v256, %v639
      %641 = vmatmul.bf16.gmra.mxu0 %v413
      %v642 = vpop.f32.mrf.mxu0
      %v643 = vadd.f32 %v256, %v642
      %v644 = vpop.f32.mrf.mxu0
      %v645 = vadd.f32 %v256, %v644
      %646 = vmatmul.bf16.gmra.mxu0 %v414
      %v647 = vpop.f32.mrf.mxu0
      %v648 = vadd.f32 %v256, %v647
      %v649 = vpop.f32.mrf.mxu0
      %v650 = vadd.f32 %v256, %v649
      %651 = vmatmul.bf16.gmra.mxu0 %v415
      %v652 = vpop.f32.mrf.mxu0
      %v653 = vadd.f32 %v256, %v652
      %v654 = vpop.f32.mrf.mxu0
      %v655 = vadd.f32 %v256, %v654
      %656 = vmatmul.bf16.gmra.mxu0 %v416
      %v657 = vpop.f32.mrf.mxu0
      %v658 = vadd.f32 %v256, %v657
      %v659 = vpop.f32.mrf.mxu0
      %v660 = vadd.f32 %v256, %v659
      %661 = vmatmul.bf16.gmra.mxu0 %v417
      %v662 = vpop.f32.mrf.mxu0
      %v663 = vadd.f32 %v256, %v662
      %v664 = vpop.f32.mrf.mxu0
      %v665 = vadd.f32 %v256, %v664
      %666 = vdwg.mxu0
      %v667 = vmax.f32 %v508, 0.0
      %v668 = vmax.f32 %v510, 0.0
      %v669 = vmax.f32 %v513, 0.0
      %v670 = vmax.f32 %v515, 0.0
      %v671 = vmax.f32 %v518, 0.0
      %v672 = vmax.f32 %v520, 0.0
      %v673 = vmax.f32 %v523, 0.0
      %v674 = vmax.f32 %v525, 0.0
      %v675 = vmax.f32 %v528, 0.0
      %v676 = vmax.f32 %v530, 0.0
      %v677 = vmax.f32 %v533, 0.0
      %v678 = vmax.f32 %v535, 0.0
      %v679 = vmax.f32 %v538, 0.0
      %v680 = vmax.f32 %v540, 0.0
      %v681 = vmax.f32 %v543, 0.0
      %v682 = vmax.f32 %v545, 0.0
      %v683 = vmax.f32 %v548, 0.0
      %v684 = vmax.f32 %v550, 0.0
      %v685 = vmax.f32 %v553, 0.0
      %v686 = vmax.f32 %v555, 0.0
      %v687 = vmax.f32 %v558, 0.0
      %v688 = vmax.f32 %v560, 0.0
      %v689 = vmax.f32 %v563, 0.0
      %v690 = vmax.f32 %v565, 0.0
      %v691 = vmax.f32 %v568, 0.0
      %v692 = vmax.f32 %v570, 0.0
      %v693 = vmax.f32 %v573, 0.0
      %v694 = vmax.f32 %v575, 0.0
      %v695 = vmax.f32 %v578, 0.0
      %v696 = vmax.f32 %v580, 0.0
      %v697 = vmax.f32 %v583, 0.0
      %v698 = vmax.f32 %v585, 0.0
      %v699 = vmax.f32 %v588, 0.0
      %v700 = vmax.f32 %v590, 0.0
      %v701 = vmax.f32 %v593, 0.0
      %v702 = vmax.f32 %v595, 0.0
      %v703 = vmax.f32 %v598, 0.0
      %v704 = vmax.f32 %v600, 0.0
      %v705 = vmax.f32 %v603, 0.0
      %v706 = vmax.f32 %v605, 0.0
      %v707 = vmax.f32 %v608, 0.0
      %v708 = vmax.f32 %v610, 0.0
      %v709 = vmax.f32 %v613, 0.0
      %v710 = vmax.f32 %v615, 0.0
      %v711 = vmax.f32 %v618, 0.0
      %v712 = vmax.f32 %v620, 0.0
      %v713 = vmax.f32 %v623, 0.0
      %v714 = vmax.f32 %v625, 0.0
      %v715 = vmax.f32 %v628, 0.0
      %v716 = vmax.f32 %v630, 0.0
      %v717 = vmax.f32 %v633, 0.0
      %v718 = vmax.f32 %v635, 0.0
      %v719 = vmax.f32 %v638, 0.0
      %v720 = vmax.f32 %v640, 0.0
      %v721 = vmax.f32 %v643, 0.0
      %v722 = vmax.f32 %v645, 0.0
      %v723 = vmax.f32 %v648, 0.0
      %v724 = vmax.f32 %v650, 0.0
      %v725 = vmax.f32 %v653, 0.0
      %v726 = vmax.f32 %v655, 0.0
      %v727 = vmax.f32 %v658, 0.0
      %v728 = vmax.f32 %v660, 0.0
      %v729 = vmax.f32 %v663, 0.0
      %v730 = vmax.f32 %v665, 0.0
      %v731 = vpack.c.bf16 %v667, %v667
      %v732 = vpack.c.bf16 %v668, %v668
      %v733 = vpack.c.bf16 %v669, %v669
      %v734 = vpack.c.bf16 %v670, %v670
      %v735 = vpack.c.bf16 %v671, %v671
      %v736 = vpack.c.bf16 %v672, %v672
      %v737 = vpack.c.bf16 %v673, %v673
      %v738 = vpack.c.bf16 %v674, %v674
      %v739 = vpack.c.bf16 %v675, %v675
      %v740 = vpack.c.bf16 %v676, %v676
      %v741 = vpack.c.bf16 %v677, %v677
      %v742 = vpack.c.bf16 %v678, %v678
      %v743 = vpack.c.bf16 %v679, %v679
      %v744 = vpack.c.bf16 %v680, %v680
      %v745 = vpack.c.bf16 %v681, %v681
      %v746 = vpack.c.bf16 %v682, %v682
      %v747 = vpack.c.bf16 %v683, %v683
      %v748 = vpack.c.bf16 %v684, %v684
      %v749 = vpack.c.bf16 %v685, %v685
      %v750 = vpack.c.bf16 %v686, %v686
      %v751 = vpack.c.bf16 %v687, %v687
      %v752 = vpack.c.bf16 %v688, %v688
      %v753 = vpack.c.bf16 %v689, %v689
      %v754 = vpack.c.bf16 %v690, %v690
      %v755 = vpack.c.bf16 %v691, %v691
      %v756 = vpack.c.bf16 %v692, %v692
      %v757 = vpack.c.bf16 %v693, %v693
      %v758 = vpack.c.bf16 %v694, %v694
      %v759 = vpack.c.bf16 %v695, %v695
      %v760 = vpack.c.bf16 %v696, %v696
      %v761 = vpack.c.bf16 %v697, %v697
      %v762 = vpack.c.bf16 %v698, %v698
      %v763 = vpack.c.bf16 %v699, %v699
      %v764 = vpack.c.bf16 %v700, %v700
      %v765 = vpack.c.bf16 %v701, %v701
      %v766 = vpack.c.bf16 %v702, %v702
      %v767 = vpack.c.bf16 %v703, %v703
      %v768 = vpack.c.bf16 %v704, %v704
      %v769 = vpack.c.bf16 %v705, %v705
      %v770 = vpack.c.bf16 %v706, %v706
      %v771 = vpack.c.bf16 %v707, %v707
      %v772 = vpack.c.bf16 %v708, %v708
      %v773 = vpack.c.bf16 %v709, %v709
      %v774 = vpack.c.bf16 %v710, %v710
      %v775 = vpack.c.bf16 %v711, %v711
      %v776 = vpack.c.bf16 %v712, %v712
      %v777 = vpack.c.bf16 %v713, %v713
      %v778 = vpack.c.bf16 %v714, %v714
      %v779 = vpack.c.bf16 %v715, %v715
      %v780 = vpack.c.bf16 %v716, %v716
      %v781 = vpack.c.bf16 %v717, %v717
      %v782 = vpack.c.bf16 %v718, %v718
      %v783 = vpack.c.bf16 %v719, %v719
      %v784 = vpack.c.bf16 %v720, %v720
      %v785 = vpack.c.bf16 %v721, %v721
      %v786 = vpack.c.bf16 %v722, %v722
      %v787 = vpack.c.bf16 %v723, %v723
      %v788 = vpack.c.bf16 %v724, %v724
      %v789 = vpack.c.bf16 %v725, %v725
      %v790 = vpack.c.bf16 %v726, %v726
      %v791 = vpack.c.bf16 %v727, %v727
      %v792 = vpack.c.bf16 %v728, %v728
      %v793 = vpack.c.bf16 %v729, %v729
      %v794 = vpack.c.bf16 %v730, %v730
      %795 = vst [vmem:[%s172] sm:$0xf] %v731
      %796 = vst [vmem:[%s172 + $0x4] sm:$0xf] %v732
      %797 = vst [vmem:[%s172 + $0x8] sm:$0xf] %v733
      %798 = vst [vmem:[%s172 + $0xc] sm:$0xf] %v734
      %799 = vst [vmem:[%s172 + $0x10] sm:$0xf] %v735
      %800 = vst [vmem:[%s172 + $0x14] sm:$0xf] %v736
      %801 = vst [vmem:[%s172 + $0x18] sm:$0xf] %v737
      %802 = vst [vmem:[%s172 + $0x1c] sm:$0xf] %v738
      %803 = vst [vmem:[%s172 + $0x20] sm:$0xf] %v739
      %804 = vst [vmem:[%s172 + $0x24] sm:$0xf] %v740
      %805 = vst [vmem:[%s172 + $0x28] sm:$0xf] %v741
      %806 = vst [vmem:[%s172 + $0x2c] sm:$0xf] %v742
      %807 = vst [vmem:[%s172 + $0x30] sm:$0xf] %v743
      %808 = vst [vmem:[%s172 + $0x34] sm:$0xf] %v744
      %809 = vst [vmem:[%s172 + $0x38] sm:$0xf] %v745
      %810 = vst [vmem:[%s172 + $0x3c] sm:$0xf] %v746
      %811 = vst [vmem:[%s172 + $0x40] sm:$0xf] %v747
      %812 = vst [vmem:[%s172 + $0x44] sm:$0xf] %v748
      %813 = vst [vmem:[%s172 + $0x48] sm:$0xf] %v749
      %814 = vst [vmem:[%s172 + $0x4c] sm:$0xf] %v750
      %815 = vst [vmem:[%s172 + $0x50] sm:$0xf] %v751
      %816 = vst [vmem:[%s172 + $0x54] sm:$0xf] %v752
      %817 = vst [vmem:[%s172 + $0x58] sm:$0xf] %v753
      %818 = vst [vmem:[%s172 + $0x5c] sm:$0xf] %v754
      %819 = vst [vmem:[%s172 + $0x60] sm:$0xf] %v755
      %820 = vst [vmem:[%s172 + $0x64] sm:$0xf] %v756
      %821 = vst [vmem:[%s172 + $0x68] sm:$0xf] %v757
      %822 = vst [vmem:[%s172 + $0x6c] sm:$0xf] %v758
      %823 = vst [vmem:[%s172 + $0x70] sm:$0xf] %v759
      %824 = vst [vmem:[%s172 + $0x74] sm:$0xf] %v760
      %825 = vst [vmem:[%s172 + $0x78] sm:$0xf] %v761
      %826 = vst [vmem:[%s172 + $0x7c] sm:$0xf] %v762
      %827 = vst [vmem:[%s172 + $0x80] sm:$0xf] %v763
      %828 = vst [vmem:[%s172 + $0x84] sm:$0xf] %v764
      %829 = vst [vmem:[%s172 + $0x88] sm:$0xf] %v765
      %830 = vst [vmem:[%s172 + $0x8c] sm:$0xf] %v766
      %831 = vst [vmem:[%s172 + $0x90] sm:$0xf] %v767
      %832 = vst [vmem:[%s172 + $0x94] sm:$0xf] %v768
      %833 = vst [vmem:[%s172 + $0x98] sm:$0xf] %v769
      %834 = vst [vmem:[%s172 + $0x9c] sm:$0xf] %v770
      %835 = vst [vmem:[%s172 + $0xa0] sm:$0xf] %v771
      %836 = vst [vmem:[%s172 + $0xa4] sm:$0xf] %v772
      %837 = vst [vmem:[%s172 + $0xa8] sm:$0xf] %v773
      %838 = vst [vmem:[%s172 + $0xac] sm:$0xf] %v774
      %839 = vst [vmem:[%s172 + $0xb0] sm:$0xf] %v775
      %840 = vst [vmem:[%s172 + $0xb4] sm:$0xf] %v776
      %841 = vst [vmem:[%s172 + $0xb8] sm:$0xf] %v777
      %842 = vst [vmem:[%s172 + $0xbc] sm:$0xf] %v778
      %843 = vst [vmem:[%s172 + $0xc0] sm:$0xf] %v779
      %844 = vst [vmem:[%s172 + $0xc4] sm:$0xf] %v780
      %845 = vst [vmem:[%s172 + $0xc8] sm:$0xf] %v781
      %846 = vst [vmem:[%s172 + $0xcc] sm:$0xf] %v782
      %847 = vst [vmem:[%s172 + $0xd0] sm:$0xf] %v783
      %848 = vst [vmem:[%s172 + $0xd4] sm:$0xf] %v784
      %849 = vst [vmem:[%s172 + $0xd8] sm:$0xf] %v785
      %850 = vst [vmem:[%s172 + $0xdc] sm:$0xf] %v786
      %851 = vst [vmem:[%s172 + $0xe0] sm:$0xf] %v787
      %852 = vst [vmem:[%s172 + $0xe4] sm:$0xf] %v788
      %853 = vst [vmem:[%s172 + $0xe8] sm:$0xf] %v789
      %854 = vst [vmem:[%s172 + $0xec] sm:$0xf] %v790
      %855 = vst [vmem:[%s172 + $0xf0] sm:$0xf] %v791
      %856 = vst [vmem:[%s172 + $0xf4] sm:$0xf] %v792
      %857 = vst [vmem:[%s172 + $0xf8] sm:$0xf] %v793
      %858 = vst [vmem:[%s172 + $0xfc] sm:$0xf] %v794
      %s859 = smul.u32 64, %s14
      %p860 = scmp.lt.s32.totalorder %s859, 255
      %s861 = scalar_select %p860, %s859, 255
      %s862 = smul.addr %s861, 4
      %s863 = scalar_lea.vmem %s3, %s862
      // Predicated region
      $region33: #{forward.9} parent=31 // pred_check
        %p864 = pneg %p100
      $region34: #{forward.9} parent=31 // pred_check_branch
        %866 = sbr.rel (%p864) target = $region36
      $region35: #{forward.9} parent=31 // pred_region
        %s867 = smul.u32 64, %s14
      $region36: #{forward.9} parent=31 // pred_fallthru
        _
    $region32: #{forward.9} parent=5 // pred_fallthru
      _
    %p868 = scmp.le.s32.totalorder 2, %s9
    // Predicated region
    $region37: #{forward.9} parent=5 // pred_check
      %p869 = pneg %p868
    $region38: #{forward.9} parent=5 // pred_check_branch
      %871 = sbr.rel (%p869) target = $region40
    $region39: #{forward.9} parent=5 // pred_region
      %s872 = ssub.s32 %s9, 2
      // Predicated region
      $region41: #{forward.9} parent=39 // pred_check
        %p873 = pneg %p106
      $region42: #{forward.9} parent=39 // pred_check_branch
        %875 = sbr.rel (%p873) target = $region44
      $region43: #{forward.9} parent=39 // pred_region
        %s876 = smul.u32 64, %s15
        %p877 = scmp.lt.s32.totalorder %s876, 255
        %s878 = scalar_select %p877, %s876, 255
        %s879 = smul.addr %s878, 4
        %s880 = scalar_lea.vmem %s3, %s879
      $region44: #{forward.9} parent=39 // pred_fallthru
        _
    $region40: #{forward.9} parent=5 // pred_fallthru
      _
  $region6: #{forward.9} parent=0 // loop_footer
    %s13 = sadd.s32 1, %s9
  $region7: #{forward.9} parent=0 // loop_footer_branch
    %8 = sbr.rel target = $region3
  $region8: #{forward.9} parent=0 // loop_exit
    _

// kernel: forward.10
$region0: #{forward.10}
  #allocation0 [shape = 'u32[]', space=smem, size = 0x4, offset = 0x4, fixed_abs, tag = 'smem constant byte address 0x4 - core index']
  #allocation1 [shape = 'u32[72,128]{1,0:T(1,128)}', space=vmem, size = 0x9000, scoped, tag = 'internal scratch']
  %s0 = inlined_call_operand.vmem [shape: bf16[2048,256], index: 0, kind: input, shape index: {}]
  %s1 = inlined_call_operand.vmem [shape: bf16[256,128], index: 1, kind: input, shape index: {}]
  %s2 = inlined_call_operand.vmem [shape: f32[1,128], index: 2, kind: input, shape index: {}]
  %s3 = inlined_call_operand.vmem [shape: bf16[2048,128], index: 3, kind: output, shape index: {}]
  %s4 = sld [smem:[#allocation0]]
  $region45: #{forward.10} parent=0
    _
  %s6 = ssub.s32 1, %s4
  %s7 = scalar_select 0, %s6, %s4
  loop: start=0, step=1, limit=6
  $region2: #{forward.10} parent=0 // loop_pre_header
    _
  $region3: #{forward.10} parent=0 // loop_header
    %s9 = sphi 0, %s13
    %p10 = scmp.ge.s32.totalorder %s9, 6
    %s19 = sphi 0, %s21
    %s22 = sphi 0, %s19
    %s23 = sphi 0, %s22
    %s39 = sphi 0, %s23
    %s43 = sphi 0, %s43
    %s45 = sphi 0, %s43
    %s46 = sphi 0, %s45
    %s60 = sphi 0, %s46
    %s64 = sphi 0, %s64
    %s66 = sphi 0, %s64
    %s67 = sphi 0, %s66
    %s81 = sphi 0, %s67
    %s87 = sphi 0, %s89
    %s90 = sphi 0, %s87
    %s91 = sphi 0, %s90
    %s107 = sphi 0, %s91
  $region4: #{forward.10} parent=0 // loop_header_branch
    %12 = sbr.rel (%p10) target = $region8
  $region5: #{forward.10} parent=0 // loop_body
    %s14 = ssub.s32 %s9, 1
    %s15 = ssub.s32 %s9, 2
    %s16 = sadd.s32 %s9, 1
    %s17 = ssub.s32 %s9, %s16
    %p18 = scmp.eq.s32.totalorder %s17, 0
    %s20 = sadd.s32 %s19, 1
    %s21 = scalar_select %p18, %s19, %s20
    %p24 = pneg %p18
    %p25 = scmp.eq.s32.totalorder %s9, 3
    %p26 = por %p24, %p25
    %p27 = scmp.ne.s32.totalorder %s19, %s22
    %p28 = scmp.eq.s32.totalorder %s9, 0
    %p29 = por %p27, %p28
    %p30 = scmp.ne.s32.totalorder %s19, %s22
    %p31 = scmp.eq.s32.totalorder %s14, 3
    %p32 = por %p30, %p31
    %p33 = scmp.ne.s32.totalorder %s22, %s23
    %p34 = scmp.eq.s32.totalorder %s14, 0
    %p35 = por %p33, %p34
    %p36 = scmp.ne.s32.totalorder %s22, %s23
    %p37 = scmp.eq.s32.totalorder %s15, 3
    %p38 = por %p36, %p37
    %p40 = scmp.ne.s32.totalorder %s23, %s39
    %p41 = scmp.eq.s32.totalorder %s15, 0
    %p42 = por %p40, %p41
    %s44 = sadd.s32 %s43, 1
    %p47 = scmp.eq.s32.totalorder %s9, 3
    %p48 = scmp.ne.s32.totalorder %s43, %s45
    %p49 = scmp.eq.s32.totalorder %s9, 0
    %p50 = por %p48, %p49
    %p51 = scmp.ne.s32.totalorder %s43, %s45
    %p52 = scmp.eq.s32.totalorder %s14, 3
    %p53 = por %p51, %p52
    %p54 = scmp.ne.s32.totalorder %s45, %s46
    %p55 = scmp.eq.s32.totalorder %s14, 0
    %p56 = por %p54, %p55
    %p57 = scmp.ne.s32.totalorder %s45, %s46
    %p58 = scmp.eq.s32.totalorder %s15, 3
    %p59 = por %p57, %p58
    %p61 = scmp.ne.s32.totalorder %s46, %s60
    %p62 = scmp.eq.s32.totalorder %s15, 0
    %p63 = por %p61, %p62
    %s65 = sadd.s32 %s64, 1
    %p68 = scmp.eq.s32.totalorder %s9, 3
    %p69 = scmp.ne.s32.totalorder %s64, %s66
    %p70 = scmp.eq.s32.totalorder %s9, 0
    %p71 = por %p69, %p70
    %p72 = scmp.ne.s32.totalorder %s64, %s66
    %p73 = scmp.eq.s32.totalorder %s14, 3
    %p74 = por %p72, %p73
    %p75 = scmp.ne.s32.totalorder %s66, %s67
    %p76 = scmp.eq.s32.totalorder %s14, 0
    %p77 = por %p75, %p76
    %p78 = scmp.ne.s32.totalorder %s66, %s67
    %p79 = scmp.eq.s32.totalorder %s15, 3
    %p80 = por %p78, %p79
    %p82 = scmp.ne.s32.totalorder %s67, %s81
    %p83 = scmp.eq.s32.totalorder %s15, 0
    %p84 = por %p82, %p83
    %s85 = ssub.s32 %s9, %s16
    %p86 = scmp.eq.s32.totalorder %s85, 0
    %s88 = sadd.s32 %s87, 1
    %s89 = scalar_select %p86, %s87, %s88
    %p92 = pneg %p86
    %p93 = scmp.eq.s32.totalorder %s9, 3
    %p94 = por %p92, %p93
    %p95 = scmp.ne.s32.totalorder %s87, %s90
    %p96 = scmp.eq.s32.totalorder %s9, 0
    %p97 = por %p95, %p96
    %p98 = scmp.ne.s32.totalorder %s87, %s90
    %p99 = scmp.eq.s32.totalorder %s14, 3
    %p100 = por %p98, %p99
    %p101 = scmp.ne.s32.totalorder %s90, %s91
    %p102 = scmp.eq.s32.totalorder %s14, 0
    %p103 = por %p101, %p102
    %p104 = scmp.ne.s32.totalorder %s90, %s91
    %p105 = scmp.eq.s32.totalorder %s15, 3
    %p106 = por %p104, %p105
    %p108 = scmp.ne.s32.totalorder %s91, %s107
    %p109 = scmp.eq.s32.totalorder %s15, 0
    %p110 = por %p108, %p109
    %p111 = scmp.le.s32.totalorder 1, %s9
    %p112 = scmp.lt.s32.totalorder %s9, 5
    %p113 = pnand %p111, %p112
    %p114 = pneg %p113
    // Predicated region
    $region9: #{forward.10} parent=5 // pred_check
      _
    $region10: #{forward.10} parent=5 // pred_check_branch
      %116 = sbr.rel (%p113) target = $region12
    $region11: #{forward.10} parent=5 // pred_region
      %s117 = ssub.s32 %s9, 1
      // Predicated region
      $region13: #{forward.10} parent=11 // pred_check
        %p118 = pneg %p56
      $region14: #{forward.10} parent=11 // pred_check_branch
        %120 = sbr.rel (%p118) target = $region16
      $region15: #{forward.10} parent=11 // pred_region
        _
      $region16: #{forward.10} parent=11 // pred_fallthru
        _
      // Predicated region
      $region17: #{forward.10} parent=11 // pred_check
        %p121 = pneg %p77
      $region18: #{forward.10} parent=11 // pred_check_branch
        %123 = sbr.rel (%p121) target = $region20
      $region19: #{forward.10} parent=11 // pred_region
        _
      $region20: #{forward.10} parent=11 // pred_fallthru
        _
    $region12: #{forward.10} parent=5 // pred_fallthru
      _
    %p124 = scmp.lt.s32.totalorder %s9, 4
    // Predicated region
    $region21: #{forward.10} parent=5 // pred_check
      %p125 = pneg %p124
    $region22: #{forward.10} parent=5 // pred_check_branch
      %127 = sbr.rel (%p125) target = $region24
    $region23: #{forward.10} parent=5 // pred_region
      // Predicated region
      $region25: #{forward.10} parent=23 // pred_check
        %p128 = pneg %p29
      $region26: #{forward.10} parent=23 // pred_check_branch
        %130 = sbr.rel (%p128) target = $region28
      $region27: #{forward.10} parent=23 // pred_region
        %s131 = smul.u32 64, %s9
        %p132 = scmp.lt.s32.totalorder %s131, 255
        %s133 = scalar_select %p132, %s131, 255
        %s134 = smul.addr %s133, 2
        %s135 = smul.addr %s134, 4
        %s136 = scalar_lea.vmem %s0, %s135
        %s137 = smul.u32 64, %s9
      $region28: #{forward.10} parent=23 // pred_fallthru
        _
    $region24: #{forward.10} parent=5 // pred_fallthru
      _
    %p138 = scmp.le.s32.totalorder 1, %s9
    %p139 = scmp.lt.s32.totalorder %s9, 5
    %p140 = pnand %p138, %p139
    %p141 = pneg %p140
    // Predicated region
    $region29: #{forward.10} parent=5 // pred_check
      _
    $region30: #{forward.10} parent=5 // pred_check_branch
      %143 = sbr.rel (%p140) target = $region32
    $region31: #{forward.10} parent=5 // pred_region
      %s144 = ssub.s32 %s9, 1
      %s145 = smul.u32 64, %s14
      %p146 = scmp.lt.s32.totalorder %s145, 255
      %s147 = scalar_select %p146, %s145, 255
      %s148 = smul.addr %s147, 2
      %s149 = smul.addr %s148, 4
      %s150 = scalar_lea.vmem %s0, %s149
      %p151 = pneg %p35
      %p152 = pneg %p32
      %p153 = pneg %p56
      %p154 = pneg %p53
      %p155 = pneg %p77
      %p156 = pneg %p74
      %p157 = pneg %p103
      %p158 = pneg %p100
      %s159 = smul.u32 64, %s14
      %p160 = scmp.lt.s32.totalorder %s159, 255
      %s161 = scalar_select %p160, %s159, 255
      %s162 = smul.addr %s161, 4
      %s163 = scalar_lea.vmem %s3, %s162
      %s164 = smul.u32 64, %s14
      %p165 = scmp.lt.s32.totalorder %s164, 255
      %s166 = scalar_select %p165, %s164, 255
      %s167 = smul.addr %s166, 2
      %s168 = smul.addr %s167, 4
      %s169 = scalar_lea.vmem %s0, %s168
      %s170 = smul.u32 64, %s14
      %s171 = smul.u32 64, %s14
      %p172 = scmp.lt.s32.totalorder %s171, 255
      %s173 = scalar_select %p172, %s171, 255
      %s174 = smul.addr %s173, 4
      %s175 = scalar_lea.vmem %s3, %s174
      %s176 = smul.u32 64, %s14
      %v177 = vld [vmem:[%s169] sm:$0xff]
      %v178 = vld [vmem:[%s169 + $0x8] sm:$0xff]
      %v179 = vld [vmem:[%s169 + $0x10] sm:$0xff]
      %v180 = vld [vmem:[%s169 + $0x18] sm:$0xff]
      %v181 = vld [vmem:[%s169 + $0x20] sm:$0xff]
      %v182 = vld [vmem:[%s169 + $0x28] sm:$0xff]
      %v183 = vld [vmem:[%s169 + $0x30] sm:$0xff]
      %v184 = vld [vmem:[%s169 + $0x38] sm:$0xff]
      %v185 = vld [vmem:[%s169 + $0x40] sm:$0xff]
      %v186 = vld [vmem:[%s169 + $0x48] sm:$0xff]
      %v187 = vld [vmem:[%s169 + $0x50] sm:$0xff]
      %v188 = vld [vmem:[%s169 + $0x58] sm:$0xff]
      %v189 = vld [vmem:[%s169 + $0x60] sm:$0xff]
      %v190 = vld [vmem:[%s169 + $0x68] sm:$0xff]
      %v191 = vld [vmem:[%s169 + $0x70] sm:$0xff]
      %v192 = vld [vmem:[%s169 + $0x78] sm:$0xff]
      %v193 = vld [vmem:[%s169 + $0x80] sm:$0xff]
      %v194 = vld [vmem:[%s169 + $0x88] sm:$0xff]
      %v195 = vld [vmem:[%s169 + $0x90] sm:$0xff]
      %v196 = vld [vmem:[%s169 + $0x98] sm:$0xff]
      %v197 = vld [vmem:[%s169 + $0xa0] sm:$0xff]
      %v198 = vld [vmem:[%s169 + $0xa8] sm:$0xff]
      %v199 = vld [vmem:[%s169 + $0xb0] sm:$0xff]
      %v200 = vld [vmem:[%s169 + $0xb8] sm:$0xff]
      %v201 = vld [vmem:[%s169 + $0xc0] sm:$0xff]
      %v202 = vld [vmem:[%s169 + $0xc8] sm:$0xff]
      %v203 = vld [vmem:[%s169 + $0xd0] sm:$0xff]
      %v204 = vld [vmem:[%s169 + $0xd8] sm:$0xff]
      %v205 = vld [vmem:[%s169 + $0xe0] sm:$0xff]
      %v206 = vld [vmem:[%s169 + $0xe8] sm:$0xff]
      %v207 = vld [vmem:[%s169 + $0xf0] sm:$0xff]
      %v208 = vld [vmem:[%s169 + $0xf8] sm:$0xff]
      %v209 = vld [vmem:[%s169 + $0x100] sm:$0xff]
      %v210 = vld [vmem:[%s169 + $0x108] sm:$0xff]
      %v211 = vld [vmem:[%s169 + $0x110] sm:$0xff]
      %v212 = vld [vmem:[%s169 + $0x118] sm:$0xff]
      %v213 = vld [vmem:[%s169 + $0x120] sm:$0xff]
      %v214 = vld [vmem:[%s169 + $0x128] sm:$0xff]
      %v215 = vld [vmem:[%s169 + $0x130] sm:$0xff]
      %v216 = vld [vmem:[%s169 + $0x138] sm:$0xff]
      %v217 = vld [vmem:[%s169 + $0x140] sm:$0xff]
      %v218 = vld [vmem:[%s169 + $0x148] sm:$0xff]
      %v219 = vld [vmem:[%s169 + $0x150] sm:$0xff]
      %v220 = vld [vmem:[%s169 + $0x158] sm:$0xff]
      %v221 = vld [vmem:[%s169 + $0x160] sm:$0xff]
      %v222 = vld [vmem:[%s169 + $0x168] sm:$0xff]
      %v223 = vld [vmem:[%s169 + $0x170] sm:$0xff]
      %v224 = vld [vmem:[%s169 + $0x178] sm:$0xff]
      %v225 = vld [vmem:[%s169 + $0x180] sm:$0xff]
      %v226 = vld [vmem:[%s169 + $0x188] sm:$0xff]
      %v227 = vld [vmem:[%s169 + $0x190] sm:$0xff]
      %v228 = vld [vmem:[%s169 + $0x198] sm:$0xff]
      %v229 = vld [vmem:[%s169 + $0x1a0] sm:$0xff]
      %v230 = vld [vmem:[%s169 + $0x1a8] sm:$0xff]
      %v231 = vld [vmem:[%s169 + $0x1b0] sm:$0xff]
      %v232 = vld [vmem:[%s169 + $0x1b8] sm:$0xff]
      %v233 = vld [vmem:[%s169 + $0x1c0] sm:$0xff]
      %v234 = vld [vmem:[%s169 + $0x1c8] sm:$0xff]
      %v235 = vld [vmem:[%s169 + $0x1d0] sm:$0xff]
      %v236 = vld [vmem:[%s169 + $0x1d8] sm:$0xff]
      %v237 = vld [vmem:[%s169 + $0x1e0] sm:$0xff]
      %v238 = vld [vmem:[%s169 + $0x1e8] sm:$0xff]
      %v239 = vld [vmem:[%s169 + $0x1f0] sm:$0xff]
      %v240 = vld [vmem:[%s169 + $0x1f8] sm:$0xff]
      %v241 = vld [vmem:[%s1] sm:$0xf]
      %v242 = vld [vmem:[%s1 + $0x4] sm:$0xf]
      %v243 = vld [vmem:[%s1 + $0x8] sm:$0xf]
      %v244 = vld [vmem:[%s1 + $0xc] sm:$0xf]
      %v245 = vld [vmem:[%s1 + $0x10] sm:$0xf]
      %v246 = vld [vmem:[%s1 + $0x14] sm:$0xf]
      %v247 = vld [vmem:[%s1 + $0x18] sm:$0xf]
      %v248 = vld [vmem:[%s1 + $0x1c] sm:$0xf]
      %v249 = vld [vmem:[%s1 + $0x20] sm:$0xf]
      %v250 = vld [vmem:[%s1 + $0x24] sm:$0xf]
      %v251 = vld [vmem:[%s1 + $0x28] sm:$0xf]
      %v252 = vld [vmem:[%s1 + $0x2c] sm:$0xf]
      %v253 = vld [vmem:[%s1 + $0x30] sm:$0xf]
      %v254 = vld [vmem:[%s1 + $0x34] sm:$0xf]
      %v255 = vld [vmem:[%s1 + $0x38] sm:$0xf]
      %v256 = vld [vmem:[%s1 + $0x3c] sm:$0xf]
      %v257 = vld [vmem:[%s1 + $0x40] sm:$0xf]
      %v258 = vld [vmem:[%s1 + $0x44] sm:$0xf]
      %v259 = vld [vmem:[%s1 + $0x48] sm:$0xf]
      %v260 = vld [vmem:[%s1 + $0x4c] sm:$0xf]
      %v261 = vld [vmem:[%s1 + $0x50] sm:$0xf]
      %v262 = vld [vmem:[%s1 + $0x54] sm:$0xf]
      %v263 = vld [vmem:[%s1 + $0x58] sm:$0xf]
      %v264 = vld [vmem:[%s1 + $0x5c] sm:$0xf]
      %v265 = vld [vmem:[%s1 + $0x60] sm:$0xf]
      %v266 = vld [vmem:[%s1 + $0x64] sm:$0xf]
      %v267 = vld [vmem:[%s1 + $0x68] sm:$0xf]
      %v268 = vld [vmem:[%s1 + $0x6c] sm:$0xf]
      %v269 = vld [vmem:[%s1 + $0x70] sm:$0xf]
      %v270 = vld [vmem:[%s1 + $0x74] sm:$0xf]
      %v271 = vld [vmem:[%s1 + $0x78] sm:$0xf]
      %v272 = vld [vmem:[%s1 + $0x7c] sm:$0xf]
      %v273 = vld [vmem:[%s2] sm:$0x1]
      %v275 = vperm.slane %v273, 0
      %v341 = vunpack.c.l.b16 %v177
      %v342 = vunpack.c.h.b16 %v177
      %v343 = vunpack.c.l.b16 %v178
      %v344 = vunpack.c.h.b16 %v178
      %v345 = vunpack.c.l.b16 %v179
      %v346 = vunpack.c.h.b16 %v179
      %v347 = vunpack.c.l.b16 %v180
      %v348 = vunpack.c.h.b16 %v180
      %v349 = vunpack.c.l.b16 %v181
      %v350 = vunpack.c.h.b16 %v181
      %v351 = vunpack.c.l.b16 %v182
      %v352 = vunpack.c.h.b16 %v182
      %v353 = vunpack.c.l.b16 %v183
      %v354 = vunpack.c.h.b16 %v183
      %v355 = vunpack.c.l.b16 %v184
      %v356 = vunpack.c.h.b16 %v184
      %v357 = vunpack.c.l.b16 %v185
      %v358 = vunpack.c.h.b16 %v185
      %v359 = vunpack.c.l.b16 %v186
      %v360 = vunpack.c.h.b16 %v186
      %v361 = vunpack.c.l.b16 %v187
      %v362 = vunpack.c.h.b16 %v187
      %v363 = vunpack.c.l.b16 %v188
      %v364 = vunpack.c.h.b16 %v188
      %v365 = vunpack.c.l.b16 %v189
      %v366 = vunpack.c.h.b16 %v189
      %v367 = vunpack.c.l.b16 %v190
      %v368 = vunpack.c.h.b16 %v190
      %v369 = vunpack.c.l.b16 %v191
      %v370 = vunpack.c.h.b16 %v191
      %v371 = vunpack.c.l.b16 %v192
      %v372 = vunpack.c.h.b16 %v192
      %v373 = vunpack.c.l.b16 %v193
      %v374 = vunpack.c.h.b16 %v193
      %v375 = vunpack.c.l.b16 %v194
      %v376 = vunpack.c.h.b16 %v194
      %v377 = vunpack.c.l.b16 %v195
      %v378 = vunpack.c.h.b16 %v195
      %v379 = vunpack.c.l.b16 %v196
      %v380 = vunpack.c.h.b16 %v196
      %v381 = vunpack.c.l.b16 %v197
      %v382 = vunpack.c.h.b16 %v197
      %v383 = vunpack.c.l.b16 %v198
      %v384 = vunpack.c.h.b16 %v198
      %v385 = vunpack.c.l.b16 %v199
      %v386 = vunpack.c.h.b16 %v199
      %v387 = vunpack.c.l.b16 %v200
      %v388 = vunpack.c.h.b16 %v200
      %v389 = vunpack.c.l.b16 %v201
      %v390 = vunpack.c.h.b16 %v201
      %v391 = vunpack.c.l.b16 %v202
      %v392 = vunpack.c.h.b16 %v202
      %v393 = vunpack.c.l.b16 %v203
      %v394 = vunpack.c.h.b16 %v203
      %v395 = vunpack.c.l.b16 %v204
      %v396 = vunpack.c.h.b16 %v204
      %v397 = vunpack.c.l.b16 %v205
      %v398 = vunpack.c.h.b16 %v205
      %v399 = vunpack.c.l.b16 %v206
      %v400 = vunpack.c.h.b16 %v206
      %v401 = vunpack.c.l.b16 %v207
      %v402 = vunpack.c.h.b16 %v207
      %v403 = vunpack.c.l.b16 %v208
      %v404 = vunpack.c.h.b16 %v208
      %v405 = vunpack.c.l.b16 %v209
      %v406 = vunpack.c.h.b16 %v209
      %v407 = vunpack.c.l.b16 %v210
      %v408 = vunpack.c.h.b16 %v210
      %v409 = vunpack.c.l.b16 %v211
      %v410 = vunpack.c.h.b16 %v211
      %v411 = vunpack.c.l.b16 %v212
      %v412 = vunpack.c.h.b16 %v212
      %v413 = vunpack.c.l.b16 %v213
      %v414 = vunpack.c.h.b16 %v213
      %v415 = vunpack.c.l.b16 %v214
      %v416 = vunpack.c.h.b16 %v214
      %v417 = vunpack.c.l.b16 %v215
      %v418 = vunpack.c.h.b16 %v215
      %v419 = vunpack.c.l.b16 %v216
      %v420 = vunpack.c.h.b16 %v216
      %v421 = vunpack.c.l.b16 %v217
      %v422 = vunpack.c.h.b16 %v217
      %v423 = vunpack.c.l.b16 %v218
      %v424 = vunpack.c.h.b16 %v218
      %v425 = vunpack.c.l.b16 %v219
      %v426 = vunpack.c.h.b16 %v219
      %v427 = vunpack.c.l.b16 %v220
      %v428 = vunpack.c.h.b16 %v220
      %v429 = vunpack.c.l.b16 %v221
      %v430 = vunpack.c.h.b16 %v221
      %v431 = vunpack.c.l.b16 %v222
      %v432 = vunpack.c.h.b16 %v222
      %v433 = vunpack.c.l.b16 %v223
      %v434 = vunpack.c.h.b16 %v223
      %v435 = vunpack.c.l.b16 %v224
      %v436 = vunpack.c.h.b16 %v224
      %v437 = vunpack.c.l.b16 %v225
      %v438 = vunpack.c.h.b16 %v225
      %v439 = vunpack.c.l.b16 %v226
      %v440 = vunpack.c.h.b16 %v226
      %v441 = vunpack.c.l.b16 %v227
      %v442 = vunpack.c.h.b16 %v227
      %v443 = vunpack.c.l.b16 %v228
      %v444 = vunpack.c.h.b16 %v228
      %v445 = vunpack.c.l.b16 %v229
      %v446 = vunpack.c.h.b16 %v229
      %v447 = vunpack.c.l.b16 %v230
      %v448 = vunpack.c.h.b16 %v230
      %v449 = vunpack.c.l.b16 %v231
      %v450 = vunpack.c.h.b16 %v231
      %v451 = vunpack.c.l.b16 %v232
      %v452 = vunpack.c.h.b16 %v232
      %v453 = vunpack.c.l.b16 %v233
      %v454 = vunpack.c.h.b16 %v233
      %v455 = vunpack.c.l.b16 %v234
      %v456 = vunpack.c.h.b16 %v234
      %v457 = vunpack.c.l.b16 %v235
      %v458 = vunpack.c.h.b16 %v235
      %v459 = vunpack.c.l.b16 %v236
      %v460 = vunpack.c.h.b16 %v236
      %v461 = vunpack.c.l.b16 %v237
      %v462 = vunpack.c.h.b16 %v237
      %v463 = vunpack.c.l.b16 %v238
      %v464 = vunpack.c.h.b16 %v238
      %v465 = vunpack.c.l.b16 %v239
      %v466 = vunpack.c.h.b16 %v239
      %v467 = vunpack.c.l.b16 %v240
      %v468 = vunpack.c.h.b16 %v240
      %v469 = vpack.c.b16 %v343, %v341
      %v470 = vpack.c.b16 %v344, %v342
      %v471 = vpack.c.b16 %v347, %v345
      %v472 = vpack.c.b16 %v348, %v346
      %v473 = vpack.c.b16 %v351, %v349
      %v474 = vpack.c.b16 %v352, %v350
      %v475 = vpack.c.b16 %v355, %v353
      %v476 = vpack.c.b16 %v356, %v354
      %v477 = vpack.c.b16 %v359, %v357
      %v478 = vpack.c.b16 %v360, %v358
      %v479 = vpack.c.b16 %v363, %v361
      %v480 = vpack.c.b16 %v364, %v362
      %v481 = vpack.c.b16 %v367, %v365
      %v482 = vpack.c.b16 %v368, %v366
      %v483 = vpack.c.b16 %v371, %v369
      %v484 = vpack.c.b16 %v372, %v370
      %v485 = vpack.c.b16 %v375, %v373
      %v486 = vpack.c.b16 %v376, %v374
      %v487 = vpack.c.b16 %v379, %v377
      %v488 = vpack.c.b16 %v380, %v378
      %v489 = vpack.c.b16 %v383, %v381
      %v490 = vpack.c.b16 %v384, %v382
      %v491 = vpack.c.b16 %v387, %v385
      %v492 = vpack.c.b16 %v388, %v386
      %v493 = vpack.c.b16 %v391, %v389
      %v494 = vpack.c.b16 %v392, %v390
      %v495 = vpack.c.b16 %v395, %v393
      %v496 = vpack.c.b16 %v396, %v394
      %v497 = vpack.c.b16 %v399, %v397
      %v498 = vpack.c.b16 %v400, %v398
      %v499 = vpack.c.b16 %v403, %v401
      %v500 = vpack.c.b16 %v404, %v402
      %v501 = vpack.c.b16 %v407, %v405
      %v502 = vpack.c.b16 %v408, %v406
      %v503 = vpack.c.b16 %v411, %v409
      %v504 = vpack.c.b16 %v412, %v410
      %v505 = vpack.c.b16 %v415, %v413
      %v506 = vpack.c.b16 %v416, %v414
      %v507 = vpack.c.b16 %v419, %v417
      %v508 = vpack.c.b16 %v420, %v418
      %v509 = vpack.c.b16 %v423, %v421
      %v510 = vpack.c.b16 %v424, %v422
      %v511 = vpack.c.b16 %v427, %v425
      %v512 = vpack.c.b16 %v428, %v426
      %v513 = vpack.c.b16 %v431, %v429
      %v514 = vpack.c.b16 %v432, %v430
      %v515 = vpack.c.b16 %v435, %v433
      %v516 = vpack.c.b16 %v436, %v434
      %v517 = vpack.c.b16 %v439, %v437
      %v518 = vpack.c.b16 %v440, %v438
      %v519 = vpack.c.b16 %v443, %v441
      %v520 = vpack.c.b16 %v444, %v442
      %v521 = vpack.c.b16 %v447, %v445
      %v522 = vpack.c.b16 %v448, %v446
      %v523 = vpack.c.b16 %v451, %v449
      %v524 = vpack.c.b16 %v452, %v450
      %v525 = vpack.c.b16 %v455, %v453
      %v526 = vpack.c.b16 %v456, %v454
      %v527 = vpack.c.b16 %v459, %v457
      %v528 = vpack.c.b16 %v460, %v458
      %v529 = vpack.c.b16 %v463, %v461
      %v530 = vpack.c.b16 %v464, %v462
      %v531 = vpack.c.b16 %v467, %v465
      %v532 = vpack.c.b16 %v468, %v466
      %v629 = vunpack.c.l.b16 %v241
      %v630 = vunpack.c.l.b16 %v242
      %v631 = vunpack.c.l.b16 %v243
      %v632 = vunpack.c.l.b16 %v244
      %v633 = vunpack.c.l.b16 %v245
      %v634 = vunpack.c.l.b16 %v246
      %v635 = vunpack.c.l.b16 %v247
      %v636 = vunpack.c.l.b16 %v248
      %v637 = vunpack.c.l.b16 %v249
      %v638 = vunpack.c.l.b16 %v250
      %v639 = vunpack.c.l.b16 %v251
      %v640 = vunpack.c.l.b16 %v252
      %v641 = vunpack.c.l.b16 %v253
      %v642 = vunpack.c.l.b16 %v254
      %v643 = vunpack.c.l.b16 %v255
      %v644 = vunpack.c.l.b16 %v256
      %v645 = vunpack.c.l.b16 %v257
      %v646 = vunpack.c.l.b16 %v258
      %v647 = vunpack.c.l.b16 %v259
      %v648 = vunpack.c.l.b16 %v260
      %v649 = vunpack.c.l.b16 %v261
      %v650 = vunpack.c.l.b16 %v262
      %v651 = vunpack.c.l.b16 %v263
      %v652 = vunpack.c.l.b16 %v264
      %v653 = vunpack.c.l.b16 %v265
      %v654 = vunpack.c.l.b16 %v266
      %v655 = vunpack.c.l.b16 %v267
      %v656 = vunpack.c.l.b16 %v268
      %v657 = vunpack.c.l.b16 %v269
      %v658 = vunpack.c.l.b16 %v270
      %v659 = vunpack.c.l.b16 %v271
      %v660 = vunpack.c.l.b16 %v272
      %v661 = vpack.c.b16 %v630, %v629
      %v662 = vpack.c.b16 %v632, %v631
      %v663 = vpack.c.b16 %v634, %v633
      %v664 = vpack.c.b16 %v636, %v635
      %v665 = vpack.c.b16 %v638, %v637
      %v666 = vpack.c.b16 %v640, %v639
      %v667 = vpack.c.b16 %v642, %v641
      %v668 = vpack.c.b16 %v644, %v643
      %v669 = vpack.c.b16 %v646, %v645
      %v670 = vpack.c.b16 %v648, %v647
      %v671 = vpack.c.b16 %v650, %v649
      %v672 = vpack.c.b16 %v652, %v651
      %v673 = vpack.c.b16 %v654, %v653
      %v674 = vpack.c.b16 %v656, %v655
      %v675 = vpack.c.b16 %v658, %v657
      %v676 = vpack.c.b16 %v660, %v659
      %693 = vmatpush.bf16.msra.mxu0 %v668
      %694 = vmatpush.bf16.msra.mxu0 %v667
      %695 = vmatpush.bf16.msra.mxu0 %v666
      %696 = vmatpush.bf16.msra.mxu0 %v665
      %697 = vmatpush.bf16.msra.mxu0 %v664
      %698 = vmatpush.bf16.msra.mxu0 %v663
      %699 = vmatpush.bf16.msra.mxu0 %v662
      %700 = vmatpush.bf16.msra.mxu0 %v661
      %701 = vmatmul.bf16.gmra.mxu0 %v469
      %v702 = vpop.f32.mrf.mxu0
      %v703 = vadd.f32 %v275, %v702
      %v704 = vpop.f32.mrf.mxu0
      %v705 = vadd.f32 %v275, %v704
      %706 = vmatmul.bf16.gmra.mxu0 %v471
      %v707 = vpop.f32.mrf.mxu0
      %v708 = vadd.f32 %v275, %v707
      %v709 = vpop.f32.mrf.mxu0
      %v710 = vadd.f32 %v275, %v709
      %711 = vmatmul.bf16.gmra.mxu0 %v473
      %v712 = vpop.f32.mrf.mxu0
      %v713 = vadd.f32 %v275, %v712
      %v714 = vpop.f32.mrf.mxu0
      %v715 = vadd.f32 %v275, %v714
      %716 = vmatmul.bf16.gmra.mxu0 %v475
      %v717 = vpop.f32.mrf.mxu0
      %v718 = vadd.f32 %v275, %v717
      %v719 = vpop.f32.mrf.mxu0
      %v720 = vadd.f32 %v275, %v719
      %721 = vmatmul.bf16.gmra.mxu0 %v477
      %v722 = vpop.f32.mrf.mxu0
      %v723 = vadd.f32 %v275, %v722
      %v724 = vpop.f32.mrf.mxu0
      %v725 = vadd.f32 %v275, %v724
      %726 = vmatmul.bf16.gmra.mxu0 %v479
      %v727 = vpop.f32.mrf.mxu0
      %v728 = vadd.f32 %v275, %v727
      %v729 = vpop.f32.mrf.mxu0
      %v730 = vadd.f32 %v275, %v729
      %731 = vmatmul.bf16.gmra.mxu0 %v481
      %v732 = vpop.f32.mrf.mxu0
      %v733 = vadd.f32 %v275, %v732
      %v734 = vpop.f32.mrf.mxu0
      %v735 = vadd.f32 %v275, %v734
      %736 = vmatmul.bf16.gmra.mxu0 %v483
      %v737 = vpop.f32.mrf.mxu0
      %v738 = vadd.f32 %v275, %v737
      %v739 = vpop.f32.mrf.mxu0
      %v740 = vadd.f32 %v275, %v739
      %741 = vmatmul.bf16.gmra.mxu0 %v485
      %v742 = vpop.f32.mrf.mxu0
      %v743 = vadd.f32 %v275, %v742
      %v744 = vpop.f32.mrf.mxu0
      %v745 = vadd.f32 %v275, %v744
      %746 = vmatmul.bf16.gmra.mxu0 %v487
      %v747 = vpop.f32.mrf.mxu0
      %v748 = vadd.f32 %v275, %v747
      %v749 = vpop.f32.mrf.mxu0
      %v750 = vadd.f32 %v275, %v749
      %751 = vmatmul.bf16.gmra.mxu0 %v489
      %v752 = vpop.f32.mrf.mxu0
      %v753 = vadd.f32 %v275, %v752
      %v754 = vpop.f32.mrf.mxu0
      %v755 = vadd.f32 %v275, %v754
      %756 = vmatmul.bf16.gmra.mxu0 %v491
      %v757 = vpop.f32.mrf.mxu0
      %v758 = vadd.f32 %v275, %v757
      %v759 = vpop.f32.mrf.mxu0
      %v760 = vadd.f32 %v275, %v759
      %761 = vmatmul.bf16.gmra.mxu0 %v493
      %v762 = vpop.f32.mrf.mxu0
      %v763 = vadd.f32 %v275, %v762
      %v764 = vpop.f32.mrf.mxu0
      %v765 = vadd.f32 %v275, %v764
      %766 = vmatmul.bf16.gmra.mxu0 %v495
      %v767 = vpop.f32.mrf.mxu0
      %v768 = vadd.f32 %v275, %v767
      %v769 = vpop.f32.mrf.mxu0
      %v770 = vadd.f32 %v275, %v769
      %771 = vmatmul.bf16.gmra.mxu0 %v497
      %v772 = vpop.f32.mrf.mxu0
      %v773 = vadd.f32 %v275, %v772
      %v774 = vpop.f32.mrf.mxu0
      %v775 = vadd.f32 %v275, %v774
      %776 = vmatmul.bf16.gmra.mxu0 %v499
      %v777 = vpop.f32.mrf.mxu0
      %v778 = vadd.f32 %v275, %v777
      %v779 = vpop.f32.mrf.mxu0
      %v780 = vadd.f32 %v275, %v779
      %781 = vmatmul.bf16.gmra.mxu0 %v501
      %v782 = vpop.f32.mrf.mxu0
      %v783 = vadd.f32 %v275, %v782
      %v784 = vpop.f32.mrf.mxu0
      %v785 = vadd.f32 %v275, %v784
      %786 = vmatmul.bf16.gmra.mxu0 %v503
      %v787 = vpop.f32.mrf.mxu0
      %v788 = vadd.f32 %v275, %v787
      %v789 = vpop.f32.mrf.mxu0
      %v790 = vadd.f32 %v275, %v789
      %791 = vmatmul.bf16.gmra.mxu0 %v505
      %v792 = vpop.f32.mrf.mxu0
      %v793 = vadd.f32 %v275, %v792
      %v794 = vpop.f32.mrf.mxu0
      %v795 = vadd.f32 %v275, %v794
      %796 = vmatmul.bf16.gmra.mxu0 %v507
      %v797 = vpop.f32.mrf.mxu0
      %v798 = vadd.f32 %v275, %v797
      %v799 = vpop.f32.mrf.mxu0
      %v800 = vadd.f32 %v275, %v799
      %801 = vmatmul.bf16.gmra.mxu0 %v509
      %v802 = vpop.f32.mrf.mxu0
      %v803 = vadd.f32 %v275, %v802
      %v804 = vpop.f32.mrf.mxu0
      %v805 = vadd.f32 %v275, %v804
      %806 = vmatmul.bf16.gmra.mxu0 %v511
      %v807 = vpop.f32.mrf.mxu0
      %v808 = vadd.f32 %v275, %v807
      %v809 = vpop.f32.mrf.mxu0
      %v810 = vadd.f32 %v275, %v809
      %811 = vmatmul.bf16.gmra.mxu0 %v513
      %v812 = vpop.f32.mrf.mxu0
      %v813 = vadd.f32 %v275, %v812
      %v814 = vpop.f32.mrf.mxu0
      %v815 = vadd.f32 %v275, %v814
      %816 = vmatmul.bf16.gmra.mxu0 %v515
      %v817 = vpop.f32.mrf.mxu0
      %v818 = vadd.f32 %v275, %v817
      %v819 = vpop.f32.mrf.mxu0
      %v820 = vadd.f32 %v275, %v819
      %821 = vmatmul.bf16.gmra.mxu0 %v517
      %v822 = vpop.f32.mrf.mxu0
      %v823 = vadd.f32 %v275, %v822
      %v824 = vpop.f32.mrf.mxu0
      %v825 = vadd.f32 %v275, %v824
      %826 = vmatmul.bf16.gmra.mxu0 %v519
      %v827 = vpop.f32.mrf.mxu0
      %v828 = vadd.f32 %v275, %v827
      %v829 = vpop.f32.mrf.mxu0
      %v830 = vadd.f32 %v275, %v829
      %831 = vmatmul.bf16.gmra.mxu0 %v521
      %v832 = vpop.f32.mrf.mxu0
      %v833 = vadd.f32 %v275, %v832
      %v834 = vpop.f32.mrf.mxu0
      %v835 = vadd.f32 %v275, %v834
      %836 = vmatmul.bf16.gmra.mxu0 %v523
      %v837 = vpop.f32.mrf.mxu0
      %v838 = vadd.f32 %v275, %v837
      %v839 = vpop.f32.mrf.mxu0
      %v840 = vadd.f32 %v275, %v839
      %841 = vmatmul.bf16.gmra.mxu0 %v525
      %v842 = vpop.f32.mrf.mxu0
      %v843 = vadd.f32 %v275, %v842
      %v844 = vpop.f32.mrf.mxu0
      %v845 = vadd.f32 %v275, %v844
      %846 = vmatmul.bf16.gmra.mxu0 %v527
      %v847 = vpop.f32.mrf.mxu0
      %v848 = vadd.f32 %v275, %v847
      %v849 = vpop.f32.mrf.mxu0
      %v850 = vadd.f32 %v275, %v849
      %851 = vmatmul.bf16.gmra.mxu0 %v529
      %v852 = vpop.f32.mrf.mxu0
      %v853 = vadd.f32 %v275, %v852
      %v854 = vpop.f32.mrf.mxu0
      %v855 = vadd.f32 %v275, %v854
      %856 = vmatmul.bf16.gmra.mxu0 %v531
      %v857 = vpop.f32.mrf.mxu0
      %v858 = vadd.f32 %v275, %v857
      %v859 = vpop.f32.mrf.mxu0
      %v860 = vadd.f32 %v275, %v859
      %861 = vdwg.mxu0
      %862 = vmatpush.bf16.msra.mxu0 %v676
      %863 = vmatpush.bf16.msra.mxu0 %v675
      %864 = vmatpush.bf16.msra.mxu0 %v674
      %865 = vmatpush.bf16.msra.mxu0 %v673
      %866 = vmatpush.bf16.msra.mxu0 %v672
      %867 = vmatpush.bf16.msra.mxu0 %v671
      %868 = vmatpush.bf16.msra.mxu0 %v670
      %869 = vmatpush.bf16.msra.mxu0 %v669
      %870 = vmatmul.bf16.gmra.mxu0 %v470
      %v871 = vpop.f32.mrf.mxu0
      %v872 = vadd.f32 %v703, %v871
      %v873 = vpop.f32.mrf.mxu0
      %v874 = vadd.f32 %v705, %v873
      %875 = vmatmul.bf16.gmra.mxu0 %v472
      %v876 = vpop.f32.mrf.mxu0
      %v877 = vadd.f32 %v708, %v876
      %v878 = vpop.f32.mrf.mxu0
      %v879 = vadd.f32 %v710, %v878
      %880 = vmatmul.bf16.gmra.mxu0 %v474
      %v881 = vpop.f32.mrf.mxu0
      %v882 = vadd.f32 %v713, %v881
      %v883 = vpop.f32.mrf.mxu0
      %v884 = vadd.f32 %v715, %v883
      %885 = vmatmul.bf16.gmra.mxu0 %v476
      %v886 = vpop.f32.mrf.mxu0
      %v887 = vadd.f32 %v718, %v886
      %v888 = vpop.f32.mrf.mxu0
      %v889 = vadd.f32 %v720, %v888
      %890 = vmatmul.bf16.gmra.mxu0 %v478
      %v891 = vpop.f32.mrf.mxu0
      %v892 = vadd.f32 %v723, %v891
      %v893 = vpop.f32.mrf.mxu0
      %v894 = vadd.f32 %v725, %v893
      %895 = vmatmul.bf16.gmra.mxu0 %v480
      %v896 = vpop.f32.mrf.mxu0
      %v897 = vadd.f32 %v728, %v896
      %v898 = vpop.f32.mrf.mxu0
      %v899 = vadd.f32 %v730, %v898
      %900 = vmatmul.bf16.gmra.mxu0 %v482
      %v901 = vpop.f32.mrf.mxu0
      %v902 = vadd.f32 %v733, %v901
      %v903 = vpop.f32.mrf.mxu0
      %v904 = vadd.f32 %v735, %v903
      %905 = vmatmul.bf16.gmra.mxu0 %v484
      %v906 = vpop.f32.mrf.mxu0
      %v907 = vadd.f32 %v738, %v906
      %v908 = vpop.f32.mrf.mxu0
      %v909 = vadd.f32 %v740, %v908
      %910 = vmatmul.bf16.gmra.mxu0 %v486
      %v911 = vpop.f32.mrf.mxu0
      %v912 = vadd.f32 %v743, %v911
      %v913 = vpop.f32.mrf.mxu0
      %v914 = vadd.f32 %v745, %v913
      %915 = vmatmul.bf16.gmra.mxu0 %v488
      %v916 = vpop.f32.mrf.mxu0
      %v917 = vadd.f32 %v748, %v916
      %v918 = vpop.f32.mrf.mxu0
      %v919 = vadd.f32 %v750, %v918
      %920 = vmatmul.bf16.gmra.mxu0 %v490
      %v921 = vpop.f32.mrf.mxu0
      %v922 = vadd.f32 %v753, %v921
      %v923 = vpop.f32.mrf.mxu0
      %v924 = vadd.f32 %v755, %v923
      %925 = vmatmul.bf16.gmra.mxu0 %v492
      %v926 = vpop.f32.mrf.mxu0
      %v927 = vadd.f32 %v758, %v926
      %v928 = vpop.f32.mrf.mxu0
      %v929 = vadd.f32 %v760, %v928
      %930 = vmatmul.bf16.gmra.mxu0 %v494
      %v931 = vpop.f32.mrf.mxu0
      %v932 = vadd.f32 %v763, %v931
      %v933 = vpop.f32.mrf.mxu0
      %v934 = vadd.f32 %v765, %v933
      %935 = vmatmul.bf16.gmra.mxu0 %v496
      %v936 = vpop.f32.mrf.mxu0
      %v937 = vadd.f32 %v768, %v936
      %v938 = vpop.f32.mrf.mxu0
      %v939 = vadd.f32 %v770, %v938
      %940 = vmatmul.bf16.gmra.mxu0 %v498
      %v941 = vpop.f32.mrf.mxu0
      %v942 = vadd.f32 %v773, %v941
      %v943 = vpop.f32.mrf.mxu0
      %v944 = vadd.f32 %v775, %v943
      %945 = vmatmul.bf16.gmra.mxu0 %v500
      %v946 = vpop.f32.mrf.mxu0
      %v947 = vadd.f32 %v778, %v946
      %v948 = vpop.f32.mrf.mxu0
      %v949 = vadd.f32 %v780, %v948
      %950 = vmatmul.bf16.gmra.mxu0 %v502
      %v951 = vpop.f32.mrf.mxu0
      %v952 = vadd.f32 %v783, %v951
      %v953 = vpop.f32.mrf.mxu0
      %v954 = vadd.f32 %v785, %v953
      %955 = vmatmul.bf16.gmra.mxu0 %v504
      %v956 = vpop.f32.mrf.mxu0
      %v957 = vadd.f32 %v788, %v956
      %v958 = vpop.f32.mrf.mxu0
      %v959 = vadd.f32 %v790, %v958
      %960 = vmatmul.bf16.gmra.mxu0 %v506
      %v961 = vpop.f32.mrf.mxu0
      %v962 = vadd.f32 %v793, %v961
      %v963 = vpop.f32.mrf.mxu0
      %v964 = vadd.f32 %v795, %v963
      %965 = vmatmul.bf16.gmra.mxu0 %v508
      %v966 = vpop.f32.mrf.mxu0
      %v967 = vadd.f32 %v798, %v966
      %v968 = vpop.f32.mrf.mxu0
      %v969 = vadd.f32 %v800, %v968
      %970 = vmatmul.bf16.gmra.mxu0 %v510
      %v971 = vpop.f32.mrf.mxu0
      %v972 = vadd.f32 %v803, %v971
      %v973 = vpop.f32.mrf.mxu0
      %v974 = vadd.f32 %v805, %v973
      %975 = vmatmul.bf16.gmra.mxu0 %v512
      %v976 = vpop.f32.mrf.mxu0
      %v977 = vadd.f32 %v808, %v976
      %v978 = vpop.f32.mrf.mxu0
      %v979 = vadd.f32 %v810, %v978
      %980 = vmatmul.bf16.gmra.mxu0 %v514
      %v981 = vpop.f32.mrf.mxu0
      %v982 = vadd.f32 %v813, %v981
      %v983 = vpop.f32.mrf.mxu0
      %v984 = vadd.f32 %v815, %v983
      %985 = vmatmul.bf16.gmra.mxu0 %v516
      %v986 = vpop.f32.mrf.mxu0
      %v987 = vadd.f32 %v818, %v986
      %v988 = vpop.f32.mrf.mxu0
      %v989 = vadd.f32 %v820, %v988
      %990 = vmatmul.bf16.gmra.mxu0 %v518
      %v991 = vpop.f32.mrf.mxu0
      %v992 = vadd.f32 %v823, %v991
      %v993 = vpop.f32.mrf.mxu0
      %v994 = vadd.f32 %v825, %v993
      %995 = vmatmul.bf16.gmra.mxu0 %v520
      %v996 = vpop.f32.mrf.mxu0
      %v997 = vadd.f32 %v828, %v996
      %v998 = vpop.f32.mrf.mxu0
      %v999 = vadd.f32 %v830, %v998
      %1000 = vmatmul.bf16.gmra.mxu0 %v522
      %v1001 = vpop.f32.mrf.mxu0
      %v1002 = vadd.f32 %v833, %v1001
      %v1003 = vpop.f32.mrf.mxu0
      %v1004 = vadd.f32 %v835, %v1003
      %1005 = vmatmul.bf16.gmra.mxu0 %v524
      %v1006 = vpop.f32.mrf.mxu0
      %v1007 = vadd.f32 %v838, %v1006
      %v1008 = vpop.f32.mrf.mxu0
      %v1009 = vadd.f32 %v840, %v1008
      %1010 = vmatmul.bf16.gmra.mxu0 %v526
      %v1011 = vpop.f32.mrf.mxu0
      %v1012 = vadd.f32 %v843, %v1011
      %v1013 = vpop.f32.mrf.mxu0
      %v1014 = vadd.f32 %v845, %v1013
      %1015 = vmatmul.bf16.gmra.mxu0 %v528
      %v1016 = vpop.f32.mrf.mxu0
      %v1017 = vadd.f32 %v848, %v1016
      %v1018 = vpop.f32.mrf.mxu0
      %v1019 = vadd.f32 %v850, %v1018
      %1020 = vmatmul.bf16.gmra.mxu0 %v530
      %v1021 = vpop.f32.mrf.mxu0
      %v1022 = vadd.f32 %v853, %v1021
      %v1023 = vpop.f32.mrf.mxu0
      %v1024 = vadd.f32 %v855, %v1023
      %1025 = vmatmul.bf16.gmra.mxu0 %v532
      %v1026 = vpop.f32.mrf.mxu0
      %v1027 = vadd.f32 %v858, %v1026
      %v1028 = vpop.f32.mrf.mxu0
      %v1029 = vadd.f32 %v860, %v1028
      %1030 = vdwg.mxu0
      %v1031 = vmax.f32 %v872, 0.0
      %v1032 = vmax.f32 %v874, 0.0
      %v1033 = vmax.f32 %v877, 0.0
      %v1034 = vmax.f32 %v879, 0.0
      %v1035 = vmax.f32 %v882, 0.0
      %v1036 = vmax.f32 %v884, 0.0
      %v1037 = vmax.f32 %v887, 0.0
      %v1038 = vmax.f32 %v889, 0.0
      %v1039 = vmax.f32 %v892, 0.0
      %v1040 = vmax.f32 %v894, 0.0
      %v1041 = vmax.f32 %v897, 0.0
      %v1042 = vmax.f32 %v899, 0.0
      %v1043 = vmax.f32 %v902, 0.0
      %v1044 = vmax.f32 %v904, 0.0
      %v1045 = vmax.f32 %v907, 0.0
      %v1046 = vmax.f32 %v909, 0.0
      %v1047 = vmax.f32 %v912, 0.0
      %v1048 = vmax.f32 %v914, 0.0
      %v1049 = vmax.f32 %v917, 0.0
      %v1050 = vmax.f32 %v919, 0.0
      %v1051 = vmax.f32 %v922, 0.0
      %v1052 = vmax.f32 %v924, 0.0
      %v1053 = vmax.f32 %v927, 0.0
      %v1054 = vmax.f32 %v929, 0.0
      %v1055 = vmax.f32 %v932, 0.0
      %v1056 = vmax.f32 %v934, 0.0
      %v1057 = vmax.f32 %v937, 0.0
      %v1058 = vmax.f32 %v939, 0.0
      %v1059 = vmax.f32 %v942, 0.0
      %v1060 = vmax.f32 %v944, 0.0
      %v1061 = vmax.f32 %v947, 0.0
      %v1062 = vmax.f32 %v949, 0.0
      %v1063 = vmax.f32 %v952, 0.0
      %v1064 = vmax.f32 %v954, 0.0
      %v1065 = vmax.f32 %v957, 0.0
      %v1066 = vmax.f32 %v959, 0.0
      %v1067 = vmax.f32 %v962, 0.0
      %v1068 = vmax.f32 %v964, 0.0
      %v1069 = vmax.f32 %v967, 0.0
      %v1070 = vmax.f32 %v969, 0.0
      %v1071 = vmax.f32 %v972, 0.0
      %v1072 = vmax.f32 %v974, 0.0
      %v1073 = vmax.f32 %v977, 0.0
      %v1074 = vmax.f32 %v979, 0.0
      %v1075 = vmax.f32 %v982, 0.0
      %v1076 = vmax.f32 %v984, 0.0
      %v1077 = vmax.f32 %v987, 0.0
      %v1078 = vmax.f32 %v989, 0.0
      %v1079 = vmax.f32 %v992, 0.0
      %v1080 = vmax.f32 %v994, 0.0
      %v1081 = vmax.f32 %v997, 0.0
      %v1082 = vmax.f32 %v999, 0.0
      %v1083 = vmax.f32 %v1002, 0.0
      %v1084 = vmax.f32 %v1004, 0.0
      %v1085 = vmax.f32 %v1007, 0.0
      %v1086 = vmax.f32 %v1009, 0.0
      %v1087 = vmax.f32 %v1012, 0.0
      %v1088 = vmax.f32 %v1014, 0.0
      %v1089 = vmax.f32 %v1017, 0.0
      %v1090 = vmax.f32 %v1019, 0.0
      %v1091 = vmax.f32 %v1022, 0.0
      %v1092 = vmax.f32 %v1024, 0.0
      %v1093 = vmax.f32 %v1027, 0.0
      %v1094 = vmax.f32 %v1029, 0.0
      %v1095 = vpack.c.bf16 %v1031, %v1031
      %v1096 = vpack.c.bf16 %v1032, %v1032
      %v1097 = vpack.c.bf16 %v1033, %v1033
      %v1098 = vpack.c.bf16 %v1034, %v1034
      %v1099 = vpack.c.bf16 %v1035, %v1035
      %v1100 = vpack.c.bf16 %v1036, %v1036
      %v1101 = vpack.c.bf16 %v1037, %v1037
      %v1102 = vpack.c.bf16 %v1038, %v1038
      %v1103 = vpack.c.bf16 %v1039, %v1039
      %v1104 = vpack.c.bf16 %v1040, %v1040
      %v1105 = vpack.c.bf16 %v1041, %v1041
      %v1106 = vpack.c.bf16 %v1042, %v1042
      %v1107 = vpack.c.bf16 %v1043, %v1043
      %v1108 = vpack.c.bf16 %v1044, %v1044
      %v1109 = vpack.c.bf16 %v1045, %v1045
      %v1110 = vpack.c.bf16 %v1046, %v1046
      %v1111 = vpack.c.bf16 %v1047, %v1047
      %v1112 = vpack.c.bf16 %v1048, %v1048
      %v1113 = vpack.c.bf16 %v1049, %v1049
      %v1114 = vpack.c.bf16 %v1050, %v1050
      %v1115 = vpack.c.bf16 %v1051, %v1051
      %v1116 = vpack.c.bf16 %v1052, %v1052
      %v1117 = vpack.c.bf16 %v1053, %v1053
      %v1118 = vpack.c.bf16 %v1054, %v1054
      %v1119 = vpack.c.bf16 %v1055, %v1055
      %v1120 = vpack.c.bf16 %v1056, %v1056
      %v1121 = vpack.c.bf16 %v1057, %v1057
      %v1122 = vpack.c.bf16 %v1058, %v1058
      %v1123 = vpack.c.bf16 %v1059, %v1059
      %v1124 = vpack.c.bf16 %v1060, %v1060
      %v1125 = vpack.c.bf16 %v1061, %v1061
      %v1126 = vpack.c.bf16 %v1062, %v1062
      %v1127 = vpack.c.bf16 %v1063, %v1063
      %v1128 = vpack.c.bf16 %v1064, %v1064
      %v1129 = vpack.c.bf16 %v1065, %v1065
      %v1130 = vpack.c.bf16 %v1066, %v1066
      %v1131 = vpack.c.bf16 %v1067, %v1067
      %v1132 = vpack.c.bf16 %v1068, %v1068
      %v1133 = vpack.c.bf16 %v1069, %v1069
      %v1134 = vpack.c.bf16 %v1070, %v1070
      %v1135 = vpack.c.bf16 %v1071, %v1071
      %v1136 = vpack.c.bf16 %v1072, %v1072
      %v1137 = vpack.c.bf16 %v1073, %v1073
      %v1138 = vpack.c.bf16 %v1074, %v1074
      %v1139 = vpack.c.bf16 %v1075, %v1075
      %v1140 = vpack.c.bf16 %v1076, %v1076
      %v1141 = vpack.c.bf16 %v1077, %v1077
      %v1142 = vpack.c.bf16 %v1078, %v1078
      %v1143 = vpack.c.bf16 %v1079, %v1079
      %v1144 = vpack.c.bf16 %v1080, %v1080
      %v1145 = vpack.c.bf16 %v1081, %v1081
      %v1146 = vpack.c.bf16 %v1082, %v1082
      %v1147 = vpack.c.bf16 %v1083, %v1083
      %v1148 = vpack.c.bf16 %v1084, %v1084
      %v1149 = vpack.c.bf16 %v1085, %v1085
      %v1150 = vpack.c.bf16 %v1086, %v1086
      %v1151 = vpack.c.bf16 %v1087, %v1087
      %v1152 = vpack.c.bf16 %v1088, %v1088
      %v1153 = vpack.c.bf16 %v1089, %v1089
      %v1154 = vpack.c.bf16 %v1090, %v1090
      %v1155 = vpack.c.bf16 %v1091, %v1091
      %v1156 = vpack.c.bf16 %v1092, %v1092
      %v1157 = vpack.c.bf16 %v1093, %v1093
      %v1158 = vpack.c.bf16 %v1094, %v1094
      %1159 = vst [vmem:[%s175] sm:$0xf] %v1095
      %1160 = vst [vmem:[%s175 + $0x4] sm:$0xf] %v1096
      %1161 = vst [vmem:[%s175 + $0x8] sm:$0xf] %v1097
      %1162 = vst [vmem:[%s175 + $0xc] sm:$0xf] %v1098
      %1163 = vst [vmem:[%s175 + $0x10] sm:$0xf] %v1099
      %1164 = vst [vmem:[%s175 + $0x14] sm:$0xf] %v1100
      %1165 = vst [vmem:[%s175 + $0x18] sm:$0xf] %v1101
      %1166 = vst [vmem:[%s175 + $0x1c] sm:$0xf] %v1102
      %1167 = vst [vmem:[%s175 + $0x20] sm:$0xf] %v1103
      %1168 = vst [vmem:[%s175 + $0x24] sm:$0xf] %v1104
      %1169 = vst [vmem:[%s175 + $0x28] sm:$0xf] %v1105
      %1170 = vst [vmem:[%s175 + $0x2c] sm:$0xf] %v1106
      %1171 = vst [vmem:[%s175 + $0x30] sm:$0xf] %v1107
      %1172 = vst [vmem:[%s175 + $0x34] sm:$0xf] %v1108
      %1173 = vst [vmem:[%s175 + $0x38] sm:$0xf] %v1109
      %1174 = vst [vmem:[%s175 + $0x3c] sm:$0xf] %v1110
      %1175 = vst [vmem:[%s175 + $0x40] sm:$0xf] %v1111
      %1176 = vst [vmem:[%s175 + $0x44] sm:$0xf] %v1112
      %1177 = vst [vmem:[%s175 + $0x48] sm:$0xf] %v1113
      %1178 = vst [vmem:[%s175 + $0x4c] sm:$0xf] %v1114
      %1179 = vst [vmem:[%s175 + $0x50] sm:$0xf] %v1115
      %1180 = vst [vmem:[%s175 + $0x54] sm:$0xf] %v1116
      %1181 = vst [vmem:[%s175 + $0x58] sm:$0xf] %v1117
      %1182 = vst [vmem:[%s175 + $0x5c] sm:$0xf] %v1118
      %1183 = vst [vmem:[%s175 + $0x60] sm:$0xf] %v1119
      %1184 = vst [vmem:[%s175 + $0x64] sm:$0xf] %v1120
      %1185 = vst [vmem:[%s175 + $0x68] sm:$0xf] %v1121
      %1186 = vst [vmem:[%s175 + $0x6c] sm:$0xf] %v1122
      %1187 = vst [vmem:[%s175 + $0x70] sm:$0xf] %v1123
      %1188 = vst [vmem:[%s175 + $0x74] sm:$0xf] %v1124
      %1189 = vst [vmem:[%s175 + $0x78] sm:$0xf] %v1125
      %1190 = vst [vmem:[%s175 + $0x7c] sm:$0xf] %v1126
      %1191 = vst [vmem:[%s175 + $0x80] sm:$0xf] %v1127
      %1192 = vst [vmem:[%s175 + $0x84] sm:$0xf] %v1128
      %1193 = vst [vmem:[%s175 + $0x88] sm:$0xf] %v1129
      %1194 = vst [vmem:[%s175 + $0x8c] sm:$0xf] %v1130
      %1195 = vst [vmem:[%s175 + $0x90] sm:$0xf] %v1131
      %1196 = vst [vmem:[%s175 + $0x94] sm:$0xf] %v1132
      %1197 = vst [vmem:[%s175 + $0x98] sm:$0xf] %v1133
      %1198 = vst [vmem:[%s175 + $0x9c] sm:$0xf] %v1134
      %1199 = vst [vmem:[%s175 + $0xa0] sm:$0xf] %v1135
      %1200 = vst [vmem:[%s175 + $0xa4] sm:$0xf] %v1136
      %1201 = vst [vmem:[%s175 + $0xa8] sm:$0xf] %v1137
      %1202 = vst [vmem:[%s175 + $0xac] sm:$0xf] %v1138
      %1203 = vst [vmem:[%s175 + $0xb0] sm:$0xf] %v1139
      %1204 = vst [vmem:[%s175 + $0xb4] sm:$0xf] %v1140
      %1205 = vst [vmem:[%s175 + $0xb8] sm:$0xf] %v1141
      %1206 = vst [vmem:[%s175 + $0xbc] sm:$0xf] %v1142
      %1207 = vst [vmem:[%s175 + $0xc0] sm:$0xf] %v1143
      %1208 = vst [vmem:[%s175 + $0xc4] sm:$0xf] %v1144
      %1209 = vst [vmem:[%s175 + $0xc8] sm:$0xf] %v1145
      %1210 = vst [vmem:[%s175 + $0xcc] sm:$0xf] %v1146
      %1211 = vst [vmem:[%s175 + $0xd0] sm:$0xf] %v1147
      %1212 = vst [vmem:[%s175 + $0xd4] sm:$0xf] %v1148
      %1213 = vst [vmem:[%s175 + $0xd8] sm:$0xf] %v1149
      %1214 = vst [vmem:[%s175 + $0xdc] sm:$0xf] %v1150
      %1215 = vst [vmem:[%s175 + $0xe0] sm:$0xf] %v1151
      %1216 = vst [vmem:[%s175 + $0xe4] sm:$0xf] %v1152
      %1217 = vst [vmem:[%s175 + $0xe8] sm:$0xf] %v1153
      %1218 = vst [vmem:[%s175 + $0xec] sm:$0xf] %v1154
      %1219 = vst [vmem:[%s175 + $0xf0] sm:$0xf] %v1155
      %1220 = vst [vmem:[%s175 + $0xf4] sm:$0xf] %v1156
      %1221 = vst [vmem:[%s175 + $0xf8] sm:$0xf] %v1157
      %1222 = vst [vmem:[%s175 + $0xfc] sm:$0xf] %v1158
      %s1223 = smul.u32 64, %s14
      %p1224 = scmp.lt.s32.totalorder %s1223, 255
      %s1225 = scalar_select %p1224, %s1223, 255
      %s1226 = smul.addr %s1225, 4
      %s1227 = scalar_lea.vmem %s3, %s1226
      // Predicated region
      $region33: #{forward.10} parent=31 // pred_check
        %p1228 = pneg %p100
      $region34: #{forward.10} parent=31 // pred_check_branch
        %1230 = sbr.rel (%p1228) target = $region36
      $region35: #{forward.10} parent=31 // pred_region
        %s1231 = smul.u32 64, %s14
      $region36: #{forward.10} parent=31 // pred_fallthru
        _
    $region32: #{forward.10} parent=5 // pred_fallthru
      _
    %p1232 = scmp.le.s32.totalorder 2, %s9
    // Predicated region
    $region37: #{forward.10} parent=5 // pred_check
      %p1233 = pneg %p1232
    $region38: #{forward.10} parent=5 // pred_check_branch
      %1235 = sbr.rel (%p1233) target = $region40
    $region39: #{forward.10} parent=5 // pred_region
      %s1236 = ssub.s32 %s9, 2
      // Predicated region
      $region41: #{forward.10} parent=39 // pred_check
        %p1237 = pneg %p106
      $region42: #{forward.10} parent=39 // pred_check_branch
        %1239 = sbr.rel (%p1237) target = $region44
      $region43: #{forward.10} parent=39 // pred_region
        %s1240 = smul.u32 64, %s15
        %p1241 = scmp.lt.s32.totalorder %s1240, 255
        %s1242 = scalar_select %p1241, %s1240, 255
        %s1243 = smul.addr %s1242, 4
        %s1244 = scalar_lea.vmem %s3, %s1243
      $region44: #{forward.10} parent=39 // pred_fallthru
        _
    $region40: #{forward.10} parent=5 // pred_fallthru
      _
  $region6: #{forward.10} parent=0 // loop_footer
    %s13 = sadd.s32 1, %s9
  $region7: #{forward.10} parent=0 // loop_footer_branch
    %8 = sbr.rel target = $region3
  $region8: #{forward.10} parent=0 // loop_exit
    _

// kernel: forward.11
$region0: #{forward.11}
  #allocation0 [shape = 'u32[]', space=smem, size = 0x4, offset = 0x4, fixed_abs, tag = 'smem constant byte address 0x4 - core index']
  #allocation1 [shape = 'u32[72,128]{1,0:T(1,128)}', space=vmem, size = 0x9000, scoped, tag = 'internal scratch']
  %s0 = inlined_call_operand.vmem [shape: bf16[512,256], index: 0, kind: input, shape index: {}]
  %s1 = inlined_call_operand.vmem [shape: bf16[256,128], index: 1, kind: input, shape index: {}]
  %s2 = inlined_call_operand.vmem [shape: f32[1,128], index: 2, kind: input, shape index: {}]
  %s3 = inlined_call_operand.vmem [shape: bf16[512,128], index: 3, kind: output, shape index: {}]
  %s4 = sld [smem:[#allocation0]]
  $region45: #{forward.11} parent=0
    _
  %s6 = ssub.s32 1, %s4
  %s7 = scalar_select 0, %s6, %s4
  loop: start=0, step=1, limit=4
  $region2: #{forward.11} parent=0 // loop_pre_header
    _
  $region3: #{forward.11} parent=0 // loop_header
    %s9 = sphi 0, %s13
    %p10 = scmp.ge.s32.totalorder %s9, 4
    %s19 = sphi 0, %s21
    %s22 = sphi 0, %s19
    %s23 = sphi 0, %s22
    %s39 = sphi 0, %s23
    %s43 = sphi 0, %s43
    %s45 = sphi 0, %s43
    %s46 = sphi 0, %s45
    %s60 = sphi 0, %s46
    %s64 = sphi 0, %s64
    %s66 = sphi 0, %s64
    %s67 = sphi 0, %s66
    %s81 = sphi 0, %s67
    %s87 = sphi 0, %s89
    %s90 = sphi 0, %s87
    %s91 = sphi 0, %s90
    %s107 = sphi 0, %s91
  $region4: #{forward.11} parent=0 // loop_header_branch
    %12 = sbr.rel (%p10) target = $region8
  $region5: #{forward.11} parent=0 // loop_body
    %s14 = ssub.s32 %s9, 1
    %s15 = ssub.s32 %s9, 2
    %s16 = sadd.s32 %s9, 1
    %s17 = ssub.s32 %s9, %s16
    %p18 = scmp.eq.s32.totalorder %s17, 0
    %s20 = sadd.s32 %s19, 1
    %s21 = scalar_select %p18, %s19, %s20
    %p24 = pneg %p18
    %p25 = scmp.eq.s32.totalorder %s9, 1
    %p26 = por %p24, %p25
    %p27 = scmp.ne.s32.totalorder %s19, %s22
    %p28 = scmp.eq.s32.totalorder %s9, 0
    %p29 = por %p27, %p28
    %p30 = scmp.ne.s32.totalorder %s19, %s22
    %p31 = scmp.eq.s32.totalorder %s14, 1
    %p32 = por %p30, %p31
    %p33 = scmp.ne.s32.totalorder %s22, %s23
    %p34 = scmp.eq.s32.totalorder %s14, 0
    %p35 = por %p33, %p34
    %p36 = scmp.ne.s32.totalorder %s22, %s23
    %p37 = scmp.eq.s32.totalorder %s15, 1
    %p38 = por %p36, %p37
    %p40 = scmp.ne.s32.totalorder %s23, %s39
    %p41 = scmp.eq.s32.totalorder %s15, 0
    %p42 = por %p40, %p41
    %s44 = sadd.s32 %s43, 1
    %p47 = scmp.eq.s32.totalorder %s9, 1
    %p48 = scmp.ne.s32.totalorder %s43, %s45
    %p49 = scmp.eq.s32.totalorder %s9, 0
    %p50 = por %p48, %p49
    %p51 = scmp.ne.s32.totalorder %s43, %s45
    %p52 = scmp.eq.s32.totalorder %s14, 1
    %p53 = por %p51, %p52
    %p54 = scmp.ne.s32.totalorder %s45, %s46
    %p55 = scmp.eq.s32.totalorder %s14, 0
    %p56 = por %p54, %p55
    %p57 = scmp.ne.s32.totalorder %s45, %s46
    %p58 = scmp.eq.s32.totalorder %s15, 1
    %p59 = por %p57, %p58
    %p61 = scmp.ne.s32.totalorder %s46, %s60
    %p62 = scmp.eq.s32.totalorder %s15, 0
    %p63 = por %p61, %p62
    %s65 = sadd.s32 %s64, 1
    %p68 = scmp.eq.s32.totalorder %s9, 1
    %p69 = scmp.ne.s32.totalorder %s64, %s66
    %p70 = scmp.eq.s32.totalorder %s9, 0
    %p71 = por %p69, %p70
    %p72 = scmp.ne.s32.totalorder %s64, %s66
    %p73 = scmp.eq.s32.totalorder %s14, 1
    %p74 = por %p72, %p73
    %p75 = scmp.ne.s32.totalorder %s66, %s67
    %p76 = scmp.eq.s32.totalorder %s14, 0
    %p77 = por %p75, %p76
    %p78 = scmp.ne.s32.totalorder %s66, %s67
    %p79 = scmp.eq.s32.totalorder %s15, 1
    %p80 = por %p78, %p79
    %p82 = scmp.ne.s32.totalorder %s67, %s81
    %p83 = scmp.eq.s32.totalorder %s15, 0
    %p84 = por %p82, %p83
    %s85 = ssub.s32 %s9, %s16
    %p86 = scmp.eq.s32.totalorder %s85, 0
    %s88 = sadd.s32 %s87, 1
    %s89 = scalar_select %p86, %s87, %s88
    %p92 = pneg %p86
    %p93 = scmp.eq.s32.totalorder %s9, 1
    %p94 = por %p92, %p93
    %p95 = scmp.ne.s32.totalorder %s87, %s90
    %p96 = scmp.eq.s32.totalorder %s9, 0
    %p97 = por %p95, %p96
    %p98 = scmp.ne.s32.totalorder %s87, %s90
    %p99 = scmp.eq.s32.totalorder %s14, 1
    %p100 = por %p98, %p99
    %p101 = scmp.ne.s32.totalorder %s90, %s91
    %p102 = scmp.eq.s32.totalorder %s14, 0
    %p103 = por %p101, %p102
    %p104 = scmp.ne.s32.totalorder %s90, %s91
    %p105 = scmp.eq.s32.totalorder %s15, 1
    %p106 = por %p104, %p105
    %p108 = scmp.ne.s32.totalorder %s91, %s107
    %p109 = scmp.eq.s32.totalorder %s15, 0
    %p110 = por %p108, %p109
    %p111 = scmp.le.s32.totalorder 1, %s9
    %p112 = scmp.lt.s32.totalorder %s9, 3
    %p113 = pnand %p111, %p112
    %p114 = pneg %p113
    // Predicated region
    $region9: #{forward.11} parent=5 // pred_check
      _
    $region10: #{forward.11} parent=5 // pred_check_branch
      %116 = sbr.rel (%p113) target = $region12
    $region11: #{forward.11} parent=5 // pred_region
      %s117 = ssub.s32 %s9, 1
      // Predicated region
      $region13: #{forward.11} parent=11 // pred_check
        %p118 = pneg %p56
      $region14: #{forward.11} parent=11 // pred_check_branch
        %120 = sbr.rel (%p118) target = $region16
      $region15: #{forward.11} parent=11 // pred_region
        _
      $region16: #{forward.11} parent=11 // pred_fallthru
        _
      // Predicated region
      $region17: #{forward.11} parent=11 // pred_check
        %p121 = pneg %p77
      $region18: #{forward.11} parent=11 // pred_check_branch
        %123 = sbr.rel (%p121) target = $region20
      $region19: #{forward.11} parent=11 // pred_region
        _
      $region20: #{forward.11} parent=11 // pred_fallthru
        _
    $region12: #{forward.11} parent=5 // pred_fallthru
      _
    %p124 = scmp.lt.s32.totalorder %s9, 2
    // Predicated region
    $region21: #{forward.11} parent=5 // pred_check
      %p125 = pneg %p124
    $region22: #{forward.11} parent=5 // pred_check_branch
      %127 = sbr.rel (%p125) target = $region24
    $region23: #{forward.11} parent=5 // pred_region
      // Predicated region
      $region25: #{forward.11} parent=23 // pred_check
        %p128 = pneg %p29
      $region26: #{forward.11} parent=23 // pred_check_branch
        %130 = sbr.rel (%p128) target = $region28
      $region27: #{forward.11} parent=23 // pred_region
        %s131 = smul.u32 32, %s9
        %p132 = scmp.lt.s32.totalorder %s131, 63
        %s133 = scalar_select %p132, %s131, 63
        %s134 = smul.addr %s133, 2
        %s135 = smul.addr %s134, 4
        %s136 = scalar_lea.vmem %s0, %s135
        %s137 = smul.u32 32, %s9
      $region28: #{forward.11} parent=23 // pred_fallthru
        _
    $region24: #{forward.11} parent=5 // pred_fallthru
      _
    %p138 = scmp.le.s32.totalorder 1, %s9
    %p139 = scmp.lt.s32.totalorder %s9, 3
    %p140 = pnand %p138, %p139
    %p141 = pneg %p140
    // Predicated region
    $region29: #{forward.11} parent=5 // pred_check
      _
    $region30: #{forward.11} parent=5 // pred_check_branch
      %143 = sbr.rel (%p140) target = $region32
    $region31: #{forward.11} parent=5 // pred_region
      %s144 = ssub.s32 %s9, 1
      %s145 = smul.u32 32, %s14
      %p146 = scmp.lt.s32.totalorder %s145, 63
      %s147 = scalar_select %p146, %s145, 63
      %s148 = smul.addr %s147, 2
      %s149 = smul.addr %s148, 4
      %s150 = scalar_lea.vmem %s0, %s149
      %p151 = pneg %p35
      %p152 = pneg %p32
      %p153 = pneg %p56
      %p154 = pneg %p53
      %p155 = pneg %p77
      %p156 = pneg %p74
      %p157 = pneg %p103
      %p158 = pneg %p100
      %s159 = smul.u32 32, %s14
      %p160 = scmp.lt.s32.totalorder %s159, 63
      %s161 = scalar_select %p160, %s159, 63
      %s162 = smul.addr %s161, 4
      %s163 = scalar_lea.vmem %s3, %s162
      %s164 = smul.u32 32, %s14
      %p165 = scmp.lt.s32.totalorder %s164, 63
      %s166 = scalar_select %p165, %s164, 63
      %s167 = smul.addr %s166, 2
      %s168 = smul.addr %s167, 4
      %s169 = scalar_lea.vmem %s0, %s168
      %s170 = smul.u32 32, %s14
      %s171 = smul.u32 32, %s14
      %p172 = scmp.lt.s32.totalorder %s171, 63
      %s173 = scalar_select %p172, %s171, 63
      %s174 = smul.addr %s173, 4
      %s175 = scalar_lea.vmem %s3, %s174
      %s176 = smul.u32 32, %s14
      %v177 = vld [vmem:[%s169] sm:$0xff]
      %v178 = vld [vmem:[%s169 + $0x8] sm:$0xff]
      %v179 = vld [vmem:[%s169 + $0x10] sm:$0xff]
      %v180 = vld [vmem:[%s169 + $0x18] sm:$0xff]
      %v181 = vld [vmem:[%s169 + $0x20] sm:$0xff]
      %v182 = vld [vmem:[%s169 + $0x28] sm:$0xff]
      %v183 = vld [vmem:[%s169 + $0x30] sm:$0xff]
      %v184 = vld [vmem:[%s169 + $0x38] sm:$0xff]
      %v185 = vld [vmem:[%s169 + $0x40] sm:$0xff]
      %v186 = vld [vmem:[%s169 + $0x48] sm:$0xff]
      %v187 = vld [vmem:[%s169 + $0x50] sm:$0xff]
      %v188 = vld [vmem:[%s169 + $0x58] sm:$0xff]
      %v189 = vld [vmem:[%s169 + $0x60] sm:$0xff]
      %v190 = vld [vmem:[%s169 + $0x68] sm:$0xff]
      %v191 = vld [vmem:[%s169 + $0x70] sm:$0xff]
      %v192 = vld [vmem:[%s169 + $0x78] sm:$0xff]
      %v193 = vld [vmem:[%s169 + $0x80] sm:$0xff]
      %v194 = vld [vmem:[%s169 + $0x88] sm:$0xff]
      %v195 = vld [vmem:[%s169 + $0x90] sm:$0xff]
      %v196 = vld [vmem:[%s169 + $0x98] sm:$0xff]
      %v197 = vld [vmem:[%s169 + $0xa0] sm:$0xff]
      %v198 = vld [vmem:[%s169 + $0xa8] sm:$0xff]
      %v199 = vld [vmem:[%s169 + $0xb0] sm:$0xff]
      %v200 = vld [vmem:[%s169 + $0xb8] sm:$0xff]
      %v201 = vld [vmem:[%s169 + $0xc0] sm:$0xff]
      %v202 = vld [vmem:[%s169 + $0xc8] sm:$0xff]
      %v203 = vld [vmem:[%s169 + $0xd0] sm:$0xff]
      %v204 = vld [vmem:[%s169 + $0xd8] sm:$0xff]
      %v205 = vld [vmem:[%s169 + $0xe0] sm:$0xff]
      %v206 = vld [vmem:[%s169 + $0xe8] sm:$0xff]
      %v207 = vld [vmem:[%s169 + $0xf0] sm:$0xff]
      %v208 = vld [vmem:[%s169 + $0xf8] sm:$0xff]
      %v209 = vld [vmem:[%s1] sm:$0xf]
      %v210 = vld [vmem:[%s1 + $0x4] sm:$0xf]
      %v211 = vld [vmem:[%s1 + $0x8] sm:$0xf]
      %v212 = vld [vmem:[%s1 + $0xc] sm:$0xf]
      %v213 = vld [vmem:[%s1 + $0x10] sm:$0xf]
      %v214 = vld [vmem:[%s1 + $0x14] sm:$0xf]
      %v215 = vld [vmem:[%s1 + $0x18] sm:$0xf]
      %v216 = vld [vmem:[%s1 + $0x1c] sm:$0xf]
      %v217 = vld [vmem:[%s1 + $0x20] sm:$0xf]
      %v218 = vld [vmem:[%s1 + $0x24] sm:$0xf]
      %v219 = vld [vmem:[%s1 + $0x28] sm:$0xf]
      %v220 = vld [vmem:[%s1 + $0x2c] sm:$0xf]
      %v221 = vld [vmem:[%s1 + $0x30] sm:$0xf]
      %v222 = vld [vmem:[%s1 + $0x34] sm:$0xf]
      %v223 = vld [vmem:[%s1 + $0x38] sm:$0xf]
      %v224 = vld [vmem:[%s1 + $0x3c] sm:$0xf]
      %v225 = vld [vmem:[%s1 + $0x40] sm:$0xf]
      %v226 = vld [vmem:[%s1 + $0x44] sm:$0xf]
      %v227 = vld [vmem:[%s1 + $0x48] sm:$0xf]
      %v228 = vld [vmem:[%s1 + $0x4c] sm:$0xf]
      %v229 = vld [vmem:[%s1 + $0x50] sm:$0xf]
      %v230 = vld [vmem:[%s1 + $0x54] sm:$0xf]
      %v231 = vld [vmem:[%s1 + $0x58] sm:$0xf]
      %v232 = vld [vmem:[%s1 + $0x5c] sm:$0xf]
      %v233 = vld [vmem:[%s1 + $0x60] sm:$0xf]
      %v234 = vld [vmem:[%s1 + $0x64] sm:$0xf]
      %v235 = vld [vmem:[%s1 + $0x68] sm:$0xf]
      %v236 = vld [vmem:[%s1 + $0x6c] sm:$0xf]
      %v237 = vld [vmem:[%s1 + $0x70] sm:$0xf]
      %v238 = vld [vmem:[%s1 + $0x74] sm:$0xf]
      %v239 = vld [vmem:[%s1 + $0x78] sm:$0xf]
      %v240 = vld [vmem:[%s1 + $0x7c] sm:$0xf]
      %v241 = vld [vmem:[%s2] sm:$0x1]
      %v243 = vperm.slane %v241, 0
      %v277 = vunpack.c.l.b16 %v177
      %v278 = vunpack.c.h.b16 %v177
      %v279 = vunpack.c.l.b16 %v178
      %v280 = vunpack.c.h.b16 %v178
      %v281 = vunpack.c.l.b16 %v179
      %v282 = vunpack.c.h.b16 %v179
      %v283 = vunpack.c.l.b16 %v180
      %v284 = vunpack.c.h.b16 %v180
      %v285 = vunpack.c.l.b16 %v181
      %v286 = vunpack.c.h.b16 %v181
      %v287 = vunpack.c.l.b16 %v182
      %v288 = vunpack.c.h.b16 %v182
      %v289 = vunpack.c.l.b16 %v183
      %v290 = vunpack.c.h.b16 %v183
      %v291 = vunpack.c.l.b16 %v184
      %v292 = vunpack.c.h.b16 %v184
      %v293 = vunpack.c.l.b16 %v185
      %v294 = vunpack.c.h.b16 %v185
      %v295 = vunpack.c.l.b16 %v186
      %v296 = vunpack.c.h.b16 %v186
      %v297 = vunpack.c.l.b16 %v187
      %v298 = vunpack.c.h.b16 %v187
      %v299 = vunpack.c.l.b16 %v188
      %v300 = vunpack.c.h.b16 %v188
      %v301 = vunpack.c.l.b16 %v189
      %v302 = vunpack.c.h.b16 %v189
      %v303 = vunpack.c.l.b16 %v190
      %v304 = vunpack.c.h.b16 %v190
      %v305 = vunpack.c.l.b16 %v191
      %v306 = vunpack.c.h.b16 %v191
      %v307 = vunpack.c.l.b16 %v192
      %v308 = vunpack.c.h.b16 %v192
      %v309 = vunpack.c.l.b16 %v193
      %v310 = vunpack.c.h.b16 %v193
      %v311 = vunpack.c.l.b16 %v194
      %v312 = vunpack.c.h.b16 %v194
      %v313 = vunpack.c.l.b16 %v195
      %v314 = vunpack.c.h.b16 %v195
      %v315 = vunpack.c.l.b16 %v196
      %v316 = vunpack.c.h.b16 %v196
      %v317 = vunpack.c.l.b16 %v197
      %v318 = vunpack.c.h.b16 %v197
      %v319 = vunpack.c.l.b16 %v198
      %v320 = vunpack.c.h.b16 %v198
      %v321 = vunpack.c.l.b16 %v199
      %v322 = vunpack.c.h.b16 %v199
      %v323 = vunpack.c.l.b16 %v200
      %v324 = vunpack.c.h.b16 %v200
      %v325 = vunpack.c.l.b16 %v201
      %v326 = vunpack.c.h.b16 %v201
      %v327 = vunpack.c.l.b16 %v202
      %v328 = vunpack.c.h.b16 %v202
      %v329 = vunpack.c.l.b16 %v203
      %v330 = vunpack.c.h.b16 %v203
      %v331 = vunpack.c.l.b16 %v204
      %v332 = vunpack.c.h.b16 %v204
      %v333 = vunpack.c.l.b16 %v205
      %v334 = vunpack.c.h.b16 %v205
      %v335 = vunpack.c.l.b16 %v206
      %v336 = vunpack.c.h.b16 %v206
      %v337 = vunpack.c.l.b16 %v207
      %v338 = vunpack.c.h.b16 %v207
      %v339 = vunpack.c.l.b16 %v208
      %v340 = vunpack.c.h.b16 %v208
      %v341 = vpack.c.b16 %v279, %v277
      %v342 = vpack.c.b16 %v280, %v278
      %v343 = vpack.c.b16 %v283, %v281
      %v344 = vpack.c.b16 %v284, %v282
      %v345 = vpack.c.b16 %v287, %v285
      %v346 = vpack.c.b16 %v288, %v286
      %v347 = vpack.c.b16 %v291, %v289
      %v348 = vpack.c.b16 %v292, %v290
      %v349 = vpack.c.b16 %v295, %v293
      %v350 = vpack.c.b16 %v296, %v294
      %v351 = vpack.c.b16 %v299, %v297
      %v352 = vpack.c.b16 %v300, %v298
      %v353 = vpack.c.b16 %v303, %v301
      %v354 = vpack.c.b16 %v304, %v302
      %v355 = vpack.c.b16 %v307, %v305
      %v356 = vpack.c.b16 %v308, %v306
      %v357 = vpack.c.b16 %v311, %v309
      %v358 = vpack.c.b16 %v312, %v310
      %v359 = vpack.c.b16 %v315, %v313
      %v360 = vpack.c.b16 %v316, %v314
      %v361 = vpack.c.b16 %v319, %v317
      %v362 = vpack.c.b16 %v320, %v318
      %v363 = vpack.c.b16 %v323, %v321
      %v364 = vpack.c.b16 %v324, %v322
      %v365 = vpack.c.b16 %v327, %v325
      %v366 = vpack.c.b16 %v328, %v326
      %v367 = vpack.c.b16 %v331, %v329
      %v368 = vpack.c.b16 %v332, %v330
      %v369 = vpack.c.b16 %v335, %v333
      %v370 = vpack.c.b16 %v336, %v334
      %v371 = vpack.c.b16 %v339, %v337
      %v372 = vpack.c.b16 %v340, %v338
      %v437 = vunpack.c.l.b16 %v209
      %v438 = vunpack.c.l.b16 %v210
      %v439 = vunpack.c.l.b16 %v211
      %v440 = vunpack.c.l.b16 %v212
      %v441 = vunpack.c.l.b16 %v213
      %v442 = vunpack.c.l.b16 %v214
      %v443 = vunpack.c.l.b16 %v215
      %v444 = vunpack.c.l.b16 %v216
      %v445 = vunpack.c.l.b16 %v217
      %v446 = vunpack.c.l.b16 %v218
      %v447 = vunpack.c.l.b16 %v219
      %v448 = vunpack.c.l.b16 %v220
      %v449 = vunpack.c.l.b16 %v221
      %v450 = vunpack.c.l.b16 %v222
      %v451 = vunpack.c.l.b16 %v223
      %v452 = vunpack.c.l.b16 %v224
      %v453 = vunpack.c.l.b16 %v225
      %v454 = vunpack.c.l.b16 %v226
      %v455 = vunpack.c.l.b16 %v227
      %v456 = vunpack.c.l.b16 %v228
      %v457 = vunpack.c.l.b16 %v229
      %v458 = vunpack.c.l.b16 %v230
      %v459 = vunpack.c.l.b16 %v231
      %v460 = vunpack.c.l.b16 %v232
      %v461 = vunpack.c.l.b16 %v233
      %v462 = vunpack.c.l.b16 %v234
      %v463 = vunpack.c.l.b16 %v235
      %v464 = vunpack.c.l.b16 %v236
      %v465 = vunpack.c.l.b16 %v237
      %v466 = vunpack.c.l.b16 %v238
      %v467 = vunpack.c.l.b16 %v239
      %v468 = vunpack.c.l.b16 %v240
      %v469 = vpack.c.b16 %v438, %v437
      %v470 = vpack.c.b16 %v440, %v439
      %v471 = vpack.c.b16 %v442, %v441
      %v472 = vpack.c.b16 %v444, %v443
      %v473 = vpack.c.b16 %v446, %v445
      %v474 = vpack.c.b16 %v448, %v447
      %v475 = vpack.c.b16 %v450, %v449
      %v476 = vpack.c.b16 %v452, %v451
      %v477 = vpack.c.b16 %v454, %v453
      %v478 = vpack.c.b16 %v456, %v455
      %v479 = vpack.c.b16 %v458, %v457
      %v480 = vpack.c.b16 %v460, %v459
      %v481 = vpack.c.b16 %v462, %v461
      %v482 = vpack.c.b16 %v464, %v463
      %v483 = vpack.c.b16 %v466, %v465
      %v484 = vpack.c.b16 %v468, %v467
      %501 = vmatpush.bf16.msra.mxu0 %v476
      %502 = vmatpush.bf16.msra.mxu0 %v475
      %503 = vmatpush.bf16.msra.mxu0 %v474
      %504 = vmatpush.bf16.msra.mxu0 %v473
      %505 = vmatpush.bf16.msra.mxu0 %v472
      %506 = vmatpush.bf16.msra.mxu0 %v471
      %507 = vmatpush.bf16.msra.mxu0 %v470
      %508 = vmatpush.bf16.msra.mxu0 %v469
      %509 = vmatmul.bf16.gmra.mxu0 %v341
      %v510 = vpop.f32.mrf.mxu0
      %v511 = vadd.f32 %v243, %v510
      %v512 = vpop.f32.mrf.mxu0
      %v513 = vadd.f32 %v243, %v512
      %514 = vmatmul.bf16.gmra.mxu0 %v343
      %v515 = vpop.f32.mrf.mxu0
      %v516 = vadd.f32 %v243, %v515
      %v517 = vpop.f32.mrf.mxu0
      %v518 = vadd.f32 %v243, %v517
      %519 = vmatmul.bf16.gmra.mxu0 %v345
      %v520 = vpop.f32.mrf.mxu0
      %v521 = vadd.f32 %v243, %v520
      %v522 = vpop.f32.mrf.mxu0
      %v523 = vadd.f32 %v243, %v522
      %524 = vmatmul.bf16.gmra.mxu0 %v347
      %v525 = vpop.f32.mrf.mxu0
      %v526 = vadd.f32 %v243, %v525
      %v527 = vpop.f32.mrf.mxu0
      %v528 = vadd.f32 %v243, %v527
      %529 = vmatmul.bf16.gmra.mxu0 %v349
      %v530 = vpop.f32.mrf.mxu0
      %v531 = vadd.f32 %v243, %v530
      %v532 = vpop.f32.mrf.mxu0
      %v533 = vadd.f32 %v243, %v532
      %534 = vmatmul.bf16.gmra.mxu0 %v351
      %v535 = vpop.f32.mrf.mxu0
      %v536 = vadd.f32 %v243, %v535
      %v537 = vpop.f32.mrf.mxu0
      %v538 = vadd.f32 %v243, %v537
      %539 = vmatmul.bf16.gmra.mxu0 %v353
      %v540 = vpop.f32.mrf.mxu0
      %v541 = vadd.f32 %v243, %v540
      %v542 = vpop.f32.mrf.mxu0
      %v543 = vadd.f32 %v243, %v542
      %544 = vmatmul.bf16.gmra.mxu0 %v355
      %v545 = vpop.f32.mrf.mxu0
      %v546 = vadd.f32 %v243, %v545
      %v547 = vpop.f32.mrf.mxu0
      %v548 = vadd.f32 %v243, %v547
      %549 = vmatmul.bf16.gmra.mxu0 %v357
      %v550 = vpop.f32.mrf.mxu0
      %v551 = vadd.f32 %v243, %v550
      %v552 = vpop.f32.mrf.mxu0
      %v553 = vadd.f32 %v243, %v552
      %554 = vmatmul.bf16.gmra.mxu0 %v359
      %v555 = vpop.f32.mrf.mxu0
      %v556 = vadd.f32 %v243, %v555
      %v557 = vpop.f32.mrf.mxu0
      %v558 = vadd.f32 %v243, %v557
      %559 = vmatmul.bf16.gmra.mxu0 %v361
      %v560 = vpop.f32.mrf.mxu0
      %v561 = vadd.f32 %v243, %v560
      %v562 = vpop.f32.mrf.mxu0
      %v563 = vadd.f32 %v243, %v562
      %564 = vmatmul.bf16.gmra.mxu0 %v363
      %v565 = vpop.f32.mrf.mxu0
      %v566 = vadd.f32 %v243, %v565
      %v567 = vpop.f32.mrf.mxu0
      %v568 = vadd.f32 %v243, %v567
      %569 = vmatmul.bf16.gmra.mxu0 %v365
      %v570 = vpop.f32.mrf.mxu0
      %v571 = vadd.f32 %v243, %v570
      %v572 = vpop.f32.mrf.mxu0
      %v573 = vadd.f32 %v243, %v572
      %574 = vmatmul.bf16.gmra.mxu0 %v367
      %v575 = vpop.f32.mrf.mxu0
      %v576 = vadd.f32 %v243, %v575
      %v577 = vpop.f32.mrf.mxu0
      %v578 = vadd.f32 %v243, %v577
      %579 = vmatmul.bf16.gmra.mxu0 %v369
      %v580 = vpop.f32.mrf.mxu0
      %v581 = vadd.f32 %v243, %v580
      %v582 = vpop.f32.mrf.mxu0
      %v583 = vadd.f32 %v243, %v582
      %584 = vmatmul.bf16.gmra.mxu0 %v371
      %v585 = vpop.f32.mrf.mxu0
      %v586 = vadd.f32 %v243, %v585
      %v587 = vpop.f32.mrf.mxu0
      %v588 = vadd.f32 %v243, %v587
      %589 = vdwg.mxu0
      %590 = vmatpush.bf16.msra.mxu0 %v484
      %591 = vmatpush.bf16.msra.mxu0 %v483
      %592 = vmatpush.bf16.msra.mxu0 %v482
      %593 = vmatpush.bf16.msra.mxu0 %v481
      %594 = vmatpush.bf16.msra.mxu0 %v480
      %595 = vmatpush.bf16.msra.mxu0 %v479
      %596 = vmatpush.bf16.msra.mxu0 %v478
      %597 = vmatpush.bf16.msra.mxu0 %v477
      %598 = vmatmul.bf16.gmra.mxu0 %v342
      %v599 = vpop.f32.mrf.mxu0
      %v600 = vadd.f32 %v511, %v599
      %v601 = vpop.f32.mrf.mxu0
      %v602 = vadd.f32 %v513, %v601
      %603 = vmatmul.bf16.gmra.mxu0 %v344
      %v604 = vpop.f32.mrf.mxu0
      %v605 = vadd.f32 %v516, %v604
      %v606 = vpop.f32.mrf.mxu0
      %v607 = vadd.f32 %v518, %v606
      %608 = vmatmul.bf16.gmra.mxu0 %v346
      %v609 = vpop.f32.mrf.mxu0
      %v610 = vadd.f32 %v521, %v609
      %v611 = vpop.f32.mrf.mxu0
      %v612 = vadd.f32 %v523, %v611
      %613 = vmatmul.bf16.gmra.mxu0 %v348
      %v614 = vpop.f32.mrf.mxu0
      %v615 = vadd.f32 %v526, %v614
      %v616 = vpop.f32.mrf.mxu0
      %v617 = vadd.f32 %v528, %v616
      %618 = vmatmul.bf16.gmra.mxu0 %v350
      %v619 = vpop.f32.mrf.mxu0
      %v620 = vadd.f32 %v531, %v619
      %v621 = vpop.f32.mrf.mxu0
      %v622 = vadd.f32 %v533, %v621
      %623 = vmatmul.bf16.gmra.mxu0 %v352
      %v624 = vpop.f32.mrf.mxu0
      %v625 = vadd.f32 %v536, %v624
      %v626 = vpop.f32.mrf.mxu0
      %v627 = vadd.f32 %v538, %v626
      %628 = vmatmul.bf16.gmra.mxu0 %v354
      %v629 = vpop.f32.mrf.mxu0
      %v630 = vadd.f32 %v541, %v629
      %v631 = vpop.f32.mrf.mxu0
      %v632 = vadd.f32 %v543, %v631
      %633 = vmatmul.bf16.gmra.mxu0 %v356
      %v634 = vpop.f32.mrf.mxu0
      %v635 = vadd.f32 %v546, %v634
      %v636 = vpop.f32.mrf.mxu0
      %v637 = vadd.f32 %v548, %v636
      %638 = vmatmul.bf16.gmra.mxu0 %v358
      %v639 = vpop.f32.mrf.mxu0
      %v640 = vadd.f32 %v551, %v639
      %v641 = vpop.f32.mrf.mxu0
      %v642 = vadd.f32 %v553, %v641
      %643 = vmatmul.bf16.gmra.mxu0 %v360
      %v644 = vpop.f32.mrf.mxu0
      %v645 = vadd.f32 %v556, %v644
      %v646 = vpop.f32.mrf.mxu0
      %v647 = vadd.f32 %v558, %v646
      %648 = vmatmul.bf16.gmra.mxu0 %v362
      %v649 = vpop.f32.mrf.mxu0
      %v650 = vadd.f32 %v561, %v649
      %v651 = vpop.f32.mrf.mxu0
      %v652 = vadd.f32 %v563, %v651
      %653 = vmatmul.bf16.gmra.mxu0 %v364
      %v654 = vpop.f32.mrf.mxu0
      %v655 = vadd.f32 %v566, %v654
      %v656 = vpop.f32.mrf.mxu0
      %v657 = vadd.f32 %v568, %v656
      %658 = vmatmul.bf16.gmra.mxu0 %v366
      %v659 = vpop.f32.mrf.mxu0
      %v660 = vadd.f32 %v571, %v659
      %v661 = vpop.f32.mrf.mxu0
      %v662 = vadd.f32 %v573, %v661
      %663 = vmatmul.bf16.gmra.mxu0 %v368
      %v664 = vpop.f32.mrf.mxu0
      %v665 = vadd.f32 %v576, %v664
      %v666 = vpop.f32.mrf.mxu0
      %v667 = vadd.f32 %v578, %v666
      %668 = vmatmul.bf16.gmra.mxu0 %v370
      %v669 = vpop.f32.mrf.mxu0
      %v670 = vadd.f32 %v581, %v669
      %v671 = vpop.f32.mrf.mxu0
      %v672 = vadd.f32 %v583, %v671
      %673 = vmatmul.bf16.gmra.mxu0 %v372
      %v674 = vpop.f32.mrf.mxu0
      %v675 = vadd.f32 %v586, %v674
      %v676 = vpop.f32.mrf.mxu0
      %v677 = vadd.f32 %v588, %v676
      %678 = vdwg.mxu0
      %v679 = vmax.f32 %v600, 0.0
      %v680 = vmax.f32 %v602, 0.0
      %v681 = vmax.f32 %v605, 0.0
      %v682 = vmax.f32 %v607, 0.0
      %v683 = vmax.f32 %v610, 0.0
      %v684 = vmax.f32 %v612, 0.0
      %v685 = vmax.f32 %v615, 0.0
      %v686 = vmax.f32 %v617, 0.0
      %v687 = vmax.f32 %v620, 0.0
      %v688 = vmax.f32 %v622, 0.0
      %v689 = vmax.f32 %v625, 0.0
      %v690 = vmax.f32 %v627, 0.0
      %v691 = vmax.f32 %v630, 0.0
      %v692 = vmax.f32 %v632, 0.0
      %v693 = vmax.f32 %v635, 0.0
      %v694 = vmax.f32 %v637, 0.0
      %v695 = vmax.f32 %v640, 0.0
      %v696 = vmax.f32 %v642, 0.0
      %v697 = vmax.f32 %v645, 0.0
      %v698 = vmax.f32 %v647, 0.0
      %v699 = vmax.f32 %v650, 0.0
      %v700 = vmax.f32 %v652, 0.0
      %v701 = vmax.f32 %v655, 0.0
      %v702 = vmax.f32 %v657, 0.0
      %v703 = vmax.f32 %v660, 0.0
      %v704 = vmax.f32 %v662, 0.0
      %v705 = vmax.f32 %v665, 0.0
      %v706 = vmax.f32 %v667, 0.0
      %v707 = vmax.f32 %v670, 0.0
      %v708 = vmax.f32 %v672, 0.0
      %v709 = vmax.f32 %v675, 0.0
      %v710 = vmax.f32 %v677, 0.0
      %v711 = vpack.c.bf16 %v679, %v679
      %v712 = vpack.c.bf16 %v680, %v680
      %v713 = vpack.c.bf16 %v681, %v681
      %v714 = vpack.c.bf16 %v682, %v682
      %v715 = vpack.c.bf16 %v683, %v683
      %v716 = vpack.c.bf16 %v684, %v684
      %v717 = vpack.c.bf16 %v685, %v685
      %v718 = vpack.c.bf16 %v686, %v686
      %v719 = vpack.c.bf16 %v687, %v687
      %v720 = vpack.c.bf16 %v688, %v688
      %v721 = vpack.c.bf16 %v689, %v689
      %v722 = vpack.c.bf16 %v690, %v690
      %v723 = vpack.c.bf16 %v691, %v691
      %v724 = vpack.c.bf16 %v692, %v692
      %v725 = vpack.c.bf16 %v693, %v693
      %v726 = vpack.c.bf16 %v694, %v694
      %v727 = vpack.c.bf16 %v695, %v695
      %v728 = vpack.c.bf16 %v696, %v696
      %v729 = vpack.c.bf16 %v697, %v697
      %v730 = vpack.c.bf16 %v698, %v698
      %v731 = vpack.c.bf16 %v699, %v699
      %v732 = vpack.c.bf16 %v700, %v700
      %v733 = vpack.c.bf16 %v701, %v701
      %v734 = vpack.c.bf16 %v702, %v702
      %v735 = vpack.c.bf16 %v703, %v703
      %v736 = vpack.c.bf16 %v704, %v704
      %v737 = vpack.c.bf16 %v705, %v705
      %v738 = vpack.c.bf16 %v706, %v706
      %v739 = vpack.c.bf16 %v707, %v707
      %v740 = vpack.c.bf16 %v708, %v708
      %v741 = vpack.c.bf16 %v709, %v709
      %v742 = vpack.c.bf16 %v710, %v710
      %743 = vst [vmem:[%s175] sm:$0xf] %v711
      %744 = vst [vmem:[%s175 + $0x4] sm:$0xf] %v712
      %745 = vst [vmem:[%s175 + $0x8] sm:$0xf] %v713
      %746 = vst [vmem:[%s175 + $0xc] sm:$0xf] %v714
      %747 = vst [vmem:[%s175 + $0x10] sm:$0xf] %v715
      %748 = vst [vmem:[%s175 + $0x14] sm:$0xf] %v716
      %749 = vst [vmem:[%s175 + $0x18] sm:$0xf] %v717
      %750 = vst [vmem:[%s175 + $0x1c] sm:$0xf] %v718
      %751 = vst [vmem:[%s175 + $0x20] sm:$0xf] %v719
      %752 = vst [vmem:[%s175 + $0x24] sm:$0xf] %v720
      %753 = vst [vmem:[%s175 + $0x28] sm:$0xf] %v721
      %754 = vst [vmem:[%s175 + $0x2c] sm:$0xf] %v722
      %755 = vst [vmem:[%s175 + $0x30] sm:$0xf] %v723
      %756 = vst [vmem:[%s175 + $0x34] sm:$0xf] %v724
      %757 = vst [vmem:[%s175 + $0x38] sm:$0xf] %v725
      %758 = vst [vmem:[%s175 + $0x3c] sm:$0xf] %v726
      %759 = vst [vmem:[%s175 + $0x40] sm:$0xf] %v727
      %760 = vst [vmem:[%s175 + $0x44] sm:$0xf] %v728
      %761 = vst [vmem:[%s175 + $0x48] sm:$0xf] %v729
      %762 = vst [vmem:[%s175 + $0x4c] sm:$0xf] %v730
      %763 = vst [vmem:[%s175 + $0x50] sm:$0xf] %v731
      %764 = vst [vmem:[%s175 + $0x54] sm:$0xf] %v732
      %765 = vst [vmem:[%s175 + $0x58] sm:$0xf] %v733
      %766 = vst [vmem:[%s175 + $0x5c] sm:$0xf] %v734
      %767 = vst [vmem:[%s175 + $0x60] sm:$0xf] %v735
      %768 = vst [vmem:[%s175 + $0x64] sm:$0xf] %v736
      %769 = vst [vmem:[%s175 + $0x68] sm:$0xf] %v737
      %770 = vst [vmem:[%s175 + $0x6c] sm:$0xf] %v738
      %771 = vst [vmem:[%s175 + $0x70] sm:$0xf] %v739
      %772 = vst [vmem:[%s175 + $0x74] sm:$0xf] %v740
      %773 = vst [vmem:[%s175 + $0x78] sm:$0xf] %v741
      %774 = vst [vmem:[%s175 + $0x7c] sm:$0xf] %v742
      %s775 = smul.u32 32, %s14
      %p776 = scmp.lt.s32.totalorder %s775, 63
      %s777 = scalar_select %p776, %s775, 63
      %s778 = smul.addr %s777, 4
      %s779 = scalar_lea.vmem %s3, %s778
      // Predicated region
      $region33: #{forward.11} parent=31 // pred_check
        %p780 = pneg %p100
      $region34: #{forward.11} parent=31 // pred_check_branch
        %782 = sbr.rel (%p780) target = $region36
      $region35: #{forward.11} parent=31 // pred_region
        %s783 = smul.u32 32, %s14
      $region36: #{forward.11} parent=31 // pred_fallthru
        _
    $region32: #{forward.11} parent=5 // pred_fallthru
      _
    %p784 = scmp.le.s32.totalorder 2, %s9
    // Predicated region
    $region37: #{forward.11} parent=5 // pred_check
      %p785 = pneg %p784
    $region38: #{forward.11} parent=5 // pred_check_branch
      %787 = sbr.rel (%p785) target = $region40
    $region39: #{forward.11} parent=5 // pred_region
      %s788 = ssub.s32 %s9, 2
      // Predicated region
      $region41: #{forward.11} parent=39 // pred_check
        %p789 = pneg %p106
      $region42: #{forward.11} parent=39 // pred_check_branch
        %791 = sbr.rel (%p789) target = $region44
      $region43: #{forward.11} parent=39 // pred_region
        %s792 = smul.u32 32, %s15
        %p793 = scmp.lt.s32.totalorder %s792, 63
        %s794 = scalar_select %p793, %s792, 63
        %s795 = smul.addr %s794, 4
        %s796 = scalar_lea.vmem %s3, %s795
      $region44: #{forward.11} parent=39 // pred_fallthru
        _
    $region40: #{forward.11} parent=5 // pred_fallthru
      _
  $region6: #{forward.11} parent=0 // loop_footer
    %s13 = sadd.s32 1, %s9
  $region7: #{forward.11} parent=0 // loop_footer_branch
    %8 = sbr.rel target = $region3
  $region8: #{forward.11} parent=0 // loop_exit
    _

// kernel: forward.12
$region0: #{forward.12}
  #allocation0 [shape = 'u32[]', space=smem, size = 0x4, offset = 0x4, fixed_abs, tag = 'smem constant byte address 0x4 - core index']
  #allocation1 [shape = 'u32[72,128]{1,0:T(1,128)}', space=vmem, size = 0x9000, scoped, tag = 'internal scratch']
  %s0 = inlined_call_operand.vmem [shape: bf16[512,384], index: 0, kind: input, shape index: {}]
  %s1 = inlined_call_operand.vmem [shape: bf16[384,128], index: 1, kind: input, shape index: {}]
  %s2 = inlined_call_operand.vmem [shape: f32[1,128], index: 2, kind: input, shape index: {}]
  %s3 = inlined_call_operand.vmem [shape: bf16[512,128], index: 3, kind: output, shape index: {}]
  %s4 = sld [smem:[#allocation0]]
  $region45: #{forward.12} parent=0
    _
  %s6 = ssub.s32 1, %s4
  %s7 = scalar_select 0, %s6, %s4
  loop: start=0, step=1, limit=4
  $region2: #{forward.12} parent=0 // loop_pre_header
    _
  $region3: #{forward.12} parent=0 // loop_header
    %s9 = sphi 0, %s13
    %p10 = scmp.ge.s32.totalorder %s9, 4
    %s19 = sphi 0, %s21
    %s22 = sphi 0, %s19
    %s23 = sphi 0, %s22
    %s39 = sphi 0, %s23
    %s43 = sphi 0, %s43
    %s45 = sphi 0, %s43
    %s46 = sphi 0, %s45
    %s60 = sphi 0, %s46
    %s64 = sphi 0, %s64
    %s66 = sphi 0, %s64
    %s67 = sphi 0, %s66
    %s81 = sphi 0, %s67
    %s87 = sphi 0, %s89
    %s90 = sphi 0, %s87
    %s91 = sphi 0, %s90
    %s107 = sphi 0, %s91
  $region4: #{forward.12} parent=0 // loop_header_branch
    %12 = sbr.rel (%p10) target = $region8
  $region5: #{forward.12} parent=0 // loop_body
    %s14 = ssub.s32 %s9, 1
    %s15 = ssub.s32 %s9, 2
    %s16 = sadd.s32 %s9, 1
    %s17 = ssub.s32 %s9, %s16
    %p18 = scmp.eq.s32.totalorder %s17, 0
    %s20 = sadd.s32 %s19, 1
    %s21 = scalar_select %p18, %s19, %s20
    %p24 = pneg %p18
    %p25 = scmp.eq.s32.totalorder %s9, 1
    %p26 = por %p24, %p25
    %p27 = scmp.ne.s32.totalorder %s19, %s22
    %p28 = scmp.eq.s32.totalorder %s9, 0
    %p29 = por %p27, %p28
    %p30 = scmp.ne.s32.totalorder %s19, %s22
    %p31 = scmp.eq.s32.totalorder %s14, 1
    %p32 = por %p30, %p31
    %p33 = scmp.ne.s32.totalorder %s22, %s23
    %p34 = scmp.eq.s32.totalorder %s14, 0
    %p35 = por %p33, %p34
    %p36 = scmp.ne.s32.totalorder %s22, %s23
    %p37 = scmp.eq.s32.totalorder %s15, 1
    %p38 = por %p36, %p37
    %p40 = scmp.ne.s32.totalorder %s23, %s39
    %p41 = scmp.eq.s32.totalorder %s15, 0
    %p42 = por %p40, %p41
    %s44 = sadd.s32 %s43, 1
    %p47 = scmp.eq.s32.totalorder %s9, 1
    %p48 = scmp.ne.s32.totalorder %s43, %s45
    %p49 = scmp.eq.s32.totalorder %s9, 0
    %p50 = por %p48, %p49
    %p51 = scmp.ne.s32.totalorder %s43, %s45
    %p52 = scmp.eq.s32.totalorder %s14, 1
    %p53 = por %p51, %p52
    %p54 = scmp.ne.s32.totalorder %s45, %s46
    %p55 = scmp.eq.s32.totalorder %s14, 0
    %p56 = por %p54, %p55
    %p57 = scmp.ne.s32.totalorder %s45, %s46
    %p58 = scmp.eq.s32.totalorder %s15, 1
    %p59 = por %p57, %p58
    %p61 = scmp.ne.s32.totalorder %s46, %s60
    %p62 = scmp.eq.s32.totalorder %s15, 0
    %p63 = por %p61, %p62
    %s65 = sadd.s32 %s64, 1
    %p68 = scmp.eq.s32.totalorder %s9, 1
    %p69 = scmp.ne.s32.totalorder %s64, %s66
    %p70 = scmp.eq.s32.totalorder %s9, 0
    %p71 = por %p69, %p70
    %p72 = scmp.ne.s32.totalorder %s64, %s66
    %p73 = scmp.eq.s32.totalorder %s14, 1
    %p74 = por %p72, %p73
    %p75 = scmp.ne.s32.totalorder %s66, %s67
    %p76 = scmp.eq.s32.totalorder %s14, 0
    %p77 = por %p75, %p76
    %p78 = scmp.ne.s32.totalorder %s66, %s67
    %p79 = scmp.eq.s32.totalorder %s15, 1
    %p80 = por %p78, %p79
    %p82 = scmp.ne.s32.totalorder %s67, %s81
    %p83 = scmp.eq.s32.totalorder %s15, 0
    %p84 = por %p82, %p83
    %s85 = ssub.s32 %s9, %s16
    %p86 = scmp.eq.s32.totalorder %s85, 0
    %s88 = sadd.s32 %s87, 1
    %s89 = scalar_select %p86, %s87, %s88
    %p92 = pneg %p86
    %p93 = scmp.eq.s32.totalorder %s9, 1
    %p94 = por %p92, %p93
    %p95 = scmp.ne.s32.totalorder %s87, %s90
    %p96 = scmp.eq.s32.totalorder %s9, 0
    %p97 = por %p95, %p96
    %p98 = scmp.ne.s32.totalorder %s87, %s90
    %p99 = scmp.eq.s32.totalorder %s14, 1
    %p100 = por %p98, %p99
    %p101 = scmp.ne.s32.totalorder %s90, %s91
    %p102 = scmp.eq.s32.totalorder %s14, 0
    %p103 = por %p101, %p102
    %p104 = scmp.ne.s32.totalorder %s90, %s91
    %p105 = scmp.eq.s32.totalorder %s15, 1
    %p106 = por %p104, %p105
    %p108 = scmp.ne.s32.totalorder %s91, %s107
    %p109 = scmp.eq.s32.totalorder %s15, 0
    %p110 = por %p108, %p109
    %p111 = scmp.le.s32.totalorder 1, %s9
    %p112 = scmp.lt.s32.totalorder %s9, 3
    %p113 = pnand %p111, %p112
    %p114 = pneg %p113
    // Predicated region
    $region9: #{forward.12} parent=5 // pred_check
      _
    $region10: #{forward.12} parent=5 // pred_check_branch
      %116 = sbr.rel (%p113) target = $region12
    $region11: #{forward.12} parent=5 // pred_region
      %s117 = ssub.s32 %s9, 1
      // Predicated region
      $region13: #{forward.12} parent=11 // pred_check
        %p118 = pneg %p56
      $region14: #{forward.12} parent=11 // pred_check_branch
        %120 = sbr.rel (%p118) target = $region16
      $region15: #{forward.12} parent=11 // pred_region
        _
      $region16: #{forward.12} parent=11 // pred_fallthru
        _
      // Predicated region
      $region17: #{forward.12} parent=11 // pred_check
        %p121 = pneg %p77
      $region18: #{forward.12} parent=11 // pred_check_branch
        %123 = sbr.rel (%p121) target = $region20
      $region19: #{forward.12} parent=11 // pred_region
        _
      $region20: #{forward.12} parent=11 // pred_fallthru
        _
    $region12: #{forward.12} parent=5 // pred_fallthru
      _
    %p124 = scmp.lt.s32.totalorder %s9, 2
    // Predicated region
    $region21: #{forward.12} parent=5 // pred_check
      %p125 = pneg %p124
    $region22: #{forward.12} parent=5 // pred_check_branch
      %127 = sbr.rel (%p125) target = $region24
    $region23: #{forward.12} parent=5 // pred_region
      // Predicated region
      $region25: #{forward.12} parent=23 // pred_check
        %p128 = pneg %p29
      $region26: #{forward.12} parent=23 // pred_check_branch
        %130 = sbr.rel (%p128) target = $region28
      $region27: #{forward.12} parent=23 // pred_region
        %s131 = smul.u32 32, %s9
        %p132 = scmp.lt.s32.totalorder %s131, 63
        %s133 = scalar_select %p132, %s131, 63
        %s134 = smul.addr %s133, 3
        %s135 = smul.addr %s134, 4
        %s136 = scalar_lea.vmem %s0, %s135
        %s137 = smul.u32 32, %s9
      $region28: #{forward.12} parent=23 // pred_fallthru
        _
    $region24: #{forward.12} parent=5 // pred_fallthru
      _
    %p138 = scmp.le.s32.totalorder 1, %s9
    %p139 = scmp.lt.s32.totalorder %s9, 3
    %p140 = pnand %p138, %p139
    %p141 = pneg %p140
    // Predicated region
    $region29: #{forward.12} parent=5 // pred_check
      _
    $region30: #{forward.12} parent=5 // pred_check_branch
      %143 = sbr.rel (%p140) target = $region32
    $region31: #{forward.12} parent=5 // pred_region
      %s144 = ssub.s32 %s9, 1
      %s145 = smul.u32 32, %s14
      %p146 = scmp.lt.s32.totalorder %s145, 63
      %s147 = scalar_select %p146, %s145, 63
      %s148 = smul.addr %s147, 3
      %s149 = smul.addr %s148, 4
      %s150 = scalar_lea.vmem %s0, %s149
      %p151 = pneg %p35
      %p152 = pneg %p32
      %p153 = pneg %p56
      %p154 = pneg %p53
      %p155 = pneg %p77
      %p156 = pneg %p74
      %p157 = pneg %p103
      %p158 = pneg %p100
      %s159 = smul.u32 32, %s14
      %p160 = scmp.lt.s32.totalorder %s159, 63
      %s161 = scalar_select %p160, %s159, 63
      %s162 = smul.addr %s161, 4
      %s163 = scalar_lea.vmem %s3, %s162
      %s164 = smul.u32 32, %s14
      %p165 = scmp.lt.s32.totalorder %s164, 63
      %s166 = scalar_select %p165, %s164, 63
      %s167 = smul.addr %s166, 3
      %s168 = smul.addr %s167, 4
      %s169 = scalar_lea.vmem %s0, %s168
      %s170 = smul.u32 32, %s14
      %s171 = smul.u32 32, %s14
      %p172 = scmp.lt.s32.totalorder %s171, 63
      %s173 = scalar_select %p172, %s171, 63
      %s174 = smul.addr %s173, 4
      %s175 = scalar_lea.vmem %s3, %s174
      %s176 = smul.u32 32, %s14
      %v177 = vld [vmem:[%s169] sm:$0xff]
      %v178 = vld [vmem:[%s169 + $0x8] sm:$0xf]
      %v179 = vld [vmem:[%s169 + $0xc] sm:$0xff]
      %v180 = vld [vmem:[%s169 + $0x14] sm:$0xf]
      %v181 = vld [vmem:[%s169 + $0x18] sm:$0xff]
      %v182 = vld [vmem:[%s169 + $0x20] sm:$0xf]
      %v183 = vld [vmem:[%s169 + $0x24] sm:$0xff]
      %v184 = vld [vmem:[%s169 + $0x2c] sm:$0xf]
      %v185 = vld [vmem:[%s169 + $0x30] sm:$0xff]
      %v186 = vld [vmem:[%s169 + $0x38] sm:$0xf]
      %v187 = vld [vmem:[%s169 + $0x3c] sm:$0xff]
      %v188 = vld [vmem:[%s169 + $0x44] sm:$0xf]
      %v189 = vld [vmem:[%s169 + $0x48] sm:$0xff]
      %v190 = vld [vmem:[%s169 + $0x50] sm:$0xf]
      %v191 = vld [vmem:[%s169 + $0x54] sm:$0xff]
      %v192 = vld [vmem:[%s169 + $0x5c] sm:$0xf]
      %v193 = vld [vmem:[%s169 + $0x60] sm:$0xff]
      %v194 = vld [vmem:[%s169 + $0x68] sm:$0xf]
      %v195 = vld [vmem:[%s169 + $0x6c] sm:$0xff]
      %v196 = vld [vmem:[%s169 + $0x74] sm:$0xf]
      %v197 = vld [vmem:[%s169 + $0x78] sm:$0xff]
      %v198 = vld [vmem:[%s169 + $0x80] sm:$0xf]
      %v199 = vld [vmem:[%s169 + $0x84] sm:$0xff]
      %v200 = vld [vmem:[%s169 + $0x8c] sm:$0xf]
      %v201 = vld [vmem:[%s169 + $0x90] sm:$0xff]
      %v202 = vld [vmem:[%s169 + $0x98] sm:$0xf]
      %v203 = vld [vmem:[%s169 + $0x9c] sm:$0xff]
      %v204 = vld [vmem:[%s169 + $0xa4] sm:$0xf]
      %v205 = vld [vmem:[%s169 + $0xa8] sm:$0xff]
      %v206 = vld [vmem:[%s169 + $0xb0] sm:$0xf]
      %v207 = vld [vmem:[%s169 + $0xb4] sm:$0xff]
      %v208 = vld [vmem:[%s169 + $0xbc] sm:$0xf]
      %v209 = vld [vmem:[%s169 + $0xc0] sm:$0xff]
      %v210 = vld [vmem:[%s169 + $0xc8] sm:$0xf]
      %v211 = vld [vmem:[%s169 + $0xcc] sm:$0xff]
      %v212 = vld [vmem:[%s169 + $0xd4] sm:$0xf]
      %v213 = vld [vmem:[%s169 + $0xd8] sm:$0xff]
      %v214 = vld [vmem:[%s169 + $0xe0] sm:$0xf]
      %v215 = vld [vmem:[%s169 + $0xe4] sm:$0xff]
      %v216 = vld [vmem:[%s169 + $0xec] sm:$0xf]
      %v217 = vld [vmem:[%s169 + $0xf0] sm:$0xff]
      %v218 = vld [vmem:[%s169 + $0xf8] sm:$0xf]
      %v219 = vld [vmem:[%s169 + $0xfc] sm:$0xff]
      %v220 = vld [vmem:[%s169 + $0x104] sm:$0xf]
      %v221 = vld [vmem:[%s169 + $0x108] sm:$0xff]
      %v222 = vld [vmem:[%s169 + $0x110] sm:$0xf]
      %v223 = vld [vmem:[%s169 + $0x114] sm:$0xff]
      %v224 = vld [vmem:[%s169 + $0x11c] sm:$0xf]
      %v225 = vld [vmem:[%s169 + $0x120] sm:$0xff]
      %v226 = vld [vmem:[%s169 + $0x128] sm:$0xf]
      %v227 = vld [vmem:[%s169 + $0x12c] sm:$0xff]
      %v228 = vld [vmem:[%s169 + $0x134] sm:$0xf]
      %v229 = vld [vmem:[%s169 + $0x138] sm:$0xff]
      %v230 = vld [vmem:[%s169 + $0x140] sm:$0xf]
      %v231 = vld [vmem:[%s169 + $0x144] sm:$0xff]
      %v232 = vld [vmem:[%s169 + $0x14c] sm:$0xf]
      %v233 = vld [vmem:[%s169 + $0x150] sm:$0xff]
      %v234 = vld [vmem:[%s169 + $0x158] sm:$0xf]
      %v235 = vld [vmem:[%s169 + $0x15c] sm:$0xff]
      %v236 = vld [vmem:[%s169 + $0x164] sm:$0xf]
      %v237 = vld [vmem:[%s169 + $0x168] sm:$0xff]
      %v238 = vld [vmem:[%s169 + $0x170] sm:$0xf]
      %v239 = vld [vmem:[%s169 + $0x174] sm:$0xff]
      %v240 = vld [vmem:[%s169 + $0x17c] sm:$0xf]
      %v241 = vld [vmem:[%s1] sm:$0xf]
      %v242 = vld [vmem:[%s1 + $0x4] sm:$0xf]
      %v243 = vld [vmem:[%s1 + $0x8] sm:$0xf]
      %v244 = vld [vmem:[%s1 + $0xc] sm:$0xf]
      %v245 = vld [vmem:[%s1 + $0x10] sm:$0xf]
      %v246 = vld [vmem:[%s1 + $0x14] sm:$0xf]
      %v247 = vld [vmem:[%s1 + $0x18] sm:$0xf]
      %v248 = vld [vmem:[%s1 + $0x1c] sm:$0xf]
      %v249 = vld [vmem:[%s1 + $0x20] sm:$0xf]
      %v250 = vld [vmem:[%s1 + $0x24] sm:$0xf]
      %v251 = vld [vmem:[%s1 + $0x28] sm:$0xf]
      %v252 = vld [vmem:[%s1 + $0x2c] sm:$0xf]
      %v253 = vld [vmem:[%s1 + $0x30] sm:$0xf]
      %v254 = vld [vmem:[%s1 + $0x34] sm:$0xf]
      %v255 = vld [vmem:[%s1 + $0x38] sm:$0xf]
      %v256 = vld [vmem:[%s1 + $0x3c] sm:$0xf]
      %v257 = vld [vmem:[%s1 + $0x40] sm:$0xf]
      %v258 = vld [vmem:[%s1 + $0x44] sm:$0xf]
      %v259 = vld [vmem:[%s1 + $0x48] sm:$0xf]
      %v260 = vld [vmem:[%s1 + $0x4c] sm:$0xf]
      %v261 = vld [vmem:[%s1 + $0x50] sm:$0xf]
      %v262 = vld [vmem:[%s1 + $0x54] sm:$0xf]
      %v263 = vld [vmem:[%s1 + $0x58] sm:$0xf]
      %v264 = vld [vmem:[%s1 + $0x5c] sm:$0xf]
      %v265 = vld [vmem:[%s1 + $0x60] sm:$0xf]
      %v266 = vld [vmem:[%s1 + $0x64] sm:$0xf]
      %v267 = vld [vmem:[%s1 + $0x68] sm:$0xf]
      %v268 = vld [vmem:[%s1 + $0x6c] sm:$0xf]
      %v269 = vld [vmem:[%s1 + $0x70] sm:$0xf]
      %v270 = vld [vmem:[%s1 + $0x74] sm:$0xf]
      %v271 = vld [vmem:[%s1 + $0x78] sm:$0xf]
      %v272 = vld [vmem:[%s1 + $0x7c] sm:$0xf]
      %v273 = vld [vmem:[%s1 + $0x80] sm:$0xf]
      %v274 = vld [vmem:[%s1 + $0x84] sm:$0xf]
      %v275 = vld [vmem:[%s1 + $0x88] sm:$0xf]
      %v276 = vld [vmem:[%s1 + $0x8c] sm:$0xf]
      %v277 = vld [vmem:[%s1 + $0x90] sm:$0xf]
      %v278 = vld [vmem:[%s1 + $0x94] sm:$0xf]
      %v279 = vld [vmem:[%s1 + $0x98] sm:$0xf]
      %v280 = vld [vmem:[%s1 + $0x9c] sm:$0xf]
      %v281 = vld [vmem:[%s1 + $0xa0] sm:$0xf]
      %v282 = vld [vmem:[%s1 + $0xa4] sm:$0xf]
      %v283 = vld [vmem:[%s1 + $0xa8] sm:$0xf]
      %v284 = vld [vmem:[%s1 + $0xac] sm:$0xf]
      %v285 = vld [vmem:[%s1 + $0xb0] sm:$0xf]
      %v286 = vld [vmem:[%s1 + $0xb4] sm:$0xf]
      %v287 = vld [vmem:[%s1 + $0xb8] sm:$0xf]
      %v288 = vld [vmem:[%s1 + $0xbc] sm:$0xf]
      %v289 = vld [vmem:[%s2] sm:$0x1]
      %v291 = vperm.slane %v289, 0
      %v357 = vunpack.c.l.b16 %v177
      %v358 = vunpack.c.h.b16 %v177
      %v359 = vunpack.c.l.b16 %v178
      %v360 = vunpack.c.l.b16 %v179
      %v361 = vunpack.c.h.b16 %v179
      %v362 = vunpack.c.l.b16 %v180
      %v363 = vunpack.c.l.b16 %v181
      %v364 = vunpack.c.h.b16 %v181
      %v365 = vunpack.c.l.b16 %v182
      %v366 = vunpack.c.l.b16 %v183
      %v367 = vunpack.c.h.b16 %v183
      %v368 = vunpack.c.l.b16 %v184
      %v369 = vunpack.c.l.b16 %v185
      %v370 = vunpack.c.h.b16 %v185
      %v371 = vunpack.c.l.b16 %v186
      %v372 = vunpack.c.l.b16 %v187
      %v373 = vunpack.c.h.b16 %v187
      %v374 = vunpack.c.l.b16 %v188
      %v375 = vunpack.c.l.b16 %v189
      %v376 = vunpack.c.h.b16 %v189
      %v377 = vunpack.c.l.b16 %v190
      %v378 = vunpack.c.l.b16 %v191
      %v379 = vunpack.c.h.b16 %v191
      %v380 = vunpack.c.l.b16 %v192
      %v381 = vunpack.c.l.b16 %v193
      %v382 = vunpack.c.h.b16 %v193
      %v383 = vunpack.c.l.b16 %v194
      %v384 = vunpack.c.l.b16 %v195
      %v385 = vunpack.c.h.b16 %v195
      %v386 = vunpack.c.l.b16 %v196
      %v387 = vunpack.c.l.b16 %v197
      %v388 = vunpack.c.h.b16 %v197
      %v389 = vunpack.c.l.b16 %v198
      %v390 = vunpack.c.l.b16 %v199
      %v391 = vunpack.c.h.b16 %v199
      %v392 = vunpack.c.l.b16 %v200
      %v393 = vunpack.c.l.b16 %v201
      %v394 = vunpack.c.h.b16 %v201
      %v395 = vunpack.c.l.b16 %v202
      %v396 = vunpack.c.l.b16 %v203
      %v397 = vunpack.c.h.b16 %v203
      %v398 = vunpack.c.l.b16 %v204
      %v399 = vunpack.c.l.b16 %v205
      %v400 = vunpack.c.h.b16 %v205
      %v401 = vunpack.c.l.b16 %v206
      %v402 = vunpack.c.l.b16 %v207
      %v403 = vunpack.c.h.b16 %v207
      %v404 = vunpack.c.l.b16 %v208
      %v405 = vunpack.c.l.b16 %v209
      %v406 = vunpack.c.h.b16 %v209
      %v407 = vunpack.c.l.b16 %v210
      %v408 = vunpack.c.l.b16 %v211
      %v409 = vunpack.c.h.b16 %v211
      %v410 = vunpack.c.l.b16 %v212
      %v411 = vunpack.c.l.b16 %v213
      %v412 = vunpack.c.h.b16 %v213
      %v413 = vunpack.c.l.b16 %v214
      %v414 = vunpack.c.l.b16 %v215
      %v415 = vunpack.c.h.b16 %v215
      %v416 = vunpack.c.l.b16 %v216
      %v417 = vunpack.c.l.b16 %v217
      %v418 = vunpack.c.h.b16 %v217
      %v419 = vunpack.c.l.b16 %v218
      %v420 = vunpack.c.l.b16 %v219
      %v421 = vunpack.c.h.b16 %v219
      %v422 = vunpack.c.l.b16 %v220
      %v423 = vunpack.c.l.b16 %v221
      %v424 = vunpack.c.h.b16 %v221
      %v425 = vunpack.c.l.b16 %v222
      %v426 = vunpack.c.l.b16 %v223
      %v427 = vunpack.c.h.b16 %v223
      %v428 = vunpack.c.l.b16 %v224
      %v429 = vunpack.c.l.b16 %v225
      %v430 = vunpack.c.h.b16 %v225
      %v431 = vunpack.c.l.b16 %v226
      %v432 = vunpack.c.l.b16 %v227
      %v433 = vunpack.c.h.b16 %v227
      %v434 = vunpack.c.l.b16 %v228
      %v435 = vunpack.c.l.b16 %v229
      %v436 = vunpack.c.h.b16 %v229
      %v437 = vunpack.c.l.b16 %v230
      %v438 = vunpack.c.l.b16 %v231
      %v439 = vunpack.c.h.b16 %v231
      %v440 = vunpack.c.l.b16 %v232
      %v441 = vunpack.c.l.b16 %v233
      %v442 = vunpack.c.h.b16 %v233
      %v443 = vunpack.c.l.b16 %v234
      %v444 = vunpack.c.l.b16 %v235
      %v445 = vunpack.c.h.b16 %v235
      %v446 = vunpack.c.l.b16 %v236
      %v447 = vunpack.c.l.b16 %v237
      %v448 = vunpack.c.h.b16 %v237
      %v449 = vunpack.c.l.b16 %v238
      %v450 = vunpack.c.l.b16 %v239
      %v451 = vunpack.c.h.b16 %v239
      %v452 = vunpack.c.l.b16 %v240
      %v453 = vpack.c.b16 %v360, %v357
      %v454 = vpack.c.b16 %v361, %v358
      %v455 = vpack.c.b16 %v362, %v359
      %v456 = vpack.c.b16 %v366, %v363
      %v457 = vpack.c.b16 %v367, %v364
      %v458 = vpack.c.b16 %v368, %v365
      %v459 = vpack.c.b16 %v372, %v369
      %v460 = vpack.c.b16 %v373, %v370
      %v461 = vpack.c.b16 %v374, %v371
      %v462 = vpack.c.b16 %v378, %v375
      %v463 = vpack.c.b16 %v379, %v376
      %v464 = vpack.c.b16 %v380, %v377
      %v465 = vpack.c.b16 %v384, %v381
      %v466 = vpack.c.b16 %v385, %v382
      %v467 = vpack.c.b16 %v386, %v383
      %v468 = vpack.c.b16 %v390, %v387
      %v469 = vpack.c.b16 %v391, %v388
      %v470 = vpack.c.b16 %v392, %v389
      %v471 = vpack.c.b16 %v396, %v393
      %v472 = vpack.c.b16 %v397, %v394
      %v473 = vpack.c.b16 %v398, %v395
      %v474 = vpack.c.b16 %v402, %v399
      %v475 = vpack.c.b16 %v403, %v400
      %v476 = vpack.c.b16 %v404, %v401
      %v477 = vpack.c.b16 %v408, %v405
      %v478 = vpack.c.b16 %v409, %v406
      %v479 = vpack.c.b16 %v410, %v407
      %v480 = vpack.c.b16 %v414, %v411
      %v481 = vpack.c.b16 %v415, %v412
      %v482 = vpack.c.b16 %v416, %v413
      %v483 = vpack.c.b16 %v420, %v417
      %v484 = vpack.c.b16 %v421, %v418
      %v485 = vpack.c.b16 %v422, %v419
      %v486 = vpack.c.b16 %v426, %v423
      %v487 = vpack.c.b16 %v427, %v424
      %v488 = vpack.c.b16 %v428, %v425
      %v489 = vpack.c.b16 %v432, %v429
      %v490 = vpack.c.b16 %v433, %v430
      %v491 = vpack.c.b16 %v434, %v431
      %v492 = vpack.c.b16 %v438, %v435
      %v493 = vpack.c.b16 %v439, %v436
      %v494 = vpack.c.b16 %v440, %v437
      %v495 = vpack.c.b16 %v444, %v441
      %v496 = vpack.c.b16 %v445, %v442
      %v497 = vpack.c.b16 %v446, %v443
      %v498 = vpack.c.b16 %v450, %v447
      %v499 = vpack.c.b16 %v451, %v448
      %v500 = vpack.c.b16 %v452, %v449
      %v597 = vunpack.c.l.b16 %v241
      %v598 = vunpack.c.l.b16 %v242
      %v599 = vunpack.c.l.b16 %v243
      %v600 = vunpack.c.l.b16 %v244
      %v601 = vunpack.c.l.b16 %v245
      %v602 = vunpack.c.l.b16 %v246
      %v603 = vunpack.c.l.b16 %v247
      %v604 = vunpack.c.l.b16 %v248
      %v605 = vunpack.c.l.b16 %v249
      %v606 = vunpack.c.l.b16 %v250
      %v607 = vunpack.c.l.b16 %v251
      %v608 = vunpack.c.l.b16 %v252
      %v609 = vunpack.c.l.b16 %v253
      %v610 = vunpack.c.l.b16 %v254
      %v611 = vunpack.c.l.b16 %v255
      %v612 = vunpack.c.l.b16 %v256
      %v613 = vunpack.c.l.b16 %v257
      %v614 = vunpack.c.l.b16 %v258
      %v615 = vunpack.c.l.b16 %v259
      %v616 = vunpack.c.l.b16 %v260
      %v617 = vunpack.c.l.b16 %v261
      %v618 = vunpack.c.l.b16 %v262
      %v619 = vunpack.c.l.b16 %v263
      %v620 = vunpack.c.l.b16 %v264
      %v621 = vunpack.c.l.b16 %v265
      %v622 = vunpack.c.l.b16 %v266
      %v623 = vunpack.c.l.b16 %v267
      %v624 = vunpack.c.l.b16 %v268
      %v625 = vunpack.c.l.b16 %v269
      %v626 = vunpack.c.l.b16 %v270
      %v627 = vunpack.c.l.b16 %v271
      %v628 = vunpack.c.l.b16 %v272
      %v629 = vunpack.c.l.b16 %v273
      %v630 = vunpack.c.l.b16 %v274
      %v631 = vunpack.c.l.b16 %v275
      %v632 = vunpack.c.l.b16 %v276
      %v633 = vunpack.c.l.b16 %v277
      %v634 = vunpack.c.l.b16 %v278
      %v635 = vunpack.c.l.b16 %v279
      %v636 = vunpack.c.l.b16 %v280
      %v637 = vunpack.c.l.b16 %v281
      %v638 = vunpack.c.l.b16 %v282
      %v639 = vunpack.c.l.b16 %v283
      %v640 = vunpack.c.l.b16 %v284
      %v641 = vunpack.c.l.b16 %v285
      %v642 = vunpack.c.l.b16 %v286
      %v643 = vunpack.c.l.b16 %v287
      %v644 = vunpack.c.l.b16 %v288
      %v645 = vpack.c.b16 %v598, %v597
      %v646 = vpack.c.b16 %v600, %v599
      %v647 = vpack.c.b16 %v602, %v601
      %v648 = vpack.c.b16 %v604, %v603
      %v649 = vpack.c.b16 %v606, %v605
      %v650 = vpack.c.b16 %v608, %v607
      %v651 = vpack.c.b16 %v610, %v609
      %v652 = vpack.c.b16 %v612, %v611
      %v653 = vpack.c.b16 %v614, %v613
      %v654 = vpack.c.b16 %v616, %v615
      %v655 = vpack.c.b16 %v618, %v617
      %v656 = vpack.c.b16 %v620, %v619
      %v657 = vpack.c.b16 %v622, %v621
      %v658 = vpack.c.b16 %v624, %v623
      %v659 = vpack.c.b16 %v626, %v625
      %v660 = vpack.c.b16 %v628, %v627
      %v661 = vpack.c.b16 %v630, %v629
      %v662 = vpack.c.b16 %v632, %v631
      %v663 = vpack.c.b16 %v634, %v633
      %v664 = vpack.c.b16 %v636, %v635
      %v665 = vpack.c.b16 %v638, %v637
      %v666 = vpack.c.b16 %v640, %v639
      %v667 = vpack.c.b16 %v642, %v641
      %v668 = vpack.c.b16 %v644, %v643
      %693 = vmatpush.bf16.msra.mxu0 %v652
      %694 = vmatpush.bf16.msra.mxu0 %v651
      %695 = vmatpush.bf16.msra.mxu0 %v650
      %696 = vmatpush.bf16.msra.mxu0 %v649
      %697 = vmatpush.bf16.msra.mxu0 %v648
      %698 = vmatpush.bf16.msra.mxu0 %v647
      %699 = vmatpush.bf16.msra.mxu0 %v646
      %700 = vmatpush.bf16.msra.mxu0 %v645
      %701 = vmatmul.bf16.gmra.mxu0 %v453
      %v702 = vpop.f32.mrf.mxu0
      %v703 = vadd.f32 %v291, %v702
      %v704 = vpop.f32.mrf.mxu0
      %v705 = vadd.f32 %v291, %v704
      %706 = vmatmul.bf16.gmra.mxu0 %v456
      %v707 = vpop.f32.mrf.mxu0
      %v708 = vadd.f32 %v291, %v707
      %v709 = vpop.f32.mrf.mxu0
      %v710 = vadd.f32 %v291, %v709
      %711 = vmatmul.bf16.gmra.mxu0 %v459
      %v712 = vpop.f32.mrf.mxu0
      %v713 = vadd.f32 %v291, %v712
      %v714 = vpop.f32.mrf.mxu0
      %v715 = vadd.f32 %v291, %v714
      %716 = vmatmul.bf16.gmra.mxu0 %v462
      %v717 = vpop.f32.mrf.mxu0
      %v718 = vadd.f32 %v291, %v717
      %v719 = vpop.f32.mrf.mxu0
      %v720 = vadd.f32 %v291, %v719
      %721 = vmatmul.bf16.gmra.mxu0 %v465
      %v722 = vpop.f32.mrf.mxu0
      %v723 = vadd.f32 %v291, %v722
      %v724 = vpop.f32.mrf.mxu0
      %v725 = vadd.f32 %v291, %v724
      %726 = vmatmul.bf16.gmra.mxu0 %v468
      %v727 = vpop.f32.mrf.mxu0
      %v728 = vadd.f32 %v291, %v727
      %v729 = vpop.f32.mrf.mxu0
      %v730 = vadd.f32 %v291, %v729
      %731 = vmatmul.bf16.gmra.mxu0 %v471
      %v732 = vpop.f32.mrf.mxu0
      %v733 = vadd.f32 %v291, %v732
      %v734 = vpop.f32.mrf.mxu0
      %v735 = vadd.f32 %v291, %v734
      %736 = vmatmul.bf16.gmra.mxu0 %v474
      %v737 = vpop.f32.mrf.mxu0
      %v738 = vadd.f32 %v291, %v737
      %v739 = vpop.f32.mrf.mxu0
      %v740 = vadd.f32 %v291, %v739
      %741 = vmatmul.bf16.gmra.mxu0 %v477
      %v742 = vpop.f32.mrf.mxu0
      %v743 = vadd.f32 %v291, %v742
      %v744 = vpop.f32.mrf.mxu0
      %v745 = vadd.f32 %v291, %v744
      %746 = vmatmul.bf16.gmra.mxu0 %v480
      %v747 = vpop.f32.mrf.mxu0
      %v748 = vadd.f32 %v291, %v747
      %v749 = vpop.f32.mrf.mxu0
      %v750 = vadd.f32 %v291, %v749
      %751 = vmatmul.bf16.gmra.mxu0 %v483
      %v752 = vpop.f32.mrf.mxu0
      %v753 = vadd.f32 %v291, %v752
      %v754 = vpop.f32.mrf.mxu0
      %v755 = vadd.f32 %v291, %v754
      %756 = vmatmul.bf16.gmra.mxu0 %v486
      %v757 = vpop.f32.mrf.mxu0
      %v758 = vadd.f32 %v291, %v757
      %v759 = vpop.f32.mrf.mxu0
      %v760 = vadd.f32 %v291, %v759
      %761 = vmatmul.bf16.gmra.mxu0 %v489
      %v762 = vpop.f32.mrf.mxu0
      %v763 = vadd.f32 %v291, %v762
      %v764 = vpop.f32.mrf.mxu0
      %v765 = vadd.f32 %v291, %v764
      %766 = vmatmul.bf16.gmra.mxu0 %v492
      %v767 = vpop.f32.mrf.mxu0
      %v768 = vadd.f32 %v291, %v767
      %v769 = vpop.f32.mrf.mxu0
      %v770 = vadd.f32 %v291, %v769
      %771 = vmatmul.bf16.gmra.mxu0 %v495
      %v772 = vpop.f32.mrf.mxu0
      %v773 = vadd.f32 %v291, %v772
      %v774 = vpop.f32.mrf.mxu0
      %v775 = vadd.f32 %v291, %v774
      %776 = vmatmul.bf16.gmra.mxu0 %v498
      %v777 = vpop.f32.mrf.mxu0
      %v778 = vadd.f32 %v291, %v777
      %v779 = vpop.f32.mrf.mxu0
      %v780 = vadd.f32 %v291, %v779
      %781 = vdwg.mxu0
      %782 = vmatpush.bf16.msra.mxu0 %v660
      %783 = vmatpush.bf16.msra.mxu0 %v659
      %784 = vmatpush.bf16.msra.mxu0 %v658
      %785 = vmatpush.bf16.msra.mxu0 %v657
      %786 = vmatpush.bf16.msra.mxu0 %v656
      %787 = vmatpush.bf16.msra.mxu0 %v655
      %788 = vmatpush.bf16.msra.mxu0 %v654
      %789 = vmatpush.bf16.msra.mxu0 %v653
      %790 = vmatmul.bf16.gmra.mxu0 %v454
      %v791 = vpop.f32.mrf.mxu0
      %v792 = vadd.f32 %v703, %v791
      %v793 = vpop.f32.mrf.mxu0
      %v794 = vadd.f32 %v705, %v793
      %795 = vmatmul.bf16.gmra.mxu0 %v457
      %v796 = vpop.f32.mrf.mxu0
      %v797 = vadd.f32 %v708, %v796
      %v798 = vpop.f32.mrf.mxu0
      %v799 = vadd.f32 %v710, %v798
      %800 = vmatmul.bf16.gmra.mxu0 %v460
      %v801 = vpop.f32.mrf.mxu0
      %v802 = vadd.f32 %v713, %v801
      %v803 = vpop.f32.mrf.mxu0
      %v804 = vadd.f32 %v715, %v803
      %805 = vmatmul.bf16.gmra.mxu0 %v463
      %v806 = vpop.f32.mrf.mxu0
      %v807 = vadd.f32 %v718, %v806
      %v808 = vpop.f32.mrf.mxu0
      %v809 = vadd.f32 %v720, %v808
      %810 = vmatmul.bf16.gmra.mxu0 %v466
      %v811 = vpop.f32.mrf.mxu0
      %v812 = vadd.f32 %v723, %v811
      %v813 = vpop.f32.mrf.mxu0
      %v814 = vadd.f32 %v725, %v813
      %815 = vmatmul.bf16.gmra.mxu0 %v469
      %v816 = vpop.f32.mrf.mxu0
      %v817 = vadd.f32 %v728, %v816
      %v818 = vpop.f32.mrf.mxu0
      %v819 = vadd.f32 %v730, %v818
      %820 = vmatmul.bf16.gmra.mxu0 %v472
      %v821 = vpop.f32.mrf.mxu0
      %v822 = vadd.f32 %v733, %v821
      %v823 = vpop.f32.mrf.mxu0
      %v824 = vadd.f32 %v735, %v823
      %825 = vmatmul.bf16.gmra.mxu0 %v475
      %v826 = vpop.f32.mrf.mxu0
      %v827 = vadd.f32 %v738, %v826
      %v828 = vpop.f32.mrf.mxu0
      %v829 = vadd.f32 %v740, %v828
      %830 = vmatmul.bf16.gmra.mxu0 %v478
      %v831 = vpop.f32.mrf.mxu0
      %v832 = vadd.f32 %v743, %v831
      %v833 = vpop.f32.mrf.mxu0
      %v834 = vadd.f32 %v745, %v833
      %835 = vmatmul.bf16.gmra.mxu0 %v481
      %v836 = vpop.f32.mrf.mxu0
      %v837 = vadd.f32 %v748, %v836
      %v838 = vpop.f32.mrf.mxu0
      %v839 = vadd.f32 %v750, %v838
      %840 = vmatmul.bf16.gmra.mxu0 %v484
      %v841 = vpop.f32.mrf.mxu0
      %v842 = vadd.f32 %v753, %v841
      %v843 = vpop.f32.mrf.mxu0
      %v844 = vadd.f32 %v755, %v843
      %845 = vmatmul.bf16.gmra.mxu0 %v487
      %v846 = vpop.f32.mrf.mxu0
      %v847 = vadd.f32 %v758, %v846
      %v848 = vpop.f32.mrf.mxu0
      %v849 = vadd.f32 %v760, %v848
      %850 = vmatmul.bf16.gmra.mxu0 %v490
      %v851 = vpop.f32.mrf.mxu0
      %v852 = vadd.f32 %v763, %v851
      %v853 = vpop.f32.mrf.mxu0
      %v854 = vadd.f32 %v765, %v853
      %855 = vmatmul.bf16.gmra.mxu0 %v493
      %v856 = vpop.f32.mrf.mxu0
      %v857 = vadd.f32 %v768, %v856
      %v858 = vpop.f32.mrf.mxu0
      %v859 = vadd.f32 %v770, %v858
      %860 = vmatmul.bf16.gmra.mxu0 %v496
      %v861 = vpop.f32.mrf.mxu0
      %v862 = vadd.f32 %v773, %v861
      %v863 = vpop.f32.mrf.mxu0
      %v864 = vadd.f32 %v775, %v863
      %865 = vmatmul.bf16.gmra.mxu0 %v499
      %v866 = vpop.f32.mrf.mxu0
      %v867 = vadd.f32 %v778, %v866
      %v868 = vpop.f32.mrf.mxu0
      %v869 = vadd.f32 %v780, %v868
      %870 = vdwg.mxu0
      %871 = vmatpush.bf16.msra.mxu0 %v668
      %872 = vmatpush.bf16.msra.mxu0 %v667
      %873 = vmatpush.bf16.msra.mxu0 %v666
      %874 = vmatpush.bf16.msra.mxu0 %v665
      %875 = vmatpush.bf16.msra.mxu0 %v664
      %876 = vmatpush.bf16.msra.mxu0 %v663
      %877 = vmatpush.bf16.msra.mxu0 %v662
      %878 = vmatpush.bf16.msra.mxu0 %v661
      %879 = vmatmul.bf16.gmra.mxu0 %v455
      %v880 = vpop.f32.mrf.mxu0
      %v881 = vadd.f32 %v792, %v880
      %v882 = vpop.f32.mrf.mxu0
      %v883 = vadd.f32 %v794, %v882
      %884 = vmatmul.bf16.gmra.mxu0 %v458
      %v885 = vpop.f32.mrf.mxu0
      %v886 = vadd.f32 %v797, %v885
      %v887 = vpop.f32.mrf.mxu0
      %v888 = vadd.f32 %v799, %v887
      %889 = vmatmul.bf16.gmra.mxu0 %v461
      %v890 = vpop.f32.mrf.mxu0
      %v891 = vadd.f32 %v802, %v890
      %v892 = vpop.f32.mrf.mxu0
      %v893 = vadd.f32 %v804, %v892
      %894 = vmatmul.bf16.gmra.mxu0 %v464
      %v895 = vpop.f32.mrf.mxu0
      %v896 = vadd.f32 %v807, %v895
      %v897 = vpop.f32.mrf.mxu0
      %v898 = vadd.f32 %v809, %v897
      %899 = vmatmul.bf16.gmra.mxu0 %v467
      %v900 = vpop.f32.mrf.mxu0
      %v901 = vadd.f32 %v812, %v900
      %v902 = vpop.f32.mrf.mxu0
      %v903 = vadd.f32 %v814, %v902
      %904 = vmatmul.bf16.gmra.mxu0 %v470
      %v905 = vpop.f32.mrf.mxu0
      %v906 = vadd.f32 %v817, %v905
      %v907 = vpop.f32.mrf.mxu0
      %v908 = vadd.f32 %v819, %v907
      %909 = vmatmul.bf16.gmra.mxu0 %v473
      %v910 = vpop.f32.mrf.mxu0
      %v911 = vadd.f32 %v822, %v910
      %v912 = vpop.f32.mrf.mxu0
      %v913 = vadd.f32 %v824, %v912
      %914 = vmatmul.bf16.gmra.mxu0 %v476
      %v915 = vpop.f32.mrf.mxu0
      %v916 = vadd.f32 %v827, %v915
      %v917 = vpop.f32.mrf.mxu0
      %v918 = vadd.f32 %v829, %v917
      %919 = vmatmul.bf16.gmra.mxu0 %v479
      %v920 = vpop.f32.mrf.mxu0
      %v921 = vadd.f32 %v832, %v920
      %v922 = vpop.f32.mrf.mxu0
      %v923 = vadd.f32 %v834, %v922
      %924 = vmatmul.bf16.gmra.mxu0 %v482
      %v925 = vpop.f32.mrf.mxu0
      %v926 = vadd.f32 %v837, %v925
      %v927 = vpop.f32.mrf.mxu0
      %v928 = vadd.f32 %v839, %v927
      %929 = vmatmul.bf16.gmra.mxu0 %v485
      %v930 = vpop.f32.mrf.mxu0
      %v931 = vadd.f32 %v842, %v930
      %v932 = vpop.f32.mrf.mxu0
      %v933 = vadd.f32 %v844, %v932
      %934 = vmatmul.bf16.gmra.mxu0 %v488
      %v935 = vpop.f32.mrf.mxu0
      %v936 = vadd.f32 %v847, %v935
      %v937 = vpop.f32.mrf.mxu0
      %v938 = vadd.f32 %v849, %v937
      %939 = vmatmul.bf16.gmra.mxu0 %v491
      %v940 = vpop.f32.mrf.mxu0
      %v941 = vadd.f32 %v852, %v940
      %v942 = vpop.f32.mrf.mxu0
      %v943 = vadd.f32 %v854, %v942
      %944 = vmatmul.bf16.gmra.mxu0 %v494
      %v945 = vpop.f32.mrf.mxu0
      %v946 = vadd.f32 %v857, %v945
      %v947 = vpop.f32.mrf.mxu0
      %v948 = vadd.f32 %v859, %v947
      %949 = vmatmul.bf16.gmra.mxu0 %v497
      %v950 = vpop.f32.mrf.mxu0
      %v951 = vadd.f32 %v862, %v950
      %v952 = vpop.f32.mrf.mxu0
      %v953 = vadd.f32 %v864, %v952
      %954 = vmatmul.bf16.gmra.mxu0 %v500
      %v955 = vpop.f32.mrf.mxu0
      %v956 = vadd.f32 %v867, %v955
      %v957 = vpop.f32.mrf.mxu0
      %v958 = vadd.f32 %v869, %v957
      %959 = vdwg.mxu0
      %v960 = vmax.f32 %v881, 0.0
      %v961 = vmax.f32 %v883, 0.0
      %v962 = vmax.f32 %v886, 0.0
      %v963 = vmax.f32 %v888, 0.0
      %v964 = vmax.f32 %v891, 0.0
      %v965 = vmax.f32 %v893, 0.0
      %v966 = vmax.f32 %v896, 0.0
      %v967 = vmax.f32 %v898, 0.0
      %v968 = vmax.f32 %v901, 0.0
      %v969 = vmax.f32 %v903, 0.0
      %v970 = vmax.f32 %v906, 0.0
      %v971 = vmax.f32 %v908, 0.0
      %v972 = vmax.f32 %v911, 0.0
      %v973 = vmax.f32 %v913, 0.0
      %v974 = vmax.f32 %v916, 0.0
      %v975 = vmax.f32 %v918, 0.0
      %v976 = vmax.f32 %v921, 0.0
      %v977 = vmax.f32 %v923, 0.0
      %v978 = vmax.f32 %v926, 0.0
      %v979 = vmax.f32 %v928, 0.0
      %v980 = vmax.f32 %v931, 0.0
      %v981 = vmax.f32 %v933, 0.0
      %v982 = vmax.f32 %v936, 0.0
      %v983 = vmax.f32 %v938, 0.0
      %v984 = vmax.f32 %v941, 0.0
      %v985 = vmax.f32 %v943, 0.0
      %v986 = vmax.f32 %v946, 0.0
      %v987 = vmax.f32 %v948, 0.0
      %v988 = vmax.f32 %v951, 0.0
      %v989 = vmax.f32 %v953, 0.0
      %v990 = vmax.f32 %v956, 0.0
      %v991 = vmax.f32 %v958, 0.0
      %v992 = vpack.c.bf16 %v960, %v960
      %v993 = vpack.c.bf16 %v961, %v961
      %v994 = vpack.c.bf16 %v962, %v962
      %v995 = vpack.c.bf16 %v963, %v963
      %v996 = vpack.c.bf16 %v964, %v964
      %v997 = vpack.c.bf16 %v965, %v965
      %v998 = vpack.c.bf16 %v966, %v966
      %v999 = vpack.c.bf16 %v967, %v967
      %v1000 = vpack.c.bf16 %v968, %v968
      %v1001 = vpack.c.bf16 %v969, %v969
      %v1002 = vpack.c.bf16 %v970, %v970
      %v1003 = vpack.c.bf16 %v971, %v971
      %v1004 = vpack.c.bf16 %v972, %v972
      %v1005 = vpack.c.bf16 %v973, %v973
      %v1006 = vpack.c.bf16 %v974, %v974
      %v1007 = vpack.c.bf16 %v975, %v975
      %v1008 = vpack.c.bf16 %v976, %v976
      %v1009 = vpack.c.bf16 %v977, %v977
      %v1010 = vpack.c.bf16 %v978, %v978
      %v1011 = vpack.c.bf16 %v979, %v979
      %v1012 = vpack.c.bf16 %v980, %v980
      %v1013 = vpack.c.bf16 %v981, %v981
      %v1014 = vpack.c.bf16 %v982, %v982
      %v1015 = vpack.c.bf16 %v983, %v983
      %v1016 = vpack.c.bf16 %v984, %v984
      %v1017 = vpack.c.bf16 %v985, %v985
      %v1018 = vpack.c.bf16 %v986, %v986
      %v1019 = vpack.c.bf16 %v987, %v987
      %v1020 = vpack.c.bf16 %v988, %v988
      %v1021 = vpack.c.bf16 %v989, %v989
      %v1022 = vpack.c.bf16 %v990, %v990
      %v1023 = vpack.c.bf16 %v991, %v991
      %1024 = vst [vmem:[%s175] sm:$0xf] %v992
      %1025 = vst [vmem:[%s175 + $0x4] sm:$0xf] %v993
      %1026 = vst [vmem:[%s175 + $0x8] sm:$0xf] %v994
      %1027 = vst [vmem:[%s175 + $0xc] sm:$0xf] %v995
      %1028 = vst [vmem:[%s175 + $0x10] sm:$0xf] %v996
      %1029 = vst [vmem:[%s175 + $0x14] sm:$0xf] %v997
      %1030 = vst [vmem:[%s175 + $0x18] sm:$0xf] %v998
      %1031 = vst [vmem:[%s175 + $0x1c] sm:$0xf] %v999
      %1032 = vst [vmem:[%s175 + $0x20] sm:$0xf] %v1000
      %1033 = vst [vmem:[%s175 + $0x24] sm:$0xf] %v1001
      %1034 = vst [vmem:[%s175 + $0x28] sm:$0xf] %v1002
      %1035 = vst [vmem:[%s175 + $0x2c] sm:$0xf] %v1003
      %1036 = vst [vmem:[%s175 + $0x30] sm:$0xf] %v1004
      %1037 = vst [vmem:[%s175 + $0x34] sm:$0xf] %v1005
      %1038 = vst [vmem:[%s175 + $0x38] sm:$0xf] %v1006
      %1039 = vst [vmem:[%s175 + $0x3c] sm:$0xf] %v1007
      %1040 = vst [vmem:[%s175 + $0x40] sm:$0xf] %v1008
      %1041 = vst [vmem:[%s175 + $0x44] sm:$0xf] %v1009
      %1042 = vst [vmem:[%s175 + $0x48] sm:$0xf] %v1010
      %1043 = vst [vmem:[%s175 + $0x4c] sm:$0xf] %v1011
      %1044 = vst [vmem:[%s175 + $0x50] sm:$0xf] %v1012
      %1045 = vst [vmem:[%s175 + $0x54] sm:$0xf] %v1013
      %1046 = vst [vmem:[%s175 + $0x58] sm:$0xf] %v1014
      %1047 = vst [vmem:[%s175 + $0x5c] sm:$0xf] %v1015
      %1048 = vst [vmem:[%s175 + $0x60] sm:$0xf] %v1016
      %1049 = vst [vmem:[%s175 + $0x64] sm:$0xf] %v1017
      %1050 = vst [vmem:[%s175 + $0x68] sm:$0xf] %v1018
      %1051 = vst [vmem:[%s175 + $0x6c] sm:$0xf] %v1019
      %1052 = vst [vmem:[%s175 + $0x70] sm:$0xf] %v1020
      %1053 = vst [vmem:[%s175 + $0x74] sm:$0xf] %v1021
      %1054 = vst [vmem:[%s175 + $0x78] sm:$0xf] %v1022
      %1055 = vst [vmem:[%s175 + $0x7c] sm:$0xf] %v1023
      %s1056 = smul.u32 32, %s14
      %p1057 = scmp.lt.s32.totalorder %s1056, 63
      %s1058 = scalar_select %p1057, %s1056, 63
      %s1059 = smul.addr %s1058, 4
      %s1060 = scalar_lea.vmem %s3, %s1059
      // Predicated region
      $region33: #{forward.12} parent=31 // pred_check
        %p1061 = pneg %p100
      $region34: #{forward.12} parent=31 // pred_check_branch
        %1063 = sbr.rel (%p1061) target = $region36
      $region35: #{forward.12} parent=31 // pred_region
        %s1064 = smul.u32 32, %s14
      $region36: #{forward.12} parent=31 // pred_fallthru
        _
    $region32: #{forward.12} parent=5 // pred_fallthru
      _
    %p1065 = scmp.le.s32.totalorder 2, %s9
    // Predicated region
    $region37: #{forward.12} parent=5 // pred_check
      %p1066 = pneg %p1065
    $region38: #{forward.12} parent=5 // pred_check_branch
      %1068 = sbr.rel (%p1066) target = $region40
    $region39: #{forward.12} parent=5 // pred_region
      %s1069 = ssub.s32 %s9, 2
      // Predicated region
      $region41: #{forward.12} parent=39 // pred_check
        %p1070 = pneg %p106
      $region42: #{forward.12} parent=39 // pred_check_branch
        %1072 = sbr.rel (%p1070) target = $region44
      $region43: #{forward.12} parent=39 // pred_region
        %s1073 = smul.u32 32, %s15
        %p1074 = scmp.lt.s32.totalorder %s1073, 63
        %s1075 = scalar_select %p1074, %s1073, 63
        %s1076 = smul.addr %s1075, 4
        %s1077 = scalar_lea.vmem %s3, %s1076
      $region44: #{forward.12} parent=39 // pred_fallthru
        _
    $region40: #{forward.12} parent=5 // pred_fallthru
      _
  $region6: #{forward.12} parent=0 // loop_footer
    %s13 = sadd.s32 1, %s9
  $region7: #{forward.12} parent=0 // loop_footer_branch
    %8 = sbr.rel target = $region3
  $region8: #{forward.12} parent=0 // loop_exit
    _

// kernel: forward.13
$region0: #{forward.13}
  #allocation0 [shape = 'u32[]', space=smem, size = 0x4, offset = 0x4, fixed_abs, tag = 'smem constant byte address 0x4 - core index']
  #allocation1 [shape = 'u32[72,128]{1,0:T(1,128)}', space=vmem, size = 0x9000, scoped, tag = 'internal scratch']
  %s0 = inlined_call_operand.vmem [shape: bf16[512,512], index: 0, kind: input, shape index: {}]
  %s1 = inlined_call_operand.vmem [shape: bf16[512,128], index: 1, kind: input, shape index: {}]
  %s2 = inlined_call_operand.vmem [shape: f32[1,128], index: 2, kind: input, shape index: {}]
  %s3 = inlined_call_operand.vmem [shape: bf16[512,128], index: 3, kind: output, shape index: {}]
  %s4 = sld [smem:[#allocation0]]
  $region45: #{forward.13} parent=0
    _
  %s6 = ssub.s32 1, %s4
  %s7 = scalar_select 0, %s6, %s4
  loop: start=0, step=1, limit=4
  $region2: #{forward.13} parent=0 // loop_pre_header
    _
  $region3: #{forward.13} parent=0 // loop_header
    %s9 = sphi 0, %s13
    %p10 = scmp.ge.s32.totalorder %s9, 4
    %s19 = sphi 0, %s21
    %s22 = sphi 0, %s19
    %s23 = sphi 0, %s22
    %s39 = sphi 0, %s23
    %s43 = sphi 0, %s43
    %s45 = sphi 0, %s43
    %s46 = sphi 0, %s45
    %s60 = sphi 0, %s46
    %s64 = sphi 0, %s64
    %s66 = sphi 0, %s64
    %s67 = sphi 0, %s66
    %s81 = sphi 0, %s67
    %s87 = sphi 0, %s89
    %s90 = sphi 0, %s87
    %s91 = sphi 0, %s90
    %s107 = sphi 0, %s91
  $region4: #{forward.13} parent=0 // loop_header_branch
    %12 = sbr.rel (%p10) target = $region8
  $region5: #{forward.13} parent=0 // loop_body
    %s14 = ssub.s32 %s9, 1
    %s15 = ssub.s32 %s9, 2
    %s16 = sadd.s32 %s9, 1
    %s17 = ssub.s32 %s9, %s16
    %p18 = scmp.eq.s32.totalorder %s17, 0
    %s20 = sadd.s32 %s19, 1
    %s21 = scalar_select %p18, %s19, %s20
    %p24 = pneg %p18
    %p25 = scmp.eq.s32.totalorder %s9, 1
    %p26 = por %p24, %p25
    %p27 = scmp.ne.s32.totalorder %s19, %s22
    %p28 = scmp.eq.s32.totalorder %s9, 0
    %p29 = por %p27, %p28
    %p30 = scmp.ne.s32.totalorder %s19, %s22
    %p31 = scmp.eq.s32.totalorder %s14, 1
    %p32 = por %p30, %p31
    %p33 = scmp.ne.s32.totalorder %s22, %s23
    %p34 = scmp.eq.s32.totalorder %s14, 0
    %p35 = por %p33, %p34
    %p36 = scmp.ne.s32.totalorder %s22, %s23
    %p37 = scmp.eq.s32.totalorder %s15, 1
    %p38 = por %p36, %p37
    %p40 = scmp.ne.s32.totalorder %s23, %s39
    %p41 = scmp.eq.s32.totalorder %s15, 0
    %p42 = por %p40, %p41
    %s44 = sadd.s32 %s43, 1
    %p47 = scmp.eq.s32.totalorder %s9, 1
    %p48 = scmp.ne.s32.totalorder %s43, %s45
    %p49 = scmp.eq.s32.totalorder %s9, 0
    %p50 = por %p48, %p49
    %p51 = scmp.ne.s32.totalorder %s43, %s45
    %p52 = scmp.eq.s32.totalorder %s14, 1
    %p53 = por %p51, %p52
    %p54 = scmp.ne.s32.totalorder %s45, %s46
    %p55 = scmp.eq.s32.totalorder %s14, 0
    %p56 = por %p54, %p55
    %p57 = scmp.ne.s32.totalorder %s45, %s46
    %p58 = scmp.eq.s32.totalorder %s15, 1
    %p59 = por %p57, %p58
    %p61 = scmp.ne.s32.totalorder %s46, %s60
    %p62 = scmp.eq.s32.totalorder %s15, 0
    %p63 = por %p61, %p62
    %s65 = sadd.s32 %s64, 1
    %p68 = scmp.eq.s32.totalorder %s9, 1
    %p69 = scmp.ne.s32.totalorder %s64, %s66
    %p70 = scmp.eq.s32.totalorder %s9, 0
    %p71 = por %p69, %p70
    %p72 = scmp.ne.s32.totalorder %s64, %s66
    %p73 = scmp.eq.s32.totalorder %s14, 1
    %p74 = por %p72, %p73
    %p75 = scmp.ne.s32.totalorder %s66, %s67
    %p76 = scmp.eq.s32.totalorder %s14, 0
    %p77 = por %p75, %p76
    %p78 = scmp.ne.s32.totalorder %s66, %s67
    %p79 = scmp.eq.s32.totalorder %s15, 1
    %p80 = por %p78, %p79
    %p82 = scmp.ne.s32.totalorder %s67, %s81
    %p83 = scmp.eq.s32.totalorder %s15, 0
    %p84 = por %p82, %p83
    %s85 = ssub.s32 %s9, %s16
    %p86 = scmp.eq.s32.totalorder %s85, 0
    %s88 = sadd.s32 %s87, 1
    %s89 = scalar_select %p86, %s87, %s88
    %p92 = pneg %p86
    %p93 = scmp.eq.s32.totalorder %s9, 1
    %p94 = por %p92, %p93
    %p95 = scmp.ne.s32.totalorder %s87, %s90
    %p96 = scmp.eq.s32.totalorder %s9, 0
    %p97 = por %p95, %p96
    %p98 = scmp.ne.s32.totalorder %s87, %s90
    %p99 = scmp.eq.s32.totalorder %s14, 1
    %p100 = por %p98, %p99
    %p101 = scmp.ne.s32.totalorder %s90, %s91
    %p102 = scmp.eq.s32.totalorder %s14, 0
    %p103 = por %p101, %p102
    %p104 = scmp.ne.s32.totalorder %s90, %s91
    %p105 = scmp.eq.s32.totalorder %s15, 1
    %p106 = por %p104, %p105
    %p108 = scmp.ne.s32.totalorder %s91, %s107
    %p109 = scmp.eq.s32.totalorder %s15, 0
    %p110 = por %p108, %p109
    %p111 = scmp.le.s32.totalorder 1, %s9
    %p112 = scmp.lt.s32.totalorder %s9, 3
    %p113 = pnand %p111, %p112
    %p114 = pneg %p113
    // Predicated region
    $region9: #{forward.13} parent=5 // pred_check
      _
    $region10: #{forward.13} parent=5 // pred_check_branch
      %116 = sbr.rel (%p113) target = $region12
    $region11: #{forward.13} parent=5 // pred_region
      %s117 = ssub.s32 %s9, 1
      // Predicated region
      $region13: #{forward.13} parent=11 // pred_check
        %p118 = pneg %p56
      $region14: #{forward.13} parent=11 // pred_check_branch
        %120 = sbr.rel (%p118) target = $region16
      $region15: #{forward.13} parent=11 // pred_region
        _
      $region16: #{forward.13} parent=11 // pred_fallthru
        _
      // Predicated region
      $region17: #{forward.13} parent=11 // pred_check
        %p121 = pneg %p77
      $region18: #{forward.13} parent=11 // pred_check_branch
        %123 = sbr.rel (%p121) target = $region20
      $region19: #{forward.13} parent=11 // pred_region
        _
      $region20: #{forward.13} parent=11 // pred_fallthru
        _
    $region12: #{forward.13} parent=5 // pred_fallthru
      _
    %p124 = scmp.lt.s32.totalorder %s9, 2
    // Predicated region
    $region21: #{forward.13} parent=5 // pred_check
      %p125 = pneg %p124
    $region22: #{forward.13} parent=5 // pred_check_branch
      %127 = sbr.rel (%p125) target = $region24
    $region23: #{forward.13} parent=5 // pred_region
      // Predicated region
      $region25: #{forward.13} parent=23 // pred_check
        %p128 = pneg %p29
      $region26: #{forward.13} parent=23 // pred_check_branch
        %130 = sbr.rel (%p128) target = $region28
      $region27: #{forward.13} parent=23 // pred_region
        %s131 = smul.u32 32, %s9
        %p132 = scmp.lt.s32.totalorder %s131, 63
        %s133 = scalar_select %p132, %s131, 63
        %s134 = smul.addr %s133, 4
        %s135 = smul.addr %s134, 4
        %s136 = scalar_lea.vmem %s0, %s135
        %s137 = smul.u32 32, %s9
      $region28: #{forward.13} parent=23 // pred_fallthru
        _
    $region24: #{forward.13} parent=5 // pred_fallthru
      _
    %p138 = scmp.le.s32.totalorder 1, %s9
    %p139 = scmp.lt.s32.totalorder %s9, 3
    %p140 = pnand %p138, %p139
    %p141 = pneg %p140
    // Predicated region
    $region29: #{forward.13} parent=5 // pred_check
      _
    $region30: #{forward.13} parent=5 // pred_check_branch
      %143 = sbr.rel (%p140) target = $region32
    $region31: #{forward.13} parent=5 // pred_region
      %s144 = ssub.s32 %s9, 1
      %s145 = smul.u32 32, %s14
      %p146 = scmp.lt.s32.totalorder %s145, 63
      %s147 = scalar_select %p146, %s145, 63
      %s148 = smul.addr %s147, 4
      %s149 = smul.addr %s148, 4
      %s150 = scalar_lea.vmem %s0, %s149
      %p151 = pneg %p35
      %p152 = pneg %p32
      %p153 = pneg %p56
      %p154 = pneg %p53
      %p155 = pneg %p77
      %p156 = pneg %p74
      %p157 = pneg %p103
      %p158 = pneg %p100
      %s159 = smul.u32 32, %s14
      %p160 = scmp.lt.s32.totalorder %s159, 63
      %s161 = scalar_select %p160, %s159, 63
      %s162 = smul.addr %s161, 4
      %s163 = scalar_lea.vmem %s3, %s162
      %s164 = smul.u32 32, %s14
      %p165 = scmp.lt.s32.totalorder %s164, 63
      %s166 = scalar_select %p165, %s164, 63
      %s167 = smul.addr %s166, 4
      %s168 = smul.addr %s167, 4
      %s169 = scalar_lea.vmem %s0, %s168
      %s170 = smul.u32 32, %s14
      %s171 = smul.u32 32, %s14
      %p172 = scmp.lt.s32.totalorder %s171, 63
      %s173 = scalar_select %p172, %s171, 63
      %s174 = smul.addr %s173, 4
      %s175 = scalar_lea.vmem %s3, %s174
      %s176 = smul.u32 32, %s14
      %v177 = vld [vmem:[%s169] sm:$0xff]
      %v178 = vld [vmem:[%s169 + $0x8] sm:$0xff]
      %v179 = vld [vmem:[%s169 + $0x10] sm:$0xff]
      %v180 = vld [vmem:[%s169 + $0x18] sm:$0xff]
      %v181 = vld [vmem:[%s169 + $0x20] sm:$0xff]
      %v182 = vld [vmem:[%s169 + $0x28] sm:$0xff]
      %v183 = vld [vmem:[%s169 + $0x30] sm:$0xff]
      %v184 = vld [vmem:[%s169 + $0x38] sm:$0xff]
      %v185 = vld [vmem:[%s169 + $0x40] sm:$0xff]
      %v186 = vld [vmem:[%s169 + $0x48] sm:$0xff]
      %v187 = vld [vmem:[%s169 + $0x50] sm:$0xff]
      %v188 = vld [vmem:[%s169 + $0x58] sm:$0xff]
      %v189 = vld [vmem:[%s169 + $0x60] sm:$0xff]
      %v190 = vld [vmem:[%s169 + $0x68] sm:$0xff]
      %v191 = vld [vmem:[%s169 + $0x70] sm:$0xff]
      %v192 = vld [vmem:[%s169 + $0x78] sm:$0xff]
      %v193 = vld [vmem:[%s169 + $0x80] sm:$0xff]
      %v194 = vld [vmem:[%s169 + $0x88] sm:$0xff]
      %v195 = vld [vmem:[%s169 + $0x90] sm:$0xff]
      %v196 = vld [vmem:[%s169 + $0x98] sm:$0xff]
      %v197 = vld [vmem:[%s169 + $0xa0] sm:$0xff]
      %v198 = vld [vmem:[%s169 + $0xa8] sm:$0xff]
      %v199 = vld [vmem:[%s169 + $0xb0] sm:$0xff]
      %v200 = vld [vmem:[%s169 + $0xb8] sm:$0xff]
      %v201 = vld [vmem:[%s169 + $0xc0] sm:$0xff]
      %v202 = vld [vmem:[%s169 + $0xc8] sm:$0xff]
      %v203 = vld [vmem:[%s169 + $0xd0] sm:$0xff]
      %v204 = vld [vmem:[%s169 + $0xd8] sm:$0xff]
      %v205 = vld [vmem:[%s169 + $0xe0] sm:$0xff]
      %v206 = vld [vmem:[%s169 + $0xe8] sm:$0xff]
      %v207 = vld [vmem:[%s169 + $0xf0] sm:$0xff]
      %v208 = vld [vmem:[%s169 + $0xf8] sm:$0xff]
      %v209 = vld [vmem:[%s169 + $0x100] sm:$0xff]
      %v210 = vld [vmem:[%s169 + $0x108] sm:$0xff]
      %v211 = vld [vmem:[%s169 + $0x110] sm:$0xff]
      %v212 = vld [vmem:[%s169 + $0x118] sm:$0xff]
      %v213 = vld [vmem:[%s169 + $0x120] sm:$0xff]
      %v214 = vld [vmem:[%s169 + $0x128] sm:$0xff]
      %v215 = vld [vmem:[%s169 + $0x130] sm:$0xff]
      %v216 = vld [vmem:[%s169 + $0x138] sm:$0xff]
      %v217 = vld [vmem:[%s169 + $0x140] sm:$0xff]
      %v218 = vld [vmem:[%s169 + $0x148] sm:$0xff]
      %v219 = vld [vmem:[%s169 + $0x150] sm:$0xff]
      %v220 = vld [vmem:[%s169 + $0x158] sm:$0xff]
      %v221 = vld [vmem:[%s169 + $0x160] sm:$0xff]
      %v222 = vld [vmem:[%s169 + $0x168] sm:$0xff]
      %v223 = vld [vmem:[%s169 + $0x170] sm:$0xff]
      %v224 = vld [vmem:[%s169 + $0x178] sm:$0xff]
      %v225 = vld [vmem:[%s169 + $0x180] sm:$0xff]
      %v226 = vld [vmem:[%s169 + $0x188] sm:$0xff]
      %v227 = vld [vmem:[%s169 + $0x190] sm:$0xff]
      %v228 = vld [vmem:[%s169 + $0x198] sm:$0xff]
      %v229 = vld [vmem:[%s169 + $0x1a0] sm:$0xff]
      %v230 = vld [vmem:[%s169 + $0x1a8] sm:$0xff]
      %v231 = vld [vmem:[%s169 + $0x1b0] sm:$0xff]
      %v232 = vld [vmem:[%s169 + $0x1b8] sm:$0xff]
      %v233 = vld [vmem:[%s169 + $0x1c0] sm:$0xff]
      %v234 = vld [vmem:[%s169 + $0x1c8] sm:$0xff]
      %v235 = vld [vmem:[%s169 + $0x1d0] sm:$0xff]
      %v236 = vld [vmem:[%s169 + $0x1d8] sm:$0xff]
      %v237 = vld [vmem:[%s169 + $0x1e0] sm:$0xff]
      %v238 = vld [vmem:[%s169 + $0x1e8] sm:$0xff]
      %v239 = vld [vmem:[%s169 + $0x1f0] sm:$0xff]
      %v240 = vld [vmem:[%s169 + $0x1f8] sm:$0xff]
      %v241 = vld [vmem:[%s1] sm:$0xf]
      %v242 = vld [vmem:[%s1 + $0x4] sm:$0xf]
      %v243 = vld [vmem:[%s1 + $0x8] sm:$0xf]
      %v244 = vld [vmem:[%s1 + $0xc] sm:$0xf]
      %v245 = vld [vmem:[%s1 + $0x10] sm:$0xf]
      %v246 = vld [vmem:[%s1 + $0x14] sm:$0xf]
      %v247 = vld [vmem:[%s1 + $0x18] sm:$0xf]
      %v248 = vld [vmem:[%s1 + $0x1c] sm:$0xf]
      %v249 = vld [vmem:[%s1 + $0x20] sm:$0xf]
      %v250 = vld [vmem:[%s1 + $0x24] sm:$0xf]
      %v251 = vld [vmem:[%s1 + $0x28] sm:$0xf]
      %v252 = vld [vmem:[%s1 + $0x2c] sm:$0xf]
      %v253 = vld [vmem:[%s1 + $0x30] sm:$0xf]
      %v254 = vld [vmem:[%s1 + $0x34] sm:$0xf]
      %v255 = vld [vmem:[%s1 + $0x38] sm:$0xf]
      %v256 = vld [vmem:[%s1 + $0x3c] sm:$0xf]
      %v257 = vld [vmem:[%s1 + $0x40] sm:$0xf]
      %v258 = vld [vmem:[%s1 + $0x44] sm:$0xf]
      %v259 = vld [vmem:[%s1 + $0x48] sm:$0xf]
      %v260 = vld [vmem:[%s1 + $0x4c] sm:$0xf]
      %v261 = vld [vmem:[%s1 + $0x50] sm:$0xf]
      %v262 = vld [vmem:[%s1 + $0x54] sm:$0xf]
      %v263 = vld [vmem:[%s1 + $0x58] sm:$0xf]
      %v264 = vld [vmem:[%s1 + $0x5c] sm:$0xf]
      %v265 = vld [vmem:[%s1 + $0x60] sm:$0xf]
      %v266 = vld [vmem:[%s1 + $0x64] sm:$0xf]
      %v267 = vld [vmem:[%s1 + $0x68] sm:$0xf]
      %v268 = vld [vmem:[%s1 + $0x6c] sm:$0xf]
      %v269 = vld [vmem:[%s1 + $0x70] sm:$0xf]
      %v270 = vld [vmem:[%s1 + $0x74] sm:$0xf]
      %v271 = vld [vmem:[%s1 + $0x78] sm:$0xf]
      %v272 = vld [vmem:[%s1 + $0x7c] sm:$0xf]
      %v273 = vld [vmem:[%s1 + $0x80] sm:$0xf]
      %v274 = vld [vmem:[%s1 + $0x84] sm:$0xf]
      %v275 = vld [vmem:[%s1 + $0x88] sm:$0xf]
      %v276 = vld [vmem:[%s1 + $0x8c] sm:$0xf]
      %v277 = vld [vmem:[%s1 + $0x90] sm:$0xf]
      %v278 = vld [vmem:[%s1 + $0x94] sm:$0xf]
      %v279 = vld [vmem:[%s1 + $0x98] sm:$0xf]
      %v280 = vld [vmem:[%s1 + $0x9c] sm:$0xf]
      %v281 = vld [vmem:[%s1 + $0xa0] sm:$0xf]
      %v282 = vld [vmem:[%s1 + $0xa4] sm:$0xf]
      %v283 = vld [vmem:[%s1 + $0xa8] sm:$0xf]
      %v284 = vld [vmem:[%s1 + $0xac] sm:$0xf]
      %v285 = vld [vmem:[%s1 + $0xb0] sm:$0xf]
      %v286 = vld [vmem:[%s1 + $0xb4] sm:$0xf]
      %v287 = vld [vmem:[%s1 + $0xb8] sm:$0xf]
      %v288 = vld [vmem:[%s1 + $0xbc] sm:$0xf]
      %v289 = vld [vmem:[%s1 + $0xc0] sm:$0xf]
      %v290 = vld [vmem:[%s1 + $0xc4] sm:$0xf]
      %v291 = vld [vmem:[%s1 + $0xc8] sm:$0xf]
      %v292 = vld [vmem:[%s1 + $0xcc] sm:$0xf]
      %v293 = vld [vmem:[%s1 + $0xd0] sm:$0xf]
      %v294 = vld [vmem:[%s1 + $0xd4] sm:$0xf]
      %v295 = vld [vmem:[%s1 + $0xd8] sm:$0xf]
      %v296 = vld [vmem:[%s1 + $0xdc] sm:$0xf]
      %v297 = vld [vmem:[%s1 + $0xe0] sm:$0xf]
      %v298 = vld [vmem:[%s1 + $0xe4] sm:$0xf]
      %v299 = vld [vmem:[%s1 + $0xe8] sm:$0xf]
      %v300 = vld [vmem:[%s1 + $0xec] sm:$0xf]
      %v301 = vld [vmem:[%s1 + $0xf0] sm:$0xf]
      %v302 = vld [vmem:[%s1 + $0xf4] sm:$0xf]
      %v303 = vld [vmem:[%s1 + $0xf8] sm:$0xf]
      %v304 = vld [vmem:[%s1 + $0xfc] sm:$0xf]
      %v305 = vld [vmem:[%s2] sm:$0x1]
      %v307 = vperm.slane %v305, 0
      %v373 = vunpack.c.l.b16 %v177
      %v374 = vunpack.c.h.b16 %v177
      %v375 = vunpack.c.l.b16 %v178
      %v376 = vunpack.c.h.b16 %v178
      %v377 = vunpack.c.l.b16 %v179
      %v378 = vunpack.c.h.b16 %v179
      %v379 = vunpack.c.l.b16 %v180
      %v380 = vunpack.c.h.b16 %v180
      %v381 = vunpack.c.l.b16 %v181
      %v382 = vunpack.c.h.b16 %v181
      %v383 = vunpack.c.l.b16 %v182
      %v384 = vunpack.c.h.b16 %v182
      %v385 = vunpack.c.l.b16 %v183
      %v386 = vunpack.c.h.b16 %v183
      %v387 = vunpack.c.l.b16 %v184
      %v388 = vunpack.c.h.b16 %v184
      %v389 = vunpack.c.l.b16 %v185
      %v390 = vunpack.c.h.b16 %v185
      %v391 = vunpack.c.l.b16 %v186
      %v392 = vunpack.c.h.b16 %v186
      %v393 = vunpack.c.l.b16 %v187
      %v394 = vunpack.c.h.b16 %v187
      %v395 = vunpack.c.l.b16 %v188
      %v396 = vunpack.c.h.b16 %v188
      %v397 = vunpack.c.l.b16 %v189
      %v398 = vunpack.c.h.b16 %v189
      %v399 = vunpack.c.l.b16 %v190
      %v400 = vunpack.c.h.b16 %v190
      %v401 = vunpack.c.l.b16 %v191
      %v402 = vunpack.c.h.b16 %v191
      %v403 = vunpack.c.l.b16 %v192
      %v404 = vunpack.c.h.b16 %v192
      %v405 = vunpack.c.l.b16 %v193
      %v406 = vunpack.c.h.b16 %v193
      %v407 = vunpack.c.l.b16 %v194
      %v408 = vunpack.c.h.b16 %v194
      %v409 = vunpack.c.l.b16 %v195
      %v410 = vunpack.c.h.b16 %v195
      %v411 = vunpack.c.l.b16 %v196
      %v412 = vunpack.c.h.b16 %v196
      %v413 = vunpack.c.l.b16 %v197
      %v414 = vunpack.c.h.b16 %v197
      %v415 = vunpack.c.l.b16 %v198
      %v416 = vunpack.c.h.b16 %v198
      %v417 = vunpack.c.l.b16 %v199
      %v418 = vunpack.c.h.b16 %v199
      %v419 = vunpack.c.l.b16 %v200
      %v420 = vunpack.c.h.b16 %v200
      %v421 = vunpack.c.l.b16 %v201
      %v422 = vunpack.c.h.b16 %v201
      %v423 = vunpack.c.l.b16 %v202
      %v424 = vunpack.c.h.b16 %v202
      %v425 = vunpack.c.l.b16 %v203
      %v426 = vunpack.c.h.b16 %v203
      %v427 = vunpack.c.l.b16 %v204
      %v428 = vunpack.c.h.b16 %v204
      %v429 = vunpack.c.l.b16 %v205
      %v430 = vunpack.c.h.b16 %v205
      %v431 = vunpack.c.l.b16 %v206
      %v432 = vunpack.c.h.b16 %v206
      %v433 = vunpack.c.l.b16 %v207
      %v434 = vunpack.c.h.b16 %v207
      %v435 = vunpack.c.l.b16 %v208
      %v436 = vunpack.c.h.b16 %v208
      %v437 = vunpack.c.l.b16 %v209
      %v438 = vunpack.c.h.b16 %v209
      %v439 = vunpack.c.l.b16 %v210
      %v440 = vunpack.c.h.b16 %v210
      %v441 = vunpack.c.l.b16 %v211
      %v442 = vunpack.c.h.b16 %v211
      %v443 = vunpack.c.l.b16 %v212
      %v444 = vunpack.c.h.b16 %v212
      %v445 = vunpack.c.l.b16 %v213
      %v446 = vunpack.c.h.b16 %v213
      %v447 = vunpack.c.l.b16 %v214
      %v448 = vunpack.c.h.b16 %v214
      %v449 = vunpack.c.l.b16 %v215
      %v450 = vunpack.c.h.b16 %v215
      %v451 = vunpack.c.l.b16 %v216
      %v452 = vunpack.c.h.b16 %v216
      %v453 = vunpack.c.l.b16 %v217
      %v454 = vunpack.c.h.b16 %v217
      %v455 = vunpack.c.l.b16 %v218
      %v456 = vunpack.c.h.b16 %v218
      %v457 = vunpack.c.l.b16 %v219
      %v458 = vunpack.c.h.b16 %v219
      %v459 = vunpack.c.l.b16 %v220
      %v460 = vunpack.c.h.b16 %v220
      %v461 = vunpack.c.l.b16 %v221
      %v462 = vunpack.c.h.b16 %v221
      %v463 = vunpack.c.l.b16 %v222
      %v464 = vunpack.c.h.b16 %v222
      %v465 = vunpack.c.l.b16 %v223
      %v466 = vunpack.c.h.b16 %v223
      %v467 = vunpack.c.l.b16 %v224
      %v468 = vunpack.c.h.b16 %v224
      %v469 = vunpack.c.l.b16 %v225
      %v470 = vunpack.c.h.b16 %v225
      %v471 = vunpack.c.l.b16 %v226
      %v472 = vunpack.c.h.b16 %v226
      %v473 = vunpack.c.l.b16 %v227
      %v474 = vunpack.c.h.b16 %v227
      %v475 = vunpack.c.l.b16 %v228
      %v476 = vunpack.c.h.b16 %v228
      %v477 = vunpack.c.l.b16 %v229
      %v478 = vunpack.c.h.b16 %v229
      %v479 = vunpack.c.l.b16 %v230
      %v480 = vunpack.c.h.b16 %v230
      %v481 = vunpack.c.l.b16 %v231
      %v482 = vunpack.c.h.b16 %v231
      %v483 = vunpack.c.l.b16 %v232
      %v484 = vunpack.c.h.b16 %v232
      %v485 = vunpack.c.l.b16 %v233
      %v486 = vunpack.c.h.b16 %v233
      %v487 = vunpack.c.l.b16 %v234
      %v488 = vunpack.c.h.b16 %v234
      %v489 = vunpack.c.l.b16 %v235
      %v490 = vunpack.c.h.b16 %v235
      %v491 = vunpack.c.l.b16 %v236
      %v492 = vunpack.c.h.b16 %v236
      %v493 = vunpack.c.l.b16 %v237
      %v494 = vunpack.c.h.b16 %v237
      %v495 = vunpack.c.l.b16 %v238
      %v496 = vunpack.c.h.b16 %v238
      %v497 = vunpack.c.l.b16 %v239
      %v498 = vunpack.c.h.b16 %v239
      %v499 = vunpack.c.l.b16 %v240
      %v500 = vunpack.c.h.b16 %v240
      %v501 = vpack.c.b16 %v377, %v373
      %v502 = vpack.c.b16 %v378, %v374
      %v503 = vpack.c.b16 %v379, %v375
      %v504 = vpack.c.b16 %v380, %v376
      %v505 = vpack.c.b16 %v385, %v381
      %v506 = vpack.c.b16 %v386, %v382
      %v507 = vpack.c.b16 %v387, %v383
      %v508 = vpack.c.b16 %v388, %v384
      %v509 = vpack.c.b16 %v393, %v389
      %v510 = vpack.c.b16 %v394, %v390
      %v511 = vpack.c.b16 %v395, %v391
      %v512 = vpack.c.b16 %v396, %v392
      %v513 = vpack.c.b16 %v401, %v397
      %v514 = vpack.c.b16 %v402, %v398
      %v515 = vpack.c.b16 %v403, %v399
      %v516 = vpack.c.b16 %v404, %v400
      %v517 = vpack.c.b16 %v409, %v405
      %v518 = vpack.c.b16 %v410, %v406
      %v519 = vpack.c.b16 %v411, %v407
      %v520 = vpack.c.b16 %v412, %v408
      %v521 = vpack.c.b16 %v417, %v413
      %v522 = vpack.c.b16 %v418, %v414
      %v523 = vpack.c.b16 %v419, %v415
      %v524 = vpack.c.b16 %v420, %v416
      %v525 = vpack.c.b16 %v425, %v421
      %v526 = vpack.c.b16 %v426, %v422
      %v527 = vpack.c.b16 %v427, %v423
      %v528 = vpack.c.b16 %v428, %v424
      %v529 = vpack.c.b16 %v433, %v429
      %v530 = vpack.c.b16 %v434, %v430
      %v531 = vpack.c.b16 %v435, %v431
      %v532 = vpack.c.b16 %v436, %v432
      %v533 = vpack.c.b16 %v441, %v437
      %v534 = vpack.c.b16 %v442, %v438
      %v535 = vpack.c.b16 %v443, %v439
      %v536 = vpack.c.b16 %v444, %v440
      %v537 = vpack.c.b16 %v449, %v445
      %v538 = vpack.c.b16 %v450, %v446
      %v539 = vpack.c.b16 %v451, %v447
      %v540 = vpack.c.b16 %v452, %v448
      %v541 = vpack.c.b16 %v457, %v453
      %v542 = vpack.c.b16 %v458, %v454
      %v543 = vpack.c.b16 %v459, %v455
      %v544 = vpack.c.b16 %v460, %v456
      %v545 = vpack.c.b16 %v465, %v461
      %v546 = vpack.c.b16 %v466, %v462
      %v547 = vpack.c.b16 %v467, %v463
      %v548 = vpack.c.b16 %v468, %v464
      %v549 = vpack.c.b16 %v473, %v469
      %v550 = vpack.c.b16 %v474, %v470
      %v551 = vpack.c.b16 %v475, %v471
      %v552 = vpack.c.b16 %v476, %v472
      %v553 = vpack.c.b16 %v481, %v477
      %v554 = vpack.c.b16 %v482, %v478
      %v555 = vpack.c.b16 %v483, %v479
      %v556 = vpack.c.b16 %v484, %v480
      %v557 = vpack.c.b16 %v489, %v485
      %v558 = vpack.c.b16 %v490, %v486
      %v559 = vpack.c.b16 %v491, %v487
      %v560 = vpack.c.b16 %v492, %v488
      %v561 = vpack.c.b16 %v497, %v493
      %v562 = vpack.c.b16 %v498, %v494
      %v563 = vpack.c.b16 %v499, %v495
      %v564 = vpack.c.b16 %v500, %v496
      %v693 = vunpack.c.l.b16 %v241
      %v694 = vunpack.c.l.b16 %v242
      %v695 = vunpack.c.l.b16 %v243
      %v696 = vunpack.c.l.b16 %v244
      %v697 = vunpack.c.l.b16 %v245
      %v698 = vunpack.c.l.b16 %v246
      %v699 = vunpack.c.l.b16 %v247
      %v700 = vunpack.c.l.b16 %v248
      %v701 = vunpack.c.l.b16 %v249
      %v702 = vunpack.c.l.b16 %v250
      %v703 = vunpack.c.l.b16 %v251
      %v704 = vunpack.c.l.b16 %v252
      %v705 = vunpack.c.l.b16 %v253
      %v706 = vunpack.c.l.b16 %v254
      %v707 = vunpack.c.l.b16 %v255
      %v708 = vunpack.c.l.b16 %v256
      %v709 = vunpack.c.l.b16 %v257
      %v710 = vunpack.c.l.b16 %v258
      %v711 = vunpack.c.l.b16 %v259
      %v712 = vunpack.c.l.b16 %v260
      %v713 = vunpack.c.l.b16 %v261
      %v714 = vunpack.c.l.b16 %v262
      %v715 = vunpack.c.l.b16 %v263
      %v716 = vunpack.c.l.b16 %v264
      %v717 = vunpack.c.l.b16 %v265
      %v718 = vunpack.c.l.b16 %v266
      %v719 = vunpack.c.l.b16 %v267
      %v720 = vunpack.c.l.b16 %v268
      %v721 = vunpack.c.l.b16 %v269
      %v722 = vunpack.c.l.b16 %v270
      %v723 = vunpack.c.l.b16 %v271
      %v724 = vunpack.c.l.b16 %v272
      %v725 = vunpack.c.l.b16 %v273
      %v726 = vunpack.c.l.b16 %v274
      %v727 = vunpack.c.l.b16 %v275
      %v728 = vunpack.c.l.b16 %v276
      %v729 = vunpack.c.l.b16 %v277
      %v730 = vunpack.c.l.b16 %v278
      %v731 = vunpack.c.l.b16 %v279
      %v732 = vunpack.c.l.b16 %v280
      %v733 = vunpack.c.l.b16 %v281
      %v734 = vunpack.c.l.b16 %v282
      %v735 = vunpack.c.l.b16 %v283
      %v736 = vunpack.c.l.b16 %v284
      %v737 = vunpack.c.l.b16 %v285
      %v738 = vunpack.c.l.b16 %v286
      %v739 = vunpack.c.l.b16 %v287
      %v740 = vunpack.c.l.b16 %v288
      %v741 = vunpack.c.l.b16 %v289
      %v742 = vunpack.c.l.b16 %v290
      %v743 = vunpack.c.l.b16 %v291
      %v744 = vunpack.c.l.b16 %v292
      %v745 = vunpack.c.l.b16 %v293
      %v746 = vunpack.c.l.b16 %v294
      %v747 = vunpack.c.l.b16 %v295
      %v748 = vunpack.c.l.b16 %v296
      %v749 = vunpack.c.l.b16 %v297
      %v750 = vunpack.c.l.b16 %v298
      %v751 = vunpack.c.l.b16 %v299
      %v752 = vunpack.c.l.b16 %v300
      %v753 = vunpack.c.l.b16 %v301
      %v754 = vunpack.c.l.b16 %v302
      %v755 = vunpack.c.l.b16 %v303
      %v756 = vunpack.c.l.b16 %v304
      %v757 = vpack.c.b16 %v694, %v693
      %v758 = vpack.c.b16 %v696, %v695
      %v759 = vpack.c.b16 %v698, %v697
      %v760 = vpack.c.b16 %v700, %v699
      %v761 = vpack.c.b16 %v702, %v701
      %v762 = vpack.c.b16 %v704, %v703
      %v763 = vpack.c.b16 %v706, %v705
      %v764 = vpack.c.b16 %v708, %v707
      %v765 = vpack.c.b16 %v710, %v709
      %v766 = vpack.c.b16 %v712, %v711
      %v767 = vpack.c.b16 %v714, %v713
      %v768 = vpack.c.b16 %v716, %v715
      %v769 = vpack.c.b16 %v718, %v717
      %v770 = vpack.c.b16 %v720, %v719
      %v771 = vpack.c.b16 %v722, %v721
      %v772 = vpack.c.b16 %v724, %v723
      %v773 = vpack.c.b16 %v726, %v725
      %v774 = vpack.c.b16 %v728, %v727
      %v775 = vpack.c.b16 %v730, %v729
      %v776 = vpack.c.b16 %v732, %v731
      %v777 = vpack.c.b16 %v734, %v733
      %v778 = vpack.c.b16 %v736, %v735
      %v779 = vpack.c.b16 %v738, %v737
      %v780 = vpack.c.b16 %v740, %v739
      %v781 = vpack.c.b16 %v742, %v741
      %v782 = vpack.c.b16 %v744, %v743
      %v783 = vpack.c.b16 %v746, %v745
      %v784 = vpack.c.b16 %v748, %v747
      %v785 = vpack.c.b16 %v750, %v749
      %v786 = vpack.c.b16 %v752, %v751
      %v787 = vpack.c.b16 %v754, %v753
      %v788 = vpack.c.b16 %v756, %v755
      %821 = vmatpush.bf16.msra.mxu0 %v764
      %822 = vmatpush.bf16.msra.mxu0 %v763
      %823 = vmatpush.bf16.msra.mxu0 %v762
      %824 = vmatpush.bf16.msra.mxu0 %v761
      %825 = vmatpush.bf16.msra.mxu0 %v760
      %826 = vmatpush.bf16.msra.mxu0 %v759
      %827 = vmatpush.bf16.msra.mxu0 %v758
      %828 = vmatpush.bf16.msra.mxu0 %v757
      %829 = vmatmul.bf16.gmra.mxu0 %v501
      %v830 = vpop.f32.mrf.mxu0
      %v831 = vadd.f32 %v307, %v830
      %v832 = vpop.f32.mrf.mxu0
      %v833 = vadd.f32 %v307, %v832
      %834 = vmatmul.bf16.gmra.mxu0 %v505
      %v835 = vpop.f32.mrf.mxu0
      %v836 = vadd.f32 %v307, %v835
      %v837 = vpop.f32.mrf.mxu0
      %v838 = vadd.f32 %v307, %v837
      %839 = vmatmul.bf16.gmra.mxu0 %v509
      %v840 = vpop.f32.mrf.mxu0
      %v841 = vadd.f32 %v307, %v840
      %v842 = vpop.f32.mrf.mxu0
      %v843 = vadd.f32 %v307, %v842
      %844 = vmatmul.bf16.gmra.mxu0 %v513
      %v845 = vpop.f32.mrf.mxu0
      %v846 = vadd.f32 %v307, %v845
      %v847 = vpop.f32.mrf.mxu0
      %v848 = vadd.f32 %v307, %v847
      %849 = vmatmul.bf16.gmra.mxu0 %v517
      %v850 = vpop.f32.mrf.mxu0
      %v851 = vadd.f32 %v307, %v850
      %v852 = vpop.f32.mrf.mxu0
      %v853 = vadd.f32 %v307, %v852
      %854 = vmatmul.bf16.gmra.mxu0 %v521
      %v855 = vpop.f32.mrf.mxu0
      %v856 = vadd.f32 %v307, %v855
      %v857 = vpop.f32.mrf.mxu0
      %v858 = vadd.f32 %v307, %v857
      %859 = vmatmul.bf16.gmra.mxu0 %v525
      %v860 = vpop.f32.mrf.mxu0
      %v861 = vadd.f32 %v307, %v860
      %v862 = vpop.f32.mrf.mxu0
      %v863 = vadd.f32 %v307, %v862
      %864 = vmatmul.bf16.gmra.mxu0 %v529
      %v865 = vpop.f32.mrf.mxu0
      %v866 = vadd.f32 %v307, %v865
      %v867 = vpop.f32.mrf.mxu0
      %v868 = vadd.f32 %v307, %v867
      %869 = vmatmul.bf16.gmra.mxu0 %v533
      %v870 = vpop.f32.mrf.mxu0
      %v871 = vadd.f32 %v307, %v870
      %v872 = vpop.f32.mrf.mxu0
      %v873 = vadd.f32 %v307, %v872
      %874 = vmatmul.bf16.gmra.mxu0 %v537
      %v875 = vpop.f32.mrf.mxu0
      %v876 = vadd.f32 %v307, %v875
      %v877 = vpop.f32.mrf.mxu0
      %v878 = vadd.f32 %v307, %v877
      %879 = vmatmul.bf16.gmra.mxu0 %v541
      %v880 = vpop.f32.mrf.mxu0
      %v881 = vadd.f32 %v307, %v880
      %v882 = vpop.f32.mrf.mxu0
      %v883 = vadd.f32 %v307, %v882
      %884 = vmatmul.bf16.gmra.mxu0 %v545
      %v885 = vpop.f32.mrf.mxu0
      %v886 = vadd.f32 %v307, %v885
      %v887 = vpop.f32.mrf.mxu0
      %v888 = vadd.f32 %v307, %v887
      %889 = vmatmul.bf16.gmra.mxu0 %v549
      %v890 = vpop.f32.mrf.mxu0
      %v891 = vadd.f32 %v307, %v890
      %v892 = vpop.f32.mrf.mxu0
      %v893 = vadd.f32 %v307, %v892
      %894 = vmatmul.bf16.gmra.mxu0 %v553
      %v895 = vpop.f32.mrf.mxu0
      %v896 = vadd.f32 %v307, %v895
      %v897 = vpop.f32.mrf.mxu0
      %v898 = vadd.f32 %v307, %v897
      %899 = vmatmul.bf16.gmra.mxu0 %v557
      %v900 = vpop.f32.mrf.mxu0
      %v901 = vadd.f32 %v307, %v900
      %v902 = vpop.f32.mrf.mxu0
      %v903 = vadd.f32 %v307, %v902
      %904 = vmatmul.bf16.gmra.mxu0 %v561
      %v905 = vpop.f32.mrf.mxu0
      %v906 = vadd.f32 %v307, %v905
      %v907 = vpop.f32.mrf.mxu0
      %v908 = vadd.f32 %v307, %v907
      %909 = vdwg.mxu0
      %910 = vmatpush.bf16.msra.mxu0 %v772
      %911 = vmatpush.bf16.msra.mxu0 %v771
      %912 = vmatpush.bf16.msra.mxu0 %v770
      %913 = vmatpush.bf16.msra.mxu0 %v769
      %914 = vmatpush.bf16.msra.mxu0 %v768
      %915 = vmatpush.bf16.msra.mxu0 %v767
      %916 = vmatpush.bf16.msra.mxu0 %v766
      %917 = vmatpush.bf16.msra.mxu0 %v765
      %918 = vmatmul.bf16.gmra.mxu0 %v502
      %v919 = vpop.f32.mrf.mxu0
      %v920 = vadd.f32 %v831, %v919
      %v921 = vpop.f32.mrf.mxu0
      %v922 = vadd.f32 %v833, %v921
      %923 = vmatmul.bf16.gmra.mxu0 %v506
      %v924 = vpop.f32.mrf.mxu0
      %v925 = vadd.f32 %v836, %v924
      %v926 = vpop.f32.mrf.mxu0
      %v927 = vadd.f32 %v838, %v926
      %928 = vmatmul.bf16.gmra.mxu0 %v510
      %v929 = vpop.f32.mrf.mxu0
      %v930 = vadd.f32 %v841, %v929
      %v931 = vpop.f32.mrf.mxu0
      %v932 = vadd.f32 %v843, %v931
      %933 = vmatmul.bf16.gmra.mxu0 %v514
      %v934 = vpop.f32.mrf.mxu0
      %v935 = vadd.f32 %v846, %v934
      %v936 = vpop.f32.mrf.mxu0
      %v937 = vadd.f32 %v848, %v936
      %938 = vmatmul.bf16.gmra.mxu0 %v518
      %v939 = vpop.f32.mrf.mxu0
      %v940 = vadd.f32 %v851, %v939
      %v941 = vpop.f32.mrf.mxu0
      %v942 = vadd.f32 %v853, %v941
      %943 = vmatmul.bf16.gmra.mxu0 %v522
      %v944 = vpop.f32.mrf.mxu0
      %v945 = vadd.f32 %v856, %v944
      %v946 = vpop.f32.mrf.mxu0
      %v947 = vadd.f32 %v858, %v946
      %948 = vmatmul.bf16.gmra.mxu0 %v526
      %v949 = vpop.f32.mrf.mxu0
      %v950 = vadd.f32 %v861, %v949
      %v951 = vpop.f32.mrf.mxu0
      %v952 = vadd.f32 %v863, %v951
      %953 = vmatmul.bf16.gmra.mxu0 %v530
      %v954 = vpop.f32.mrf.mxu0
      %v955 = vadd.f32 %v866, %v954
      %v956 = vpop.f32.mrf.mxu0
      %v957 = vadd.f32 %v868, %v956
      %958 = vmatmul.bf16.gmra.mxu0 %v534
      %v959 = vpop.f32.mrf.mxu0
      %v960 = vadd.f32 %v871, %v959
      %v961 = vpop.f32.mrf.mxu0
      %v962 = vadd.f32 %v873, %v961
      %963 = vmatmul.bf16.gmra.mxu0 %v538
      %v964 = vpop.f32.mrf.mxu0
      %v965 = vadd.f32 %v876, %v964
      %v966 = vpop.f32.mrf.mxu0
      %v967 = vadd.f32 %v878, %v966
      %968 = vmatmul.bf16.gmra.mxu0 %v542
      %v969 = vpop.f32.mrf.mxu0
      %v970 = vadd.f32 %v881, %v969
      %v971 = vpop.f32.mrf.mxu0
      %v972 = vadd.f32 %v883, %v971
      %973 = vmatmul.bf16.gmra.mxu0 %v546
      %v974 = vpop.f32.mrf.mxu0
      %v975 = vadd.f32 %v886, %v974
      %v976 = vpop.f32.mrf.mxu0
      %v977 = vadd.f32 %v888, %v976
      %978 = vmatmul.bf16.gmra.mxu0 %v550
      %v979 = vpop.f32.mrf.mxu0
      %v980 = vadd.f32 %v891, %v979
      %v981 = vpop.f32.mrf.mxu0
      %v982 = vadd.f32 %v893, %v981
      %983 = vmatmul.bf16.gmra.mxu0 %v554
      %v984 = vpop.f32.mrf.mxu0
      %v985 = vadd.f32 %v896, %v984
      %v986 = vpop.f32.mrf.mxu0
      %v987 = vadd.f32 %v898, %v986
      %988 = vmatmul.bf16.gmra.mxu0 %v558
      %v989 = vpop.f32.mrf.mxu0
      %v990 = vadd.f32 %v901, %v989
      %v991 = vpop.f32.mrf.mxu0
      %v992 = vadd.f32 %v903, %v991
      %993 = vmatmul.bf16.gmra.mxu0 %v562
      %v994 = vpop.f32.mrf.mxu0
      %v995 = vadd.f32 %v906, %v994
      %v996 = vpop.f32.mrf.mxu0
      %v997 = vadd.f32 %v908, %v996
      %998 = vdwg.mxu0
      %999 = vmatpush.bf16.msra.mxu0 %v780
      %1000 = vmatpush.bf16.msra.mxu0 %v779
      %1001 = vmatpush.bf16.msra.mxu0 %v778
      %1002 = vmatpush.bf16.msra.mxu0 %v777
      %1003 = vmatpush.bf16.msra.mxu0 %v776
      %1004 = vmatpush.bf16.msra.mxu0 %v775
      %1005 = vmatpush.bf16.msra.mxu0 %v774
      %1006 = vmatpush.bf16.msra.mxu0 %v773
      %1007 = vmatmul.bf16.gmra.mxu0 %v503
      %v1008 = vpop.f32.mrf.mxu0
      %v1009 = vadd.f32 %v920, %v1008
      %v1010 = vpop.f32.mrf.mxu0
      %v1011 = vadd.f32 %v922, %v1010
      %1012 = vmatmul.bf16.gmra.mxu0 %v507
      %v1013 = vpop.f32.mrf.mxu0
      %v1014 = vadd.f32 %v925, %v1013
      %v1015 = vpop.f32.mrf.mxu0
      %v1016 = vadd.f32 %v927, %v1015
      %1017 = vmatmul.bf16.gmra.mxu0 %v511
      %v1018 = vpop.f32.mrf.mxu0
      %v1019 = vadd.f32 %v930, %v1018
      %v1020 = vpop.f32.mrf.mxu0
      %v1021 = vadd.f32 %v932, %v1020
      %1022 = vmatmul.bf16.gmra.mxu0 %v515
      %v1023 = vpop.f32.mrf.mxu0
      %v1024 = vadd.f32 %v935, %v1023
      %v1025 = vpop.f32.mrf.mxu0
      %v1026 = vadd.f32 %v937, %v1025
      %1027 = vmatmul.bf16.gmra.mxu0 %v519
      %v1028 = vpop.f32.mrf.mxu0
      %v1029 = vadd.f32 %v940, %v1028
      %v1030 = vpop.f32.mrf.mxu0
      %v1031 = vadd.f32 %v942, %v1030
      %1032 = vmatmul.bf16.gmra.mxu0 %v523
      %v1033 = vpop.f32.mrf.mxu0
      %v1034 = vadd.f32 %v945, %v1033
      %v1035 = vpop.f32.mrf.mxu0
      %v1036 = vadd.f32 %v947, %v1035
      %1037 = vmatmul.bf16.gmra.mxu0 %v527
      %v1038 = vpop.f32.mrf.mxu0
      %v1039 = vadd.f32 %v950, %v1038
      %v1040 = vpop.f32.mrf.mxu0
      %v1041 = vadd.f32 %v952, %v1040
      %1042 = vmatmul.bf16.gmra.mxu0 %v531
      %v1043 = vpop.f32.mrf.mxu0
      %v1044 = vadd.f32 %v955, %v1043
      %v1045 = vpop.f32.mrf.mxu0
      %v1046 = vadd.f32 %v957, %v1045
      %1047 = vmatmul.bf16.gmra.mxu0 %v535
      %v1048 = vpop.f32.mrf.mxu0
      %v1049 = vadd.f32 %v960, %v1048
      %v1050 = vpop.f32.mrf.mxu0
      %v1051 = vadd.f32 %v962, %v1050
      %1052 = vmatmul.bf16.gmra.mxu0 %v539
      %v1053 = vpop.f32.mrf.mxu0
      %v1054 = vadd.f32 %v965, %v1053
      %v1055 = vpop.f32.mrf.mxu0
      %v1056 = vadd.f32 %v967, %v1055
      %1057 = vmatmul.bf16.gmra.mxu0 %v543
      %v1058 = vpop.f32.mrf.mxu0
      %v1059 = vadd.f32 %v970, %v1058
      %v1060 = vpop.f32.mrf.mxu0
      %v1061 = vadd.f32 %v972, %v1060
      %1062 = vmatmul.bf16.gmra.mxu0 %v547
      %v1063 = vpop.f32.mrf.mxu0
      %v1064 = vadd.f32 %v975, %v1063
      %v1065 = vpop.f32.mrf.mxu0
      %v1066 = vadd.f32 %v977, %v1065
      %1067 = vmatmul.bf16.gmra.mxu0 %v551
      %v1068 = vpop.f32.mrf.mxu0
      %v1069 = vadd.f32 %v980, %v1068
      %v1070 = vpop.f32.mrf.mxu0
      %v1071 = vadd.f32 %v982, %v1070
      %1072 = vmatmul.bf16.gmra.mxu0 %v555
      %v1073 = vpop.f32.mrf.mxu0
      %v1074 = vadd.f32 %v985, %v1073
      %v1075 = vpop.f32.mrf.mxu0
      %v1076 = vadd.f32 %v987, %v1075
      %1077 = vmatmul.bf16.gmra.mxu0 %v559
      %v1078 = vpop.f32.mrf.mxu0
      %v1079 = vadd.f32 %v990, %v1078
      %v1080 = vpop.f32.mrf.mxu0
      %v1081 = vadd.f32 %v992, %v1080
      %1082 = vmatmul.bf16.gmra.mxu0 %v563
      %v1083 = vpop.f32.mrf.mxu0
      %v1084 = vadd.f32 %v995, %v1083
      %v1085 = vpop.f32.mrf.mxu0
      %v1086 = vadd.f32 %v997, %v1085
      %1087 = vdwg.mxu0
      %1088 = vmatpush.bf16.msra.mxu0 %v788
      %1089 = vmatpush.bf16.msra.mxu0 %v787
      %1090 = vmatpush.bf16.msra.mxu0 %v786
      %1091 = vmatpush.bf16.msra.mxu0 %v785
      %1092 = vmatpush.bf16.msra.mxu0 %v784
      %1093 = vmatpush.bf16.msra.mxu0 %v783
      %1094 = vmatpush.bf16.msra.mxu0 %v782
      %1095 = vmatpush.bf16.msra.mxu0 %v781
      %1096 = vmatmul.bf16.gmra.mxu0 %v504
      %v1097 = vpop.f32.mrf.mxu0
      %v1098 = vadd.f32 %v1009, %v1097
      %v1099 = vpop.f32.mrf.mxu0
      %v1100 = vadd.f32 %v1011, %v1099
      %1101 = vmatmul.bf16.gmra.mxu0 %v508
      %v1102 = vpop.f32.mrf.mxu0
      %v1103 = vadd.f32 %v1014, %v1102
      %v1104 = vpop.f32.mrf.mxu0
      %v1105 = vadd.f32 %v1016, %v1104
      %1106 = vmatmul.bf16.gmra.mxu0 %v512
      %v1107 = vpop.f32.mrf.mxu0
      %v1108 = vadd.f32 %v1019, %v1107
      %v1109 = vpop.f32.mrf.mxu0
      %v1110 = vadd.f32 %v1021, %v1109
      %1111 = vmatmul.bf16.gmra.mxu0 %v516
      %v1112 = vpop.f32.mrf.mxu0
      %v1113 = vadd.f32 %v1024, %v1112
      %v1114 = vpop.f32.mrf.mxu0
      %v1115 = vadd.f32 %v1026, %v1114
      %1116 = vmatmul.bf16.gmra.mxu0 %v520
      %v1117 = vpop.f32.mrf.mxu0
      %v1118 = vadd.f32 %v1029, %v1117
      %v1119 = vpop.f32.mrf.mxu0
      %v1120 = vadd.f32 %v1031, %v1119
      %1121 = vmatmul.bf16.gmra.mxu0 %v524
      %v1122 = vpop.f32.mrf.mxu0
      %v1123 = vadd.f32 %v1034, %v1122
      %v1124 = vpop.f32.mrf.mxu0
      %v1125 = vadd.f32 %v1036, %v1124
      %1126 = vmatmul.bf16.gmra.mxu0 %v528
      %v1127 = vpop.f32.mrf.mxu0
      %v1128 = vadd.f32 %v1039, %v1127
      %v1129 = vpop.f32.mrf.mxu0
      %v1130 = vadd.f32 %v1041, %v1129
      %1131 = vmatmul.bf16.gmra.mxu0 %v532
      %v1132 = vpop.f32.mrf.mxu0
      %v1133 = vadd.f32 %v1044, %v1132
      %v1134 = vpop.f32.mrf.mxu0
      %v1135 = vadd.f32 %v1046, %v1134
      %1136 = vmatmul.bf16.gmra.mxu0 %v536
      %v1137 = vpop.f32.mrf.mxu0
      %v1138 = vadd.f32 %v1049, %v1137
      %v1139 = vpop.f32.mrf.mxu0
      %v1140 = vadd.f32 %v1051, %v1139
      %1141 = vmatmul.bf16.gmra.mxu0 %v540
      %v1142 = vpop.f32.mrf.mxu0
      %v1143 = vadd.f32 %v1054, %v1142
      %v1144 = vpop.f32.mrf.mxu0
      %v1145 = vadd.f32 %v1056, %v1144
      %1146 = vmatmul.bf16.gmra.mxu0 %v544
      %v1147 = vpop.f32.mrf.mxu0
      %v1148 = vadd.f32 %v1059, %v1147
      %v1149 = vpop.f32.mrf.mxu0
      %v1150 = vadd.f32 %v1061, %v1149
      %1151 = vmatmul.bf16.gmra.mxu0 %v548
      %v1152 = vpop.f32.mrf.mxu0
      %v1153 = vadd.f32 %v1064, %v1152
      %v1154 = vpop.f32.mrf.mxu0
      %v1155 = vadd.f32 %v1066, %v1154
      %1156 = vmatmul.bf16.gmra.mxu0 %v552
      %v1157 = vpop.f32.mrf.mxu0
      %v1158 = vadd.f32 %v1069, %v1157
      %v1159 = vpop.f32.mrf.mxu0
      %v1160 = vadd.f32 %v1071, %v1159
      %1161 = vmatmul.bf16.gmra.mxu0 %v556
      %v1162 = vpop.f32.mrf.mxu0
      %v1163 = vadd.f32 %v1074, %v1162
      %v1164 = vpop.f32.mrf.mxu0
      %v1165 = vadd.f32 %v1076, %v1164
      %1166 = vmatmul.bf16.gmra.mxu0 %v560
      %v1167 = vpop.f32.mrf.mxu0
      %v1168 = vadd.f32 %v1079, %v1167
      %v1169 = vpop.f32.mrf.mxu0
      %v1170 = vadd.f32 %v1081, %v1169
      %1171 = vmatmul.bf16.gmra.mxu0 %v564
      %v1172 = vpop.f32.mrf.mxu0
      %v1173 = vadd.f32 %v1084, %v1172
      %v1174 = vpop.f32.mrf.mxu0
      %v1175 = vadd.f32 %v1086, %v1174
      %1176 = vdwg.mxu0
      %v1177 = vmax.f32 %v1098, 0.0
      %v1178 = vmax.f32 %v1100, 0.0
      %v1179 = vmax.f32 %v1103, 0.0
      %v1180 = vmax.f32 %v1105, 0.0
      %v1181 = vmax.f32 %v1108, 0.0
      %v1182 = vmax.f32 %v1110, 0.0
      %v1183 = vmax.f32 %v1113, 0.0
      %v1184 = vmax.f32 %v1115, 0.0
      %v1185 = vmax.f32 %v1118, 0.0
      %v1186 = vmax.f32 %v1120, 0.0
      %v1187 = vmax.f32 %v1123, 0.0
      %v1188 = vmax.f32 %v1125, 0.0
      %v1189 = vmax.f32 %v1128, 0.0
      %v1190 = vmax.f32 %v1130, 0.0
      %v1191 = vmax.f32 %v1133, 0.0
      %v1192 = vmax.f32 %v1135, 0.0
      %v1193 = vmax.f32 %v1138, 0.0
      %v1194 = vmax.f32 %v1140, 0.0
      %v1195 = vmax.f32 %v1143, 0.0
      %v1196 = vmax.f32 %v1145, 0.0
      %v1197 = vmax.f32 %v1148, 0.0
      %v1198 = vmax.f32 %v1150, 0.0
      %v1199 = vmax.f32 %v1153, 0.0
      %v1200 = vmax.f32 %v1155, 0.0
      %v1201 = vmax.f32 %v1158, 0.0
      %v1202 = vmax.f32 %v1160, 0.0
      %v1203 = vmax.f32 %v1163, 0.0
      %v1204 = vmax.f32 %v1165, 0.0
      %v1205 = vmax.f32 %v1168, 0.0
      %v1206 = vmax.f32 %v1170, 0.0
      %v1207 = vmax.f32 %v1173, 0.0
      %v1208 = vmax.f32 %v1175, 0.0
      %v1209 = vpack.c.bf16 %v1177, %v1177
      %v1210 = vpack.c.bf16 %v1178, %v1178
      %v1211 = vpack.c.bf16 %v1179, %v1179
      %v1212 = vpack.c.bf16 %v1180, %v1180
      %v1213 = vpack.c.bf16 %v1181, %v1181
      %v1214 = vpack.c.bf16 %v1182, %v1182
      %v1215 = vpack.c.bf16 %v1183, %v1183
      %v1216 = vpack.c.bf16 %v1184, %v1184
      %v1217 = vpack.c.bf16 %v1185, %v1185
      %v1218 = vpack.c.bf16 %v1186, %v1186
      %v1219 = vpack.c.bf16 %v1187, %v1187
      %v1220 = vpack.c.bf16 %v1188, %v1188
      %v1221 = vpack.c.bf16 %v1189, %v1189
      %v1222 = vpack.c.bf16 %v1190, %v1190
      %v1223 = vpack.c.bf16 %v1191, %v1191
      %v1224 = vpack.c.bf16 %v1192, %v1192
      %v1225 = vpack.c.bf16 %v1193, %v1193
      %v1226 = vpack.c.bf16 %v1194, %v1194
      %v1227 = vpack.c.bf16 %v1195, %v1195
      %v1228 = vpack.c.bf16 %v1196, %v1196
      %v1229 = vpack.c.bf16 %v1197, %v1197
      %v1230 = vpack.c.bf16 %v1198, %v1198
      %v1231 = vpack.c.bf16 %v1199, %v1199
      %v1232 = vpack.c.bf16 %v1200, %v1200
      %v1233 = vpack.c.bf16 %v1201, %v1201
      %v1234 = vpack.c.bf16 %v1202, %v1202
      %v1235 = vpack.c.bf16 %v1203, %v1203
      %v1236 = vpack.c.bf16 %v1204, %v1204
      %v1237 = vpack.c.bf16 %v1205, %v1205
      %v1238 = vpack.c.bf16 %v1206, %v1206
      %v1239 = vpack.c.bf16 %v1207, %v1207
      %v1240 = vpack.c.bf16 %v1208, %v1208
      %1241 = vst [vmem:[%s175] sm:$0xf] %v1209
      %1242 = vst [vmem:[%s175 + $0x4] sm:$0xf] %v1210
      %1243 = vst [vmem:[%s175 + $0x8] sm:$0xf] %v1211
      %1244 = vst [vmem:[%s175 + $0xc] sm:$0xf] %v1212
      %1245 = vst [vmem:[%s175 + $0x10] sm:$0xf] %v1213
      %1246 = vst [vmem:[%s175 + $0x14] sm:$0xf] %v1214
      %1247 = vst [vmem:[%s175 + $0x18] sm:$0xf] %v1215
      %1248 = vst [vmem:[%s175 + $0x1c] sm:$0xf] %v1216
      %1249 = vst [vmem:[%s175 + $0x20] sm:$0xf] %v1217
      %1250 = vst [vmem:[%s175 + $0x24] sm:$0xf] %v1218
      %1251 = vst [vmem:[%s175 + $0x28] sm:$0xf] %v1219
      %1252 = vst [vmem:[%s175 + $0x2c] sm:$0xf] %v1220
      %1253 = vst [vmem:[%s175 + $0x30] sm:$0xf] %v1221
      %1254 = vst [vmem:[%s175 + $0x34] sm:$0xf] %v1222
      %1255 = vst [vmem:[%s175 + $0x38] sm:$0xf] %v1223
      %1256 = vst [vmem:[%s175 + $0x3c] sm:$0xf] %v1224
      %1257 = vst [vmem:[%s175 + $0x40] sm:$0xf] %v1225
      %1258 = vst [vmem:[%s175 + $0x44] sm:$0xf] %v1226
      %1259 = vst [vmem:[%s175 + $0x48] sm:$0xf] %v1227
      %1260 = vst [vmem:[%s175 + $0x4c] sm:$0xf] %v1228
      %1261 = vst [vmem:[%s175 + $0x50] sm:$0xf] %v1229
      %1262 = vst [vmem:[%s175 + $0x54] sm:$0xf] %v1230
      %1263 = vst [vmem:[%s175 + $0x58] sm:$0xf] %v1231
      %1264 = vst [vmem:[%s175 + $0x5c] sm:$0xf] %v1232
      %1265 = vst [vmem:[%s175 + $0x60] sm:$0xf] %v1233
      %1266 = vst [vmem:[%s175 + $0x64] sm:$0xf] %v1234
      %1267 = vst [vmem:[%s175 + $0x68] sm:$0xf] %v1235
      %1268 = vst [vmem:[%s175 + $0x6c] sm:$0xf] %v1236
      %1269 = vst [vmem:[%s175 + $0x70] sm:$0xf] %v1237
      %1270 = vst [vmem:[%s175 + $0x74] sm:$0xf] %v1238
      %1271 = vst [vmem:[%s175 + $0x78] sm:$0xf] %v1239
      %1272 = vst [vmem:[%s175 + $0x7c] sm:$0xf] %v1240
      %s1273 = smul.u32 32, %s14
      %p1274 = scmp.lt.s32.totalorder %s1273, 63
      %s1275 = scalar_select %p1274, %s1273, 63
      %s1276 = smul.addr %s1275, 4
      %s1277 = scalar_lea.vmem %s3, %s1276
      // Predicated region
      $region33: #{forward.13} parent=31 // pred_check
        %p1278 = pneg %p100
      $region34: #{forward.13} parent=31 // pred_check_branch
        %1280 = sbr.rel (%p1278) target = $region36
      $region35: #{forward.13} parent=31 // pred_region
        %s1281 = smul.u32 32, %s14
      $region36: #{forward.13} parent=31 // pred_fallthru
        _
    $region32: #{forward.13} parent=5 // pred_fallthru
      _
    %p1282 = scmp.le.s32.totalorder 2, %s9
    // Predicated region
    $region37: #{forward.13} parent=5 // pred_check
      %p1283 = pneg %p1282
    $region38: #{forward.13} parent=5 // pred_check_branch
      %1285 = sbr.rel (%p1283) target = $region40
    $region39: #{forward.13} parent=5 // pred_region
      %s1286 = ssub.s32 %s9, 2
      // Predicated region
      $region41: #{forward.13} parent=39 // pred_check
        %p1287 = pneg %p106
      $region42: #{forward.13} parent=39 // pred_check_branch
        %1289 = sbr.rel (%p1287) target = $region44
      $region43: #{forward.13} parent=39 // pred_region
        %s1290 = smul.u32 32, %s15
        %p1291 = scmp.lt.s32.totalorder %s1290, 63
        %s1292 = scalar_select %p1291, %s1290, 63
        %s1293 = smul.addr %s1292, 4
        %s1294 = scalar_lea.vmem %s3, %s1293
      $region44: #{forward.13} parent=39 // pred_fallthru
        _
    $region40: #{forward.13} parent=5 // pred_fallthru
      _
  $region6: #{forward.13} parent=0 // loop_footer
    %s13 = sadd.s32 1, %s9
  $region7: #{forward.13} parent=0 // loop_footer_branch
    %8 = sbr.rel target = $region3
  $region8: #{forward.13} parent=0 // loop_exit
    _

// kernel: forward.14
$region0: #{forward.14}
  #allocation0 [shape = 'u32[]', space=smem, size = 0x4, offset = 0x4, fixed_abs, tag = 'smem constant byte address 0x4 - core index']
  #allocation1 [shape = 'u32[72,128]{1,0:T(1,128)}', space=vmem, size = 0x9000, scoped, tag = 'internal scratch']
  %s0 = inlined_call_operand.vmem [shape: bf16[512,128], index: 0, kind: input, shape index: {}]
  %s1 = inlined_call_operand.vmem [shape: bf16[128,128], index: 1, kind: input, shape index: {}]
  %s2 = inlined_call_operand.vmem [shape: f32[1,128], index: 2, kind: input, shape index: {}]
  %s3 = inlined_call_operand.vmem [shape: bf16[512,128], index: 3, kind: output, shape index: {}]
  %s4 = sld [smem:[#allocation0]]
  $region45: #{forward.14} parent=0
    _
  %s6 = ssub.s32 1, %s4
  %s7 = scalar_select 0, %s6, %s4
  loop: start=0, step=1, limit=4
  $region2: #{forward.14} parent=0 // loop_pre_header
    _
  $region3: #{forward.14} parent=0 // loop_header
    %s9 = sphi 0, %s13
    %p10 = scmp.ge.s32.totalorder %s9, 4
    %s19 = sphi 0, %s21
    %s22 = sphi 0, %s19
    %s23 = sphi 0, %s22
    %s39 = sphi 0, %s23
    %s43 = sphi 0, %s43
    %s45 = sphi 0, %s43
    %s46 = sphi 0, %s45
    %s60 = sphi 0, %s46
    %s64 = sphi 0, %s64
    %s66 = sphi 0, %s64
    %s67 = sphi 0, %s66
    %s81 = sphi 0, %s67
    %s87 = sphi 0, %s89
    %s90 = sphi 0, %s87
    %s91 = sphi 0, %s90
    %s107 = sphi 0, %s91
  $region4: #{forward.14} parent=0 // loop_header_branch
    %12 = sbr.rel (%p10) target = $region8
  $region5: #{forward.14} parent=0 // loop_body
    %s14 = ssub.s32 %s9, 1
    %s15 = ssub.s32 %s9, 2
    %s16 = sadd.s32 %s9, 1
    %s17 = ssub.s32 %s9, %s16
    %p18 = scmp.eq.s32.totalorder %s17, 0
    %s20 = sadd.s32 %s19, 1
    %s21 = scalar_select %p18, %s19, %s20
    %p24 = pneg %p18
    %p25 = scmp.eq.s32.totalorder %s9, 1
    %p26 = por %p24, %p25
    %p27 = scmp.ne.s32.totalorder %s19, %s22
    %p28 = scmp.eq.s32.totalorder %s9, 0
    %p29 = por %p27, %p28
    %p30 = scmp.ne.s32.totalorder %s19, %s22
    %p31 = scmp.eq.s32.totalorder %s14, 1
    %p32 = por %p30, %p31
    %p33 = scmp.ne.s32.totalorder %s22, %s23
    %p34 = scmp.eq.s32.totalorder %s14, 0
    %p35 = por %p33, %p34
    %p36 = scmp.ne.s32.totalorder %s22, %s23
    %p37 = scmp.eq.s32.totalorder %s15, 1
    %p38 = por %p36, %p37
    %p40 = scmp.ne.s32.totalorder %s23, %s39
    %p41 = scmp.eq.s32.totalorder %s15, 0
    %p42 = por %p40, %p41
    %s44 = sadd.s32 %s43, 1
    %p47 = scmp.eq.s32.totalorder %s9, 1
    %p48 = scmp.ne.s32.totalorder %s43, %s45
    %p49 = scmp.eq.s32.totalorder %s9, 0
    %p50 = por %p48, %p49
    %p51 = scmp.ne.s32.totalorder %s43, %s45
    %p52 = scmp.eq.s32.totalorder %s14, 1
    %p53 = por %p51, %p52
    %p54 = scmp.ne.s32.totalorder %s45, %s46
    %p55 = scmp.eq.s32.totalorder %s14, 0
    %p56 = por %p54, %p55
    %p57 = scmp.ne.s32.totalorder %s45, %s46
    %p58 = scmp.eq.s32.totalorder %s15, 1
    %p59 = por %p57, %p58
    %p61 = scmp.ne.s32.totalorder %s46, %s60
    %p62 = scmp.eq.s32.totalorder %s15, 0
    %p63 = por %p61, %p62
    %s65 = sadd.s32 %s64, 1
    %p68 = scmp.eq.s32.totalorder %s9, 1
    %p69 = scmp.ne.s32.totalorder %s64, %s66
    %p70 = scmp.eq.s32.totalorder %s9, 0
    %p71 = por %p69, %p70
    %p72 = scmp.ne.s32.totalorder %s64, %s66
    %p73 = scmp.eq.s32.totalorder %s14, 1
    %p74 = por %p72, %p73
    %p75 = scmp.ne.s32.totalorder %s66, %s67
    %p76 = scmp.eq.s32.totalorder %s14, 0
    %p77 = por %p75, %p76
    %p78 = scmp.ne.s32.totalorder %s66, %s67
    %p79 = scmp.eq.s32.totalorder %s15, 1
    %p80 = por %p78, %p79
    %p82 = scmp.ne.s32.totalorder %s67, %s81
    %p83 = scmp.eq.s32.totalorder %s15, 0
    %p84 = por %p82, %p83
    %s85 = ssub.s32 %s9, %s16
    %p86 = scmp.eq.s32.totalorder %s85, 0
    %s88 = sadd.s32 %s87, 1
    %s89 = scalar_select %p86, %s87, %s88
    %p92 = pneg %p86
    %p93 = scmp.eq.s32.totalorder %s9, 1
    %p94 = por %p92, %p93
    %p95 = scmp.ne.s32.totalorder %s87, %s90
    %p96 = scmp.eq.s32.totalorder %s9, 0
    %p97 = por %p95, %p96
    %p98 = scmp.ne.s32.totalorder %s87, %s90
    %p99 = scmp.eq.s32.totalorder %s14, 1
    %p100 = por %p98, %p99
    %p101 = scmp.ne.s32.totalorder %s90, %s91
    %p102 = scmp.eq.s32.totalorder %s14, 0
    %p103 = por %p101, %p102
    %p104 = scmp.ne.s32.totalorder %s90, %s91
    %p105 = scmp.eq.s32.totalorder %s15, 1
    %p106 = por %p104, %p105
    %p108 = scmp.ne.s32.totalorder %s91, %s107
    %p109 = scmp.eq.s32.totalorder %s15, 0
    %p110 = por %p108, %p109
    %p111 = scmp.le.s32.totalorder 1, %s9
    %p112 = scmp.lt.s32.totalorder %s9, 3
    %p113 = pnand %p111, %p112
    %p114 = pneg %p113
    // Predicated region
    $region9: #{forward.14} parent=5 // pred_check
      _
    $region10: #{forward.14} parent=5 // pred_check_branch
      %116 = sbr.rel (%p113) target = $region12
    $region11: #{forward.14} parent=5 // pred_region
      %s117 = ssub.s32 %s9, 1
      // Predicated region
      $region13: #{forward.14} parent=11 // pred_check
        %p118 = pneg %p56
      $region14: #{forward.14} parent=11 // pred_check_branch
        %120 = sbr.rel (%p118) target = $region16
      $region15: #{forward.14} parent=11 // pred_region
        _
      $region16: #{forward.14} parent=11 // pred_fallthru
        _
      // Predicated region
      $region17: #{forward.14} parent=11 // pred_check
        %p121 = pneg %p77
      $region18: #{forward.14} parent=11 // pred_check_branch
        %123 = sbr.rel (%p121) target = $region20
      $region19: #{forward.14} parent=11 // pred_region
        _
      $region20: #{forward.14} parent=11 // pred_fallthru
        _
    $region12: #{forward.14} parent=5 // pred_fallthru
      _
    %p124 = scmp.lt.s32.totalorder %s9, 2
    // Predicated region
    $region21: #{forward.14} parent=5 // pred_check
      %p125 = pneg %p124
    $region22: #{forward.14} parent=5 // pred_check_branch
      %127 = sbr.rel (%p125) target = $region24
    $region23: #{forward.14} parent=5 // pred_region
      // Predicated region
      $region25: #{forward.14} parent=23 // pred_check
        %p128 = pneg %p29
      $region26: #{forward.14} parent=23 // pred_check_branch
        %130 = sbr.rel (%p128) target = $region28
      $region27: #{forward.14} parent=23 // pred_region
        %s131 = smul.u32 32, %s9
        %p132 = scmp.lt.s32.totalorder %s131, 63
        %s133 = scalar_select %p132, %s131, 63
        %s134 = smul.addr %s133, 4
        %s135 = scalar_lea.vmem %s0, %s134
        %s136 = smul.u32 32, %s9
      $region28: #{forward.14} parent=23 // pred_fallthru
        _
    $region24: #{forward.14} parent=5 // pred_fallthru
      _
    %p137 = scmp.le.s32.totalorder 1, %s9
    %p138 = scmp.lt.s32.totalorder %s9, 3
    %p139 = pnand %p137, %p138
    %p140 = pneg %p139
    // Predicated region
    $region29: #{forward.14} parent=5 // pred_check
      _
    $region30: #{forward.14} parent=5 // pred_check_branch
      %142 = sbr.rel (%p139) target = $region32
    $region31: #{forward.14} parent=5 // pred_region
      %s143 = ssub.s32 %s9, 1
      %s144 = smul.u32 32, %s14
      %p145 = scmp.lt.s32.totalorder %s144, 63
      %s146 = scalar_select %p145, %s144, 63
      %s147 = smul.addr %s146, 4
      %s148 = scalar_lea.vmem %s0, %s147
      %p149 = pneg %p35
      %p150 = pneg %p32
      %p151 = pneg %p56
      %p152 = pneg %p53
      %p153 = pneg %p77
      %p154 = pneg %p74
      %p155 = pneg %p103
      %p156 = pneg %p100
      %s157 = smul.u32 32, %s14
      %p158 = scmp.lt.s32.totalorder %s157, 63
      %s159 = scalar_select %p158, %s157, 63
      %s160 = smul.addr %s159, 4
      %s161 = scalar_lea.vmem %s3, %s160
      %s162 = smul.u32 32, %s14
      %p163 = scmp.lt.s32.totalorder %s162, 63
      %s164 = scalar_select %p163, %s162, 63
      %s165 = smul.addr %s164, 4
      %s166 = scalar_lea.vmem %s0, %s165
      %s167 = smul.u32 32, %s14
      %s168 = smul.u32 32, %s14
      %p169 = scmp.lt.s32.totalorder %s168, 63
      %s170 = scalar_select %p169, %s168, 63
      %s171 = smul.addr %s170, 4
      %s172 = scalar_lea.vmem %s3, %s171
      %s173 = smul.u32 32, %s14
      %v174 = vld [vmem:[%s166] sm:$0xf]
      %v175 = vld [vmem:[%s166 + $0x4] sm:$0xf]
      %v176 = vld [vmem:[%s166 + $0x8] sm:$0xf]
      %v177 = vld [vmem:[%s166 + $0xc] sm:$0xf]
      %v178 = vld [vmem:[%s166 + $0x10] sm:$0xf]
      %v179 = vld [vmem:[%s166 + $0x14] sm:$0xf]
      %v180 = vld [vmem:[%s166 + $0x18] sm:$0xf]
      %v181 = vld [vmem:[%s166 + $0x1c] sm:$0xf]
      %v182 = vld [vmem:[%s166 + $0x20] sm:$0xf]
      %v183 = vld [vmem:[%s166 + $0x24] sm:$0xf]
      %v184 = vld [vmem:[%s166 + $0x28] sm:$0xf]
      %v185 = vld [vmem:[%s166 + $0x2c] sm:$0xf]
      %v186 = vld [vmem:[%s166 + $0x30] sm:$0xf]
      %v187 = vld [vmem:[%s166 + $0x34] sm:$0xf]
      %v188 = vld [vmem:[%s166 + $0x38] sm:$0xf]
      %v189 = vld [vmem:[%s166 + $0x3c] sm:$0xf]
      %v190 = vld [vmem:[%s166 + $0x40] sm:$0xf]
      %v191 = vld [vmem:[%s166 + $0x44] sm:$0xf]
      %v192 = vld [vmem:[%s166 + $0x48] sm:$0xf]
      %v193 = vld [vmem:[%s166 + $0x4c] sm:$0xf]
      %v194 = vld [vmem:[%s166 + $0x50] sm:$0xf]
      %v195 = vld [vmem:[%s166 + $0x54] sm:$0xf]
      %v196 = vld [vmem:[%s166 + $0x58] sm:$0xf]
      %v197 = vld [vmem:[%s166 + $0x5c] sm:$0xf]
      %v198 = vld [vmem:[%s166 + $0x60] sm:$0xf]
      %v199 = vld [vmem:[%s166 + $0x64] sm:$0xf]
      %v200 = vld [vmem:[%s166 + $0x68] sm:$0xf]
      %v201 = vld [vmem:[%s166 + $0x6c] sm:$0xf]
      %v202 = vld [vmem:[%s166 + $0x70] sm:$0xf]
      %v203 = vld [vmem:[%s166 + $0x74] sm:$0xf]
      %v204 = vld [vmem:[%s166 + $0x78] sm:$0xf]
      %v205 = vld [vmem:[%s166 + $0x7c] sm:$0xf]
      %v206 = vld [vmem:[%s1] sm:$0xf]
      %v207 = vld [vmem:[%s1 + $0x4] sm:$0xf]
      %v208 = vld [vmem:[%s1 + $0x8] sm:$0xf]
      %v209 = vld [vmem:[%s1 + $0xc] sm:$0xf]
      %v210 = vld [vmem:[%s1 + $0x10] sm:$0xf]
      %v211 = vld [vmem:[%s1 + $0x14] sm:$0xf]
      %v212 = vld [vmem:[%s1 + $0x18] sm:$0xf]
      %v213 = vld [vmem:[%s1 + $0x1c] sm:$0xf]
      %v214 = vld [vmem:[%s1 + $0x20] sm:$0xf]
      %v215 = vld [vmem:[%s1 + $0x24] sm:$0xf]
      %v216 = vld [vmem:[%s1 + $0x28] sm:$0xf]
      %v217 = vld [vmem:[%s1 + $0x2c] sm:$0xf]
      %v218 = vld [vmem:[%s1 + $0x30] sm:$0xf]
      %v219 = vld [vmem:[%s1 + $0x34] sm:$0xf]
      %v220 = vld [vmem:[%s1 + $0x38] sm:$0xf]
      %v221 = vld [vmem:[%s1 + $0x3c] sm:$0xf]
      %v222 = vld [vmem:[%s2] sm:$0x1]
      %v224 = vperm.slane %v222, 0
      %v258 = vunpack.c.l.b16 %v174
      %v259 = vunpack.c.l.b16 %v175
      %v260 = vunpack.c.l.b16 %v176
      %v261 = vunpack.c.l.b16 %v177
      %v262 = vunpack.c.l.b16 %v178
      %v263 = vunpack.c.l.b16 %v179
      %v264 = vunpack.c.l.b16 %v180
      %v265 = vunpack.c.l.b16 %v181
      %v266 = vunpack.c.l.b16 %v182
      %v267 = vunpack.c.l.b16 %v183
      %v268 = vunpack.c.l.b16 %v184
      %v269 = vunpack.c.l.b16 %v185
      %v270 = vunpack.c.l.b16 %v186
      %v271 = vunpack.c.l.b16 %v187
      %v272 = vunpack.c.l.b16 %v188
      %v273 = vunpack.c.l.b16 %v189
      %v274 = vunpack.c.l.b16 %v190
      %v275 = vunpack.c.l.b16 %v191
      %v276 = vunpack.c.l.b16 %v192
      %v277 = vunpack.c.l.b16 %v193
      %v278 = vunpack.c.l.b16 %v194
      %v279 = vunpack.c.l.b16 %v195
      %v280 = vunpack.c.l.b16 %v196
      %v281 = vunpack.c.l.b16 %v197
      %v282 = vunpack.c.l.b16 %v198
      %v283 = vunpack.c.l.b16 %v199
      %v284 = vunpack.c.l.b16 %v200
      %v285 = vunpack.c.l.b16 %v201
      %v286 = vunpack.c.l.b16 %v202
      %v287 = vunpack.c.l.b16 %v203
      %v288 = vunpack.c.l.b16 %v204
      %v289 = vunpack.c.l.b16 %v205
      %v290 = vpack.c.b16 %v259, %v258
      %v291 = vpack.c.b16 %v261, %v260
      %v292 = vpack.c.b16 %v263, %v262
      %v293 = vpack.c.b16 %v265, %v264
      %v294 = vpack.c.b16 %v267, %v266
      %v295 = vpack.c.b16 %v269, %v268
      %v296 = vpack.c.b16 %v271, %v270
      %v297 = vpack.c.b16 %v273, %v272
      %v298 = vpack.c.b16 %v275, %v274
      %v299 = vpack.c.b16 %v277, %v276
      %v300 = vpack.c.b16 %v279, %v278
      %v301 = vpack.c.b16 %v281, %v280
      %v302 = vpack.c.b16 %v283, %v282
      %v303 = vpack.c.b16 %v285, %v284
      %v304 = vpack.c.b16 %v287, %v286
      %v305 = vpack.c.b16 %v289, %v288
      %v338 = vunpack.c.l.b16 %v206
      %v339 = vunpack.c.l.b16 %v207
      %v340 = vunpack.c.l.b16 %v208
      %v341 = vunpack.c.l.b16 %v209
      %v342 = vunpack.c.l.b16 %v210
      %v343 = vunpack.c.l.b16 %v211
      %v344 = vunpack.c.l.b16 %v212
      %v345 = vunpack.c.l.b16 %v213
      %v346 = vunpack.c.l.b16 %v214
      %v347 = vunpack.c.l.b16 %v215
      %v348 = vunpack.c.l.b16 %v216
      %v349 = vunpack.c.l.b16 %v217
      %v350 = vunpack.c.l.b16 %v218
      %v351 = vunpack.c.l.b16 %v219
      %v352 = vunpack.c.l.b16 %v220
      %v353 = vunpack.c.l.b16 %v221
      %v354 = vpack.c.b16 %v339, %v338
      %v355 = vpack.c.b16 %v341, %v340
      %v356 = vpack.c.b16 %v343, %v342
      %v357 = vpack.c.b16 %v345, %v344
      %v358 = vpack.c.b16 %v347, %v346
      %v359 = vpack.c.b16 %v349, %v348
      %v360 = vpack.c.b16 %v351, %v350
      %v361 = vpack.c.b16 %v353, %v352
      %370 = vmatpush.bf16.msra.mxu0 %v361
      %371 = vmatpush.bf16.msra.mxu0 %v360
      %372 = vmatpush.bf16.msra.mxu0 %v359
      %373 = vmatpush.bf16.msra.mxu0 %v358
      %374 = vmatpush.bf16.msra.mxu0 %v357
      %375 = vmatpush.bf16.msra.mxu0 %v356
      %376 = vmatpush.bf16.msra.mxu0 %v355
      %377 = vmatpush.bf16.msra.mxu0 %v354
      %378 = vmatmul.bf16.gmra.mxu0 %v290
      %v379 = vpop.f32.mrf.mxu0
      %v380 = vadd.f32 %v224, %v379
      %v381 = vpop.f32.mrf.mxu0
      %v382 = vadd.f32 %v224, %v381
      %383 = vmatmul.bf16.gmra.mxu0 %v291
      %v384 = vpop.f32.mrf.mxu0
      %v385 = vadd.f32 %v224, %v384
      %v386 = vpop.f32.mrf.mxu0
      %v387 = vadd.f32 %v224, %v386
      %388 = vmatmul.bf16.gmra.mxu0 %v292
      %v389 = vpop.f32.mrf.mxu0
      %v390 = vadd.f32 %v224, %v389
      %v391 = vpop.f32.mrf.mxu0
      %v392 = vadd.f32 %v224, %v391
      %393 = vmatmul.bf16.gmra.mxu0 %v293
      %v394 = vpop.f32.mrf.mxu0
      %v395 = vadd.f32 %v224, %v394
      %v396 = vpop.f32.mrf.mxu0
      %v397 = vadd.f32 %v224, %v396
      %398 = vmatmul.bf16.gmra.mxu0 %v294
      %v399 = vpop.f32.mrf.mxu0
      %v400 = vadd.f32 %v224, %v399
      %v401 = vpop.f32.mrf.mxu0
      %v402 = vadd.f32 %v224, %v401
      %403 = vmatmul.bf16.gmra.mxu0 %v295
      %v404 = vpop.f32.mrf.mxu0
      %v405 = vadd.f32 %v224, %v404
      %v406 = vpop.f32.mrf.mxu0
      %v407 = vadd.f32 %v224, %v406
      %408 = vmatmul.bf16.gmra.mxu0 %v296
      %v409 = vpop.f32.mrf.mxu0
      %v410 = vadd.f32 %v224, %v409
      %v411 = vpop.f32.mrf.mxu0
      %v412 = vadd.f32 %v224, %v411
      %413 = vmatmul.bf16.gmra.mxu0 %v297
      %v414 = vpop.f32.mrf.mxu0
      %v415 = vadd.f32 %v224, %v414
      %v416 = vpop.f32.mrf.mxu0
      %v417 = vadd.f32 %v224, %v416
      %418 = vmatmul.bf16.gmra.mxu0 %v298
      %v419 = vpop.f32.mrf.mxu0
      %v420 = vadd.f32 %v224, %v419
      %v421 = vpop.f32.mrf.mxu0
      %v422 = vadd.f32 %v224, %v421
      %423 = vmatmul.bf16.gmra.mxu0 %v299
      %v424 = vpop.f32.mrf.mxu0
      %v425 = vadd.f32 %v224, %v424
      %v426 = vpop.f32.mrf.mxu0
      %v427 = vadd.f32 %v224, %v426
      %428 = vmatmul.bf16.gmra.mxu0 %v300
      %v429 = vpop.f32.mrf.mxu0
      %v430 = vadd.f32 %v224, %v429
      %v431 = vpop.f32.mrf.mxu0
      %v432 = vadd.f32 %v224, %v431
      %433 = vmatmul.bf16.gmra.mxu0 %v301
      %v434 = vpop.f32.mrf.mxu0
      %v435 = vadd.f32 %v224, %v434
      %v436 = vpop.f32.mrf.mxu0
      %v437 = vadd.f32 %v224, %v436
      %438 = vmatmul.bf16.gmra.mxu0 %v302
      %v439 = vpop.f32.mrf.mxu0
      %v440 = vadd.f32 %v224, %v439
      %v441 = vpop.f32.mrf.mxu0
      %v442 = vadd.f32 %v224, %v441
      %443 = vmatmul.bf16.gmra.mxu0 %v303
      %v444 = vpop.f32.mrf.mxu0
      %v445 = vadd.f32 %v224, %v444
      %v446 = vpop.f32.mrf.mxu0
      %v447 = vadd.f32 %v224, %v446
      %448 = vmatmul.bf16.gmra.mxu0 %v304
      %v449 = vpop.f32.mrf.mxu0
      %v450 = vadd.f32 %v224, %v449
      %v451 = vpop.f32.mrf.mxu0
      %v452 = vadd.f32 %v224, %v451
      %453 = vmatmul.bf16.gmra.mxu0 %v305
      %v454 = vpop.f32.mrf.mxu0
      %v455 = vadd.f32 %v224, %v454
      %v456 = vpop.f32.mrf.mxu0
      %v457 = vadd.f32 %v224, %v456
      %458 = vdwg.mxu0
      %v459 = vmax.f32 %v380, 0.0
      %v460 = vmax.f32 %v382, 0.0
      %v461 = vmax.f32 %v385, 0.0
      %v462 = vmax.f32 %v387, 0.0
      %v463 = vmax.f32 %v390, 0.0
      %v464 = vmax.f32 %v392, 0.0
      %v465 = vmax.f32 %v395, 0.0
      %v466 = vmax.f32 %v397, 0.0
      %v467 = vmax.f32 %v400, 0.0
      %v468 = vmax.f32 %v402, 0.0
      %v469 = vmax.f32 %v405, 0.0
      %v470 = vmax.f32 %v407, 0.0
      %v471 = vmax.f32 %v410, 0.0
      %v472 = vmax.f32 %v412, 0.0
      %v473 = vmax.f32 %v415, 0.0
      %v474 = vmax.f32 %v417, 0.0
      %v475 = vmax.f32 %v420, 0.0
      %v476 = vmax.f32 %v422, 0.0
      %v477 = vmax.f32 %v425, 0.0
      %v478 = vmax.f32 %v427, 0.0
      %v479 = vmax.f32 %v430, 0.0
      %v480 = vmax.f32 %v432, 0.0
      %v481 = vmax.f32 %v435, 0.0
      %v482 = vmax.f32 %v437, 0.0
      %v483 = vmax.f32 %v440, 0.0
      %v484 = vmax.f32 %v442, 0.0
      %v485 = vmax.f32 %v445, 0.0
      %v486 = vmax.f32 %v447, 0.0
      %v487 = vmax.f32 %v450, 0.0
      %v488 = vmax.f32 %v452, 0.0
      %v489 = vmax.f32 %v455, 0.0
      %v490 = vmax.f32 %v457, 0.0
      %v491 = vpack.c.bf16 %v459, %v459
      %v492 = vpack.c.bf16 %v460, %v460
      %v493 = vpack.c.bf16 %v461, %v461
      %v494 = vpack.c.bf16 %v462, %v462
      %v495 = vpack.c.bf16 %v463, %v463
      %v496 = vpack.c.bf16 %v464, %v464
      %v497 = vpack.c.bf16 %v465, %v465
      %v498 = vpack.c.bf16 %v466, %v466
      %v499 = vpack.c.bf16 %v467, %v467
      %v500 = vpack.c.bf16 %v468, %v468
      %v501 = vpack.c.bf16 %v469, %v469
      %v502 = vpack.c.bf16 %v470, %v470
      %v503 = vpack.c.bf16 %v471, %v471
      %v504 = vpack.c.bf16 %v472, %v472
      %v505 = vpack.c.bf16 %v473, %v473
      %v506 = vpack.c.bf16 %v474, %v474
      %v507 = vpack.c.bf16 %v475, %v475
      %v508 = vpack.c.bf16 %v476, %v476
      %v509 = vpack.c.bf16 %v477, %v477
      %v510 = vpack.c.bf16 %v478, %v478
      %v511 = vpack.c.bf16 %v479, %v479
      %v512 = vpack.c.bf16 %v480, %v480
      %v513 = vpack.c.bf16 %v481, %v481
      %v514 = vpack.c.bf16 %v482, %v482
      %v515 = vpack.c.bf16 %v483, %v483
      %v516 = vpack.c.bf16 %v484, %v484
      %v517 = vpack.c.bf16 %v485, %v485
      %v518 = vpack.c.bf16 %v486, %v486
      %v519 = vpack.c.bf16 %v487, %v487
      %v520 = vpack.c.bf16 %v488, %v488
      %v521 = vpack.c.bf16 %v489, %v489
      %v522 = vpack.c.bf16 %v490, %v490
      %523 = vst [vmem:[%s172] sm:$0xf] %v491
      %524 = vst [vmem:[%s172 + $0x4] sm:$0xf] %v492
      %525 = vst [vmem:[%s172 + $0x8] sm:$0xf] %v493
      %526 = vst [vmem:[%s172 + $0xc] sm:$0xf] %v494
      %527 = vst [vmem:[%s172 + $0x10] sm:$0xf] %v495
      %528 = vst [vmem:[%s172 + $0x14] sm:$0xf] %v496
      %529 = vst [vmem:[%s172 + $0x18] sm:$0xf] %v497
      %530 = vst [vmem:[%s172 + $0x1c] sm:$0xf] %v498
      %531 = vst [vmem:[%s172 + $0x20] sm:$0xf] %v499
      %532 = vst [vmem:[%s172 + $0x24] sm:$0xf] %v500
      %533 = vst [vmem:[%s172 + $0x28] sm:$0xf] %v501
      %534 = vst [vmem:[%s172 + $0x2c] sm:$0xf] %v502
      %535 = vst [vmem:[%s172 + $0x30] sm:$0xf] %v503
      %536 = vst [vmem:[%s172 + $0x34] sm:$0xf] %v504
      %537 = vst [vmem:[%s172 + $0x38] sm:$0xf] %v505
      %538 = vst [vmem:[%s172 + $0x3c] sm:$0xf] %v506
      %539 = vst [vmem:[%s172 + $0x40] sm:$0xf] %v507
      %540 = vst [vmem:[%s172 + $0x44] sm:$0xf] %v508
      %541 = vst [vmem:[%s172 + $0x48] sm:$0xf] %v509
      %542 = vst [vmem:[%s172 + $0x4c] sm:$0xf] %v510
      %543 = vst [vmem:[%s172 + $0x50] sm:$0xf] %v511
      %544 = vst [vmem:[%s172 + $0x54] sm:$0xf] %v512
      %545 = vst [vmem:[%s172 + $0x58] sm:$0xf] %v513
      %546 = vst [vmem:[%s172 + $0x5c] sm:$0xf] %v514
      %547 = vst [vmem:[%s172 + $0x60] sm:$0xf] %v515
      %548 = vst [vmem:[%s172 + $0x64] sm:$0xf] %v516
      %549 = vst [vmem:[%s172 + $0x68] sm:$0xf] %v517
      %550 = vst [vmem:[%s172 + $0x6c] sm:$0xf] %v518
      %551 = vst [vmem:[%s172 + $0x70] sm:$0xf] %v519
      %552 = vst [vmem:[%s172 + $0x74] sm:$0xf] %v520
      %553 = vst [vmem:[%s172 + $0x78] sm:$0xf] %v521
      %554 = vst [vmem:[%s172 + $0x7c] sm:$0xf] %v522
      %s555 = smul.u32 32, %s14
      %p556 = scmp.lt.s32.totalorder %s555, 63
      %s557 = scalar_select %p556, %s555, 63
      %s558 = smul.addr %s557, 4
      %s559 = scalar_lea.vmem %s3, %s558
      // Predicated region
      $region33: #{forward.14} parent=31 // pred_check
        %p560 = pneg %p100
      $region34: #{forward.14} parent=31 // pred_check_branch
        %562 = sbr.rel (%p560) target = $region36
      $region35: #{forward.14} parent=31 // pred_region
        %s563 = smul.u32 32, %s14
      $region36: #{forward.14} parent=31 // pred_fallthru
        _
    $region32: #{forward.14} parent=5 // pred_fallthru
      _
    %p564 = scmp.le.s32.totalorder 2, %s9
    // Predicated region
    $region37: #{forward.14} parent=5 // pred_check
      %p565 = pneg %p564
    $region38: #{forward.14} parent=5 // pred_check_branch
      %567 = sbr.rel (%p565) target = $region40
    $region39: #{forward.14} parent=5 // pred_region
      %s568 = ssub.s32 %s9, 2
      // Predicated region
      $region41: #{forward.14} parent=39 // pred_check
        %p569 = pneg %p106
      $region42: #{forward.14} parent=39 // pred_check_branch
        %571 = sbr.rel (%p569) target = $region44
      $region43: #{forward.14} parent=39 // pred_region
        %s572 = smul.u32 32, %s15
        %p573 = scmp.lt.s32.totalorder %s572, 63
        %s574 = scalar_select %p573, %s572, 63
        %s575 = smul.addr %s574, 4
        %s576 = scalar_lea.vmem %s3, %s575
      $region44: #{forward.14} parent=39 // pred_fallthru
        _
    $region40: #{forward.14} parent=5 // pred_fallthru
      _
  $region6: #{forward.14} parent=0 // loop_footer
    %s13 = sadd.s32 1, %s9
  $region7: #{forward.14} parent=0 // loop_footer_branch
    %8 = sbr.rel target = $region3
  $region8: #{forward.14} parent=0 // loop_exit
    _

// kernel: forward.15
$region0: #{forward.15}
  #allocation0 [shape = 'u32[]', space=smem, size = 0x4, offset = 0x4, fixed_abs, tag = 'smem constant byte address 0x4 - core index']
  #allocation1 [shape = 'u32[72,128]{1,0:T(1,128)}', space=vmem, size = 0x9000, scoped, tag = 'internal scratch']
  %s0 = inlined_call_operand.vmem [shape: bf16[512,128], index: 0, kind: input, shape index: {}]
  %s1 = inlined_call_operand.vmem [shape: bf16[128,128], index: 1, kind: input, shape index: {}]
  %s2 = inlined_call_operand.vmem [shape: f32[1,128], index: 2, kind: input, shape index: {}]
  %s3 = inlined_call_operand.vmem [shape: f32[512,128], index: 3, kind: output, shape index: {}]
  %s4 = sld [smem:[#allocation0]]
  $region45: #{forward.15} parent=0
    _
  %s6 = ssub.s32 1, %s4
  %s7 = scalar_select 0, %s6, %s4
  loop: start=0, step=1, limit=4
  $region2: #{forward.15} parent=0 // loop_pre_header
    _
  $region3: #{forward.15} parent=0 // loop_header
    %s9 = sphi 0, %s13
    %p10 = scmp.ge.s32.totalorder %s9, 4
    %s19 = sphi 0, %s21
    %s22 = sphi 0, %s19
    %s23 = sphi 0, %s22
    %s39 = sphi 0, %s23
    %s43 = sphi 0, %s43
    %s45 = sphi 0, %s43
    %s46 = sphi 0, %s45
    %s60 = sphi 0, %s46
    %s64 = sphi 0, %s64
    %s66 = sphi 0, %s64
    %s67 = sphi 0, %s66
    %s81 = sphi 0, %s67
    %s87 = sphi 0, %s89
    %s90 = sphi 0, %s87
    %s91 = sphi 0, %s90
    %s107 = sphi 0, %s91
  $region4: #{forward.15} parent=0 // loop_header_branch
    %12 = sbr.rel (%p10) target = $region8
  $region5: #{forward.15} parent=0 // loop_body
    %s14 = ssub.s32 %s9, 1
    %s15 = ssub.s32 %s9, 2
    %s16 = sadd.s32 %s9, 1
    %s17 = ssub.s32 %s9, %s16
    %p18 = scmp.eq.s32.totalorder %s17, 0
    %s20 = sadd.s32 %s19, 1
    %s21 = scalar_select %p18, %s19, %s20
    %p24 = pneg %p18
    %p25 = scmp.eq.s32.totalorder %s9, 1
    %p26 = por %p24, %p25
    %p27 = scmp.ne.s32.totalorder %s19, %s22
    %p28 = scmp.eq.s32.totalorder %s9, 0
    %p29 = por %p27, %p28
    %p30 = scmp.ne.s32.totalorder %s19, %s22
    %p31 = scmp.eq.s32.totalorder %s14, 1
    %p32 = por %p30, %p31
    %p33 = scmp.ne.s32.totalorder %s22, %s23
    %p34 = scmp.eq.s32.totalorder %s14, 0
    %p35 = por %p33, %p34
    %p36 = scmp.ne.s32.totalorder %s22, %s23
    %p37 = scmp.eq.s32.totalorder %s15, 1
    %p38 = por %p36, %p37
    %p40 = scmp.ne.s32.totalorder %s23, %s39
    %p41 = scmp.eq.s32.totalorder %s15, 0
    %p42 = por %p40, %p41
    %s44 = sadd.s32 %s43, 1
    %p47 = scmp.eq.s32.totalorder %s9, 1
    %p48 = scmp.ne.s32.totalorder %s43, %s45
    %p49 = scmp.eq.s32.totalorder %s9, 0
    %p50 = por %p48, %p49
    %p51 = scmp.ne.s32.totalorder %s43, %s45
    %p52 = scmp.eq.s32.totalorder %s14, 1
    %p53 = por %p51, %p52
    %p54 = scmp.ne.s32.totalorder %s45, %s46
    %p55 = scmp.eq.s32.totalorder %s14, 0
    %p56 = por %p54, %p55
    %p57 = scmp.ne.s32.totalorder %s45, %s46
    %p58 = scmp.eq.s32.totalorder %s15, 1
    %p59 = por %p57, %p58
    %p61 = scmp.ne.s32.totalorder %s46, %s60
    %p62 = scmp.eq.s32.totalorder %s15, 0
    %p63 = por %p61, %p62
    %s65 = sadd.s32 %s64, 1
    %p68 = scmp.eq.s32.totalorder %s9, 1
    %p69 = scmp.ne.s32.totalorder %s64, %s66
    %p70 = scmp.eq.s32.totalorder %s9, 0
    %p71 = por %p69, %p70
    %p72 = scmp.ne.s32.totalorder %s64, %s66
    %p73 = scmp.eq.s32.totalorder %s14, 1
    %p74 = por %p72, %p73
    %p75 = scmp.ne.s32.totalorder %s66, %s67
    %p76 = scmp.eq.s32.totalorder %s14, 0
    %p77 = por %p75, %p76
    %p78 = scmp.ne.s32.totalorder %s66, %s67
    %p79 = scmp.eq.s32.totalorder %s15, 1
    %p80 = por %p78, %p79
    %p82 = scmp.ne.s32.totalorder %s67, %s81
    %p83 = scmp.eq.s32.totalorder %s15, 0
    %p84 = por %p82, %p83
    %s85 = ssub.s32 %s9, %s16
    %p86 = scmp.eq.s32.totalorder %s85, 0
    %s88 = sadd.s32 %s87, 1
    %s89 = scalar_select %p86, %s87, %s88
    %p92 = pneg %p86
    %p93 = scmp.eq.s32.totalorder %s9, 1
    %p94 = por %p92, %p93
    %p95 = scmp.ne.s32.totalorder %s87, %s90
    %p96 = scmp.eq.s32.totalorder %s9, 0
    %p97 = por %p95, %p96
    %p98 = scmp.ne.s32.totalorder %s87, %s90
    %p99 = scmp.eq.s32.totalorder %s14, 1
    %p100 = por %p98, %p99
    %p101 = scmp.ne.s32.totalorder %s90, %s91
    %p102 = scmp.eq.s32.totalorder %s14, 0
    %p103 = por %p101, %p102
    %p104 = scmp.ne.s32.totalorder %s90, %s91
    %p105 = scmp.eq.s32.totalorder %s15, 1
    %p106 = por %p104, %p105
    %p108 = scmp.ne.s32.totalorder %s91, %s107
    %p109 = scmp.eq.s32.totalorder %s15, 0
    %p110 = por %p108, %p109
    %p111 = scmp.le.s32.totalorder 1, %s9
    %p112 = scmp.lt.s32.totalorder %s9, 3
    %p113 = pnand %p111, %p112
    %p114 = pneg %p113
    // Predicated region
    $region9: #{forward.15} parent=5 // pred_check
      _
    $region10: #{forward.15} parent=5 // pred_check_branch
      %116 = sbr.rel (%p113) target = $region12
    $region11: #{forward.15} parent=5 // pred_region
      %s117 = ssub.s32 %s9, 1
      // Predicated region
      $region13: #{forward.15} parent=11 // pred_check
        %p118 = pneg %p56
      $region14: #{forward.15} parent=11 // pred_check_branch
        %120 = sbr.rel (%p118) target = $region16
      $region15: #{forward.15} parent=11 // pred_region
        _
      $region16: #{forward.15} parent=11 // pred_fallthru
        _
      // Predicated region
      $region17: #{forward.15} parent=11 // pred_check
        %p121 = pneg %p77
      $region18: #{forward.15} parent=11 // pred_check_branch
        %123 = sbr.rel (%p121) target = $region20
      $region19: #{forward.15} parent=11 // pred_region
        _
      $region20: #{forward.15} parent=11 // pred_fallthru
        _
    $region12: #{forward.15} parent=5 // pred_fallthru
      _
    %p124 = scmp.lt.s32.totalorder %s9, 2
    // Predicated region
    $region21: #{forward.15} parent=5 // pred_check
      %p125 = pneg %p124
    $region22: #{forward.15} parent=5 // pred_check_branch
      %127 = sbr.rel (%p125) target = $region24
    $region23: #{forward.15} parent=5 // pred_region
      // Predicated region
      $region25: #{forward.15} parent=23 // pred_check
        %p128 = pneg %p29
      $region26: #{forward.15} parent=23 // pred_check_branch
        %130 = sbr.rel (%p128) target = $region28
      $region27: #{forward.15} parent=23 // pred_region
        %s131 = smul.u32 32, %s9
        %p132 = scmp.lt.s32.totalorder %s131, 63
        %s133 = scalar_select %p132, %s131, 63
        %s134 = smul.addr %s133, 4
        %s135 = scalar_lea.vmem %s0, %s134
        %s136 = smul.u32 32, %s9
      $region28: #{forward.15} parent=23 // pred_fallthru
        _
    $region24: #{forward.15} parent=5 // pred_fallthru
      _
    %p137 = scmp.le.s32.totalorder 1, %s9
    %p138 = scmp.lt.s32.totalorder %s9, 3
    %p139 = pnand %p137, %p138
    %p140 = pneg %p139
    // Predicated region
    $region29: #{forward.15} parent=5 // pred_check
      _
    $region30: #{forward.15} parent=5 // pred_check_branch
      %142 = sbr.rel (%p139) target = $region32
    $region31: #{forward.15} parent=5 // pred_region
      %s143 = ssub.s32 %s9, 1
      %s144 = smul.u32 32, %s14
      %p145 = scmp.lt.s32.totalorder %s144, 63
      %s146 = scalar_select %p145, %s144, 63
      %s147 = smul.addr %s146, 4
      %s148 = scalar_lea.vmem %s0, %s147
      %p149 = pneg %p35
      %p150 = pneg %p32
      %p151 = pneg %p56
      %p152 = pneg %p53
      %p153 = pneg %p77
      %p154 = pneg %p74
      %p155 = pneg %p103
      %p156 = pneg %p100
      %s157 = smul.u32 32, %s14
      %p158 = scmp.lt.s32.totalorder %s157, 63
      %s159 = scalar_select %p158, %s157, 63
      %s160 = smul.addr %s159, 8
      %s161 = scalar_lea.vmem %s3, %s160
      %s162 = smul.u32 32, %s14
      %p163 = scmp.lt.s32.totalorder %s162, 63
      %s164 = scalar_select %p163, %s162, 63
      %s165 = smul.addr %s164, 4
      %s166 = scalar_lea.vmem %s0, %s165
      %s167 = smul.u32 32, %s14
      %s168 = smul.u32 32, %s14
      %p169 = scmp.lt.s32.totalorder %s168, 63
      %s170 = scalar_select %p169, %s168, 63
      %s171 = smul.addr %s170, 8
      %s172 = scalar_lea.vmem %s3, %s171
      %s173 = smul.u32 32, %s14
      %v174 = vld [vmem:[%s166] sm:$0xf]
      %v175 = vld [vmem:[%s166 + $0x4] sm:$0xf]
      %v176 = vld [vmem:[%s166 + $0x8] sm:$0xf]
      %v177 = vld [vmem:[%s166 + $0xc] sm:$0xf]
      %v178 = vld [vmem:[%s166 + $0x10] sm:$0xf]
      %v179 = vld [vmem:[%s166 + $0x14] sm:$0xf]
      %v180 = vld [vmem:[%s166 + $0x18] sm:$0xf]
      %v181 = vld [vmem:[%s166 + $0x1c] sm:$0xf]
      %v182 = vld [vmem:[%s166 + $0x20] sm:$0xf]
      %v183 = vld [vmem:[%s166 + $0x24] sm:$0xf]
      %v184 = vld [vmem:[%s166 + $0x28] sm:$0xf]
      %v185 = vld [vmem:[%s166 + $0x2c] sm:$0xf]
      %v186 = vld [vmem:[%s166 + $0x30] sm:$0xf]
      %v187 = vld [vmem:[%s166 + $0x34] sm:$0xf]
      %v188 = vld [vmem:[%s166 + $0x38] sm:$0xf]
      %v189 = vld [vmem:[%s166 + $0x3c] sm:$0xf]
      %v190 = vld [vmem:[%s166 + $0x40] sm:$0xf]
      %v191 = vld [vmem:[%s166 + $0x44] sm:$0xf]
      %v192 = vld [vmem:[%s166 + $0x48] sm:$0xf]
      %v193 = vld [vmem:[%s166 + $0x4c] sm:$0xf]
      %v194 = vld [vmem:[%s166 + $0x50] sm:$0xf]
      %v195 = vld [vmem:[%s166 + $0x54] sm:$0xf]
      %v196 = vld [vmem:[%s166 + $0x58] sm:$0xf]
      %v197 = vld [vmem:[%s166 + $0x5c] sm:$0xf]
      %v198 = vld [vmem:[%s166 + $0x60] sm:$0xf]
      %v199 = vld [vmem:[%s166 + $0x64] sm:$0xf]
      %v200 = vld [vmem:[%s166 + $0x68] sm:$0xf]
      %v201 = vld [vmem:[%s166 + $0x6c] sm:$0xf]
      %v202 = vld [vmem:[%s166 + $0x70] sm:$0xf]
      %v203 = vld [vmem:[%s166 + $0x74] sm:$0xf]
      %v204 = vld [vmem:[%s166 + $0x78] sm:$0xf]
      %v205 = vld [vmem:[%s166 + $0x7c] sm:$0xf]
      %v206 = vld [vmem:[%s1] sm:$0xf]
      %v207 = vld [vmem:[%s1 + $0x4] sm:$0xf]
      %v208 = vld [vmem:[%s1 + $0x8] sm:$0xf]
      %v209 = vld [vmem:[%s1 + $0xc] sm:$0xf]
      %v210 = vld [vmem:[%s1 + $0x10] sm:$0xf]
      %v211 = vld [vmem:[%s1 + $0x14] sm:$0xf]
      %v212 = vld [vmem:[%s1 + $0x18] sm:$0xf]
      %v213 = vld [vmem:[%s1 + $0x1c] sm:$0xf]
      %v214 = vld [vmem:[%s1 + $0x20] sm:$0xf]
      %v215 = vld [vmem:[%s1 + $0x24] sm:$0xf]
      %v216 = vld [vmem:[%s1 + $0x28] sm:$0xf]
      %v217 = vld [vmem:[%s1 + $0x2c] sm:$0xf]
      %v218 = vld [vmem:[%s1 + $0x30] sm:$0xf]
      %v219 = vld [vmem:[%s1 + $0x34] sm:$0xf]
      %v220 = vld [vmem:[%s1 + $0x38] sm:$0xf]
      %v221 = vld [vmem:[%s1 + $0x3c] sm:$0xf]
      %v222 = vld [vmem:[%s2] sm:$0x1]
      %v224 = vperm.slane %v222, 0
      %v258 = vunpack.c.l.b16 %v174
      %v259 = vunpack.c.l.b16 %v175
      %v260 = vunpack.c.l.b16 %v176
      %v261 = vunpack.c.l.b16 %v177
      %v262 = vunpack.c.l.b16 %v178
      %v263 = vunpack.c.l.b16 %v179
      %v264 = vunpack.c.l.b16 %v180
      %v265 = vunpack.c.l.b16 %v181
      %v266 = vunpack.c.l.b16 %v182
      %v267 = vunpack.c.l.b16 %v183
      %v268 = vunpack.c.l.b16 %v184
      %v269 = vunpack.c.l.b16 %v185
      %v270 = vunpack.c.l.b16 %v186
      %v271 = vunpack.c.l.b16 %v187
      %v272 = vunpack.c.l.b16 %v188
      %v273 = vunpack.c.l.b16 %v189
      %v274 = vunpack.c.l.b16 %v190
      %v275 = vunpack.c.l.b16 %v191
      %v276 = vunpack.c.l.b16 %v192
      %v277 = vunpack.c.l.b16 %v193
      %v278 = vunpack.c.l.b16 %v194
      %v279 = vunpack.c.l.b16 %v195
      %v280 = vunpack.c.l.b16 %v196
      %v281 = vunpack.c.l.b16 %v197
      %v282 = vunpack.c.l.b16 %v198
      %v283 = vunpack.c.l.b16 %v199
      %v284 = vunpack.c.l.b16 %v200
      %v285 = vunpack.c.l.b16 %v201
      %v286 = vunpack.c.l.b16 %v202
      %v287 = vunpack.c.l.b16 %v203
      %v288 = vunpack.c.l.b16 %v204
      %v289 = vunpack.c.l.b16 %v205
      %v290 = vpack.c.b16 %v259, %v258
      %v291 = vpack.c.b16 %v261, %v260
      %v292 = vpack.c.b16 %v263, %v262
      %v293 = vpack.c.b16 %v265, %v264
      %v294 = vpack.c.b16 %v267, %v266
      %v295 = vpack.c.b16 %v269, %v268
      %v296 = vpack.c.b16 %v271, %v270
      %v297 = vpack.c.b16 %v273, %v272
      %v298 = vpack.c.b16 %v275, %v274
      %v299 = vpack.c.b16 %v277, %v276
      %v300 = vpack.c.b16 %v279, %v278
      %v301 = vpack.c.b16 %v281, %v280
      %v302 = vpack.c.b16 %v283, %v282
      %v303 = vpack.c.b16 %v285, %v284
      %v304 = vpack.c.b16 %v287, %v286
      %v305 = vpack.c.b16 %v289, %v288
      %v338 = vunpack.c.l.b16 %v206
      %v339 = vunpack.c.l.b16 %v207
      %v340 = vunpack.c.l.b16 %v208
      %v341 = vunpack.c.l.b16 %v209
      %v342 = vunpack.c.l.b16 %v210
      %v343 = vunpack.c.l.b16 %v211
      %v344 = vunpack.c.l.b16 %v212
      %v345 = vunpack.c.l.b16 %v213
      %v346 = vunpack.c.l.b16 %v214
      %v347 = vunpack.c.l.b16 %v215
      %v348 = vunpack.c.l.b16 %v216
      %v349 = vunpack.c.l.b16 %v217
      %v350 = vunpack.c.l.b16 %v218
      %v351 = vunpack.c.l.b16 %v219
      %v352 = vunpack.c.l.b16 %v220
      %v353 = vunpack.c.l.b16 %v221
      %v354 = vpack.c.b16 %v339, %v338
      %v355 = vpack.c.b16 %v341, %v340
      %v356 = vpack.c.b16 %v343, %v342
      %v357 = vpack.c.b16 %v345, %v344
      %v358 = vpack.c.b16 %v347, %v346
      %v359 = vpack.c.b16 %v349, %v348
      %v360 = vpack.c.b16 %v351, %v350
      %v361 = vpack.c.b16 %v353, %v352
      %370 = vmatpush.bf16.msra.mxu0 %v361
      %371 = vmatpush.bf16.msra.mxu0 %v360
      %372 = vmatpush.bf16.msra.mxu0 %v359
      %373 = vmatpush.bf16.msra.mxu0 %v358
      %374 = vmatpush.bf16.msra.mxu0 %v357
      %375 = vmatpush.bf16.msra.mxu0 %v356
      %376 = vmatpush.bf16.msra.mxu0 %v355
      %377 = vmatpush.bf16.msra.mxu0 %v354
      %378 = vmatmul.bf16.gmra.mxu0 %v290
      %v379 = vpop.f32.mrf.mxu0
      %v380 = vadd.f32 %v224, %v379
      %v381 = vpop.f32.mrf.mxu0
      %v382 = vadd.f32 %v224, %v381
      %383 = vmatmul.bf16.gmra.mxu0 %v291
      %v384 = vpop.f32.mrf.mxu0
      %v385 = vadd.f32 %v224, %v384
      %v386 = vpop.f32.mrf.mxu0
      %v387 = vadd.f32 %v224, %v386
      %388 = vmatmul.bf16.gmra.mxu0 %v292
      %v389 = vpop.f32.mrf.mxu0
      %v390 = vadd.f32 %v224, %v389
      %v391 = vpop.f32.mrf.mxu0
      %v392 = vadd.f32 %v224, %v391
      %393 = vmatmul.bf16.gmra.mxu0 %v293
      %v394 = vpop.f32.mrf.mxu0
      %v395 = vadd.f32 %v224, %v394
      %v396 = vpop.f32.mrf.mxu0
      %v397 = vadd.f32 %v224, %v396
      %398 = vmatmul.bf16.gmra.mxu0 %v294
      %v399 = vpop.f32.mrf.mxu0
      %v400 = vadd.f32 %v224, %v399
      %v401 = vpop.f32.mrf.mxu0
      %v402 = vadd.f32 %v224, %v401
      %403 = vmatmul.bf16.gmra.mxu0 %v295
      %v404 = vpop.f32.mrf.mxu0
      %v405 = vadd.f32 %v224, %v404
      %v406 = vpop.f32.mrf.mxu0
      %v407 = vadd.f32 %v224, %v406
      %408 = vmatmul.bf16.gmra.mxu0 %v296
      %v409 = vpop.f32.mrf.mxu0
      %v410 = vadd.f32 %v224, %v409
      %v411 = vpop.f32.mrf.mxu0
      %v412 = vadd.f32 %v224, %v411
      %413 = vmatmul.bf16.gmra.mxu0 %v297
      %v414 = vpop.f32.mrf.mxu0
      %v415 = vadd.f32 %v224, %v414
      %v416 = vpop.f32.mrf.mxu0
      %v417 = vadd.f32 %v224, %v416
      %418 = vmatmul.bf16.gmra.mxu0 %v298
      %v419 = vpop.f32.mrf.mxu0
      %v420 = vadd.f32 %v224, %v419
      %v421 = vpop.f32.mrf.mxu0
      %v422 = vadd.f32 %v224, %v421
      %423 = vmatmul.bf16.gmra.mxu0 %v299
      %v424 = vpop.f32.mrf.mxu0
      %v425 = vadd.f32 %v224, %v424
      %v426 = vpop.f32.mrf.mxu0
      %v427 = vadd.f32 %v224, %v426
      %428 = vmatmul.bf16.gmra.mxu0 %v300
      %v429 = vpop.f32.mrf.mxu0
      %v430 = vadd.f32 %v224, %v429
      %v431 = vpop.f32.mrf.mxu0
      %v432 = vadd.f32 %v224, %v431
      %433 = vmatmul.bf16.gmra.mxu0 %v301
      %v434 = vpop.f32.mrf.mxu0
      %v435 = vadd.f32 %v224, %v434
      %v436 = vpop.f32.mrf.mxu0
      %v437 = vadd.f32 %v224, %v436
      %438 = vmatmul.bf16.gmra.mxu0 %v302
      %v439 = vpop.f32.mrf.mxu0
      %v440 = vadd.f32 %v224, %v439
      %v441 = vpop.f32.mrf.mxu0
      %v442 = vadd.f32 %v224, %v441
      %443 = vmatmul.bf16.gmra.mxu0 %v303
      %v444 = vpop.f32.mrf.mxu0
      %v445 = vadd.f32 %v224, %v444
      %v446 = vpop.f32.mrf.mxu0
      %v447 = vadd.f32 %v224, %v446
      %448 = vmatmul.bf16.gmra.mxu0 %v304
      %v449 = vpop.f32.mrf.mxu0
      %v450 = vadd.f32 %v224, %v449
      %v451 = vpop.f32.mrf.mxu0
      %v452 = vadd.f32 %v224, %v451
      %453 = vmatmul.bf16.gmra.mxu0 %v305
      %v454 = vpop.f32.mrf.mxu0
      %v455 = vadd.f32 %v224, %v454
      %v456 = vpop.f32.mrf.mxu0
      %v457 = vadd.f32 %v224, %v456
      %458 = vdwg.mxu0
      %459 = vst [vmem:[%s172] sm:$0xff] %v380
      %460 = vst [vmem:[%s172 + $0x8] sm:$0xff] %v382
      %461 = vst [vmem:[%s172 + $0x10] sm:$0xff] %v385
      %462 = vst [vmem:[%s172 + $0x18] sm:$0xff] %v387
      %463 = vst [vmem:[%s172 + $0x20] sm:$0xff] %v390
      %464 = vst [vmem:[%s172 + $0x28] sm:$0xff] %v392
      %465 = vst [vmem:[%s172 + $0x30] sm:$0xff] %v395
      %466 = vst [vmem:[%s172 + $0x38] sm:$0xff] %v397
      %467 = vst [vmem:[%s172 + $0x40] sm:$0xff] %v400
      %468 = vst [vmem:[%s172 + $0x48] sm:$0xff] %v402
      %469 = vst [vmem:[%s172 + $0x50] sm:$0xff] %v405
      %470 = vst [vmem:[%s172 + $0x58] sm:$0xff] %v407
      %471 = vst [vmem:[%s172 + $0x60] sm:$0xff] %v410
      %472 = vst [vmem:[%s172 + $0x68] sm:$0xff] %v412
      %473 = vst [vmem:[%s172 + $0x70] sm:$0xff] %v415
      %474 = vst [vmem:[%s172 + $0x78] sm:$0xff] %v417
      %475 = vst [vmem:[%s172 + $0x80] sm:$0xff] %v420
      %476 = vst [vmem:[%s172 + $0x88] sm:$0xff] %v422
      %477 = vst [vmem:[%s172 + $0x90] sm:$0xff] %v425
      %478 = vst [vmem:[%s172 + $0x98] sm:$0xff] %v427
      %479 = vst [vmem:[%s172 + $0xa0] sm:$0xff] %v430
      %480 = vst [vmem:[%s172 + $0xa8] sm:$0xff] %v432
      %481 = vst [vmem:[%s172 + $0xb0] sm:$0xff] %v435
      %482 = vst [vmem:[%s172 + $0xb8] sm:$0xff] %v437
      %483 = vst [vmem:[%s172 + $0xc0] sm:$0xff] %v440
      %484 = vst [vmem:[%s172 + $0xc8] sm:$0xff] %v442
      %485 = vst [vmem:[%s172 + $0xd0] sm:$0xff] %v445
      %486 = vst [vmem:[%s172 + $0xd8] sm:$0xff] %v447
      %487 = vst [vmem:[%s172 + $0xe0] sm:$0xff] %v450
      %488 = vst [vmem:[%s172 + $0xe8] sm:$0xff] %v452
      %489 = vst [vmem:[%s172 + $0xf0] sm:$0xff] %v455
      %490 = vst [vmem:[%s172 + $0xf8] sm:$0xff] %v457
      %s491 = smul.u32 32, %s14
      %p492 = scmp.lt.s32.totalorder %s491, 63
      %s493 = scalar_select %p492, %s491, 63
      %s494 = smul.addr %s493, 8
      %s495 = scalar_lea.vmem %s3, %s494
      // Predicated region
      $region33: #{forward.15} parent=31 // pred_check
        %p496 = pneg %p100
      $region34: #{forward.15} parent=31 // pred_check_branch
        %498 = sbr.rel (%p496) target = $region36
      $region35: #{forward.15} parent=31 // pred_region
        %s499 = smul.u32 32, %s14
      $region36: #{forward.15} parent=31 // pred_fallthru
        _
    $region32: #{forward.15} parent=5 // pred_fallthru
      _
    %p500 = scmp.le.s32.totalorder 2, %s9
    // Predicated region
    $region37: #{forward.15} parent=5 // pred_check
      %p501 = pneg %p500
    $region38: #{forward.15} parent=5 // pred_check_branch
      %503 = sbr.rel (%p501) target = $region40
    $region39: #{forward.15} parent=5 // pred_region
      %s504 = ssub.s32 %s9, 2
      // Predicated region
      $region41: #{forward.15} parent=39 // pred_check
        %p505 = pneg %p106
      $region42: #{forward.15} parent=39 // pred_check_branch
        %507 = sbr.rel (%p505) target = $region44
      $region43: #{forward.15} parent=39 // pred_region
        %s508 = smul.u32 32, %s15
        %p509 = scmp.lt.s32.totalorder %s508, 63
        %s510 = scalar_select %p509, %s508, 63
        %s511 = smul.addr %s510, 8
        %s512 = scalar_lea.vmem %s3, %s511
      $region44: #{forward.15} parent=39 // pred_fallthru
        _
    $region40: #{forward.15} parent=5 // pred_fallthru
      _
  $region6: #{forward.15} parent=0 // loop_footer
    %s13 = sadd.s32 1, %s9
  $region7: #{forward.15} parent=0 // loop_footer_branch
    %8 = sbr.rel target = $region3
  $region8: #{forward.15} parent=0 // loop_exit
    _

</llo_original>
